<compile_context>
chip_gen: v6e
topology: v6e:2x2x1
jax: 0.10.0
libtpu: 0.0.40
codegen_flags: <defaults>
</compile_context>

<pallas_src>
import jax
import jax.numpy as jnp
from jax import lax
from jax.experimental import pallas as pl
from jax.experimental.pallas import tpu as pltpu

LANES = 128
VOCAB_TILE = 512     # v6e/v7x could raise to 1024-2048; v5e keep <= 512-1024.


def _round_up(x, m):
    return ((x + m - 1) // m) * m


def _vmem_limit(nbytes):
    # Explicit scoped-VMEM limit sized to actual residency (+4 MiB margin),
    # floor 32 MiB, cap 128 MiB (on v7x physical is 64 MiB/TC; small shapes fit).
    return int(min(max(nbytes + (4 << 20), 32 << 20), 128 << 20))


# ----------------------------- Pallas kernels ------------------------------


def lstm_kernel(x_ref, wih_ref, b_ref, whh_ref, h0_ref, c0_ref,
                hseq_ref, hlast_ref, clast_ref):
    """Single-invocation LSTM over one batch tile.

    x_ref   : (T, bt, E)   bf16  embedded inputs, time-major
    wih_ref : (E, 4*HP)    bf16  input projection (gate-slot padded)
    b_ref   : (1, 4*HP)    f32   b_ih + b_hh (gate-slot padded)
    whh_ref : (HP, 4*HP)   bf16  recurrent weight (transposed, gate-slot padded)
    h0/c0   : (bt, HP)     f32
    hseq_ref: (bt, T, HP)  bf16  batch-major hidden states (attention layout)
    hlast/clast : (bt, HP) f32   exact f32 final-state handoff to the decoder

    The x @ W_ih projection is fused into the recurrence (no xg HBM round trip).
    """
    T = x_ref.shape[0]
    HP = whh_ref.shape[0]

    def step(x_t, h, c):
        # TODO(synk): hold W_hh in MXU weight regs across the T steps via
        # pltpu.matmul_push_rhs / matmul_acc_lhs instead of T independent dots.
        gates = (
            jnp.dot(x_t, wih_ref[...], preferred_element_type=jnp.float32)
            + jnp.dot(h.astype(jnp.bfloat16), whh_ref[...],
                      preferred_element_type=jnp.float32)
            + b_ref[...])                                   # (bt, 4*HP) f32
        # Gate slots are 128-lane aligned (HP multiple of 128): plain slices.
        # TODO(synk): on v6e/v7x the sigmoid/tanh could run in bf16 (bf16 EUP);
        # kept f32 here for v5e compatibility and exact parity with the ref.
        i = jax.nn.sigmoid(gates[:, 0 * HP:1 * HP])
        f = jax.nn.sigmoid(gates[:, 1 * HP:2 * HP])
        g = jnp.tanh(gates[:, 2 * HP:3 * HP])
        o = jax.nn.sigmoid(gates[:, 3 * HP:4 * HP])
        c_new = f * c + i * g
        h_new = o * jnp.tanh(c_new)
        return h_new, c_new

    h = h0_ref[...]
    c = c0_ref[...]
    if T <= 32:
        # Short fixed sequence: fully unrolled, all indices static.
        for t in range(T):
            h, c = step(x_ref[t], h, c)
            hseq_ref[:, t, :] = h.astype(hseq_ref.dtype)
    else:
        # TODO(synk): for very long T, chunk the loop, write hseq in >=16-row
        # slabs (dense bf16 stores) and double-buffer x from HBM with
        # make_async_copy instead of keeping the whole sequence resident.
        def body(t, carry):
            h, c = carry
            h, c = step(x_ref[t], h, c)
            hseq_ref[:, pl.ds(t, 1), :] = h[:, None, :].astype(hseq_ref.dtype)
            return (h, c)
        h, c = lax.fori_loop(0, T, body, (h, c))

    hlast_ref[...] = h
    clast_ref[...] = c


def attn_out_kernel(dec_ref, enc_ref, wc_ctx_ref, wc_dec_ref, wout_ref, bout_ref,
                    out_ref, av_sc):
    """Luong dot attention + tanh(W_c [ctx; dec]) + vocab projection.

    Grid is (VP // tv,): only the vocab dimension is tiled, so W_out is streamed
    from HBM exactly once.  Attention + combine for ALL batch elements run once
    at vocab tile 0 and are cached in the (B*Td, HP) bf16 scratch `av_sc`; each
    vocab tile then does a single (B*Td, HP) x (HP, tv) matmul.
    NOTE: correctness of the scratch reuse requires the (single) vocab grid axis
    to stay "arbitrary" (sequential), never parallel/core-sharded.
    """
    B, Td, _ = dec_ref.shape

    @pl.when(pl.program_id(0) == 0)
    def _():
        # TODO(synk): for large B, batch the attention with a single
        # einsum('bqh,bkh->bqk') instead of this unrolled per-b loop.
        for b in range(B):
            dec = dec_ref[b]                              # (Td, HP) bf16
            enc = enc_ref[b]                              # (Te, HP) bf16
            # scores = dec @ enc^T without materializing a transpose of enc.
            scores = lax.dot_general(
                dec, enc, (((1,), (1,)), ((), ())),
                preferred_element_type=jnp.float32)       # (Td, Te) f32
            m = jnp.max(scores, axis=-1, keepdims=True)
            e = jnp.exp(scores - m)
            attn = e * pl.reciprocal(jnp.sum(e, axis=-1, keepdims=True),
                                     approx=True)
            ctx = jnp.dot(attn.astype(jnp.bfloat16), enc,
                          preferred_element_type=jnp.float32)   # (Td, HP) f32
            # tanh(W_c [ctx; dec]) as two matmuls (no in-kernel concat).
            av = jnp.tanh(
                jnp.dot(ctx.astype(jnp.bfloat16), wc_ctx_ref[...],
                        preferred_element_type=jnp.float32)
                + jnp.dot(dec, wc_dec_ref[...],
                          preferred_element_type=jnp.float32))
            av_sc[b * Td:(b + 1) * Td, :] = av.astype(av_sc.dtype)

    out_ref[...] = (
        jnp.dot(av_sc[...], wout_ref[...], preferred_element_type=jnp.float32)
        + bout_ref[...])


# ----------------------------- Pallas wrappers ------------------------------


def lstm_layer(x, w_ih_t, b, w_hh_t, h0, c0, *, batch_tile=16):
    # x: (T, B, E) bf16 time-major; w_ih_t: (E, 4*HP) bf16; b: (1, 4*HP) f32;
    # w_hh_t: (HP, 4*HP) bf16; h0/c0: (B, HP) f32.
    T, B, E = x.shape
    HP = w_hh_t.shape[0]
    G = 4 * HP
    # Batch-tile grid axis ("parallel"): megacore on v7x + per-tile pipelining.
    # Only tile when B divides cleanly into 16-row (bf16-packed) tiles.
    bt = batch_tile if (B > batch_tile and B % batch_tile == 0) else B
    n_b = B // bt

    weight_bytes = E * G * 2 + G * 4 + HP * G * 2
    per_tile_bytes = (T * bt * E * 2        # x block (bf16)
                      + bt * T * HP * 2     # hseq block (bf16)
                      + 4 * bt * HP * 4)    # h0/c0/hlast/clast blocks (f32)

    return pl.pallas_call(
        lstm_kernel,
        out_shape=(
            jax.ShapeDtypeStruct((B, T, HP), jnp.bfloat16),   # h_seq (batch-major)
            jax.ShapeDtypeStruct((B, HP), jnp.float32),       # h_T
            jax.ShapeDtypeStruct((B, HP), jnp.float32),       # c_T
        ),
        grid_spec=pltpu.PrefetchScalarGridSpec(
            num_scalar_prefetch=0,
            grid=(n_b,),
            in_specs=[
                pl.BlockSpec((T, bt, E), lambda i: (0, i, 0)),
                pl.BlockSpec((E, G), lambda i: (0, 0)),
                pl.BlockSpec((1, G), lambda i: (0, 0)),
                pl.BlockSpec((HP, G), lambda i: (0, 0)),
                pl.BlockSpec((bt, HP), lambda i: (i, 0)),
                pl.BlockSpec((bt, HP), lambda i: (i, 0)),
            ],
            out_specs=(
                pl.BlockSpec((bt, T, HP), lambda i: (i, 0, 0)),
                pl.BlockSpec((bt, HP), lambda i: (i, 0)),
                pl.BlockSpec((bt, HP), lambda i: (i, 0)),
            ),
        ),
        compiler_params=pltpu.CompilerParams(
            dimension_semantics=("parallel",),
            vmem_limit_bytes=_vmem_limit(weight_bytes * 2 + per_tile_bytes * 2)),
    )(x, w_ih_t, b, w_hh_t, h0, c0)


def attention_project(dec_h, enc_h, wc_ctx_t, wc_dec_t, w_out_t, b_out,
                      *, vocab_tile=VOCAB_TILE):
    # dec_h: (B, Td, HP) bf16, enc_h: (B, Te, HP) bf16, w_out_t: (HP, VP) bf16.
    B, Td, HP = dec_h.shape
    _, Te, _ = enc_h.shape
    VP = w_out_t.shape[1]
    tv = min(vocab_tile, VP)
    assert VP % tv == 0, "pad vocab (vp) up to a multiple of the vocab tile"
    n_v = VP // tv

    resident_bytes = (B * Td * HP * 2 + B * Te * HP * 2    # dec, enc (bf16)
                      + 2 * HP * HP * 2                    # W_c halves (bf16)
                      + B * Td * HP * 2)                   # av scratch (bf16)
    per_tile_bytes = HP * tv * 2 + tv * 4 + B * Td * tv * 4   # w_out, b_out, out

    flat_logits = pl.pallas_call(
        attn_out_kernel,
        out_shape=jax.ShapeDtypeStruct((B * Td, VP), jnp.float32),
        grid_spec=pltpu.PrefetchScalarGridSpec(
            num_scalar_prefetch=0,
            grid=(n_v,),
            in_specs=[
                pl.BlockSpec((B, Td, HP), lambda v: (0, 0, 0)),   # resident
                pl.BlockSpec((B, Te, HP), lambda v: (0, 0, 0)),   # resident
                pl.BlockSpec((HP, HP), lambda v: (0, 0)),
                pl.BlockSpec((HP, HP), lambda v: (0, 0)),
                pl.BlockSpec((HP, tv), lambda v: (0, v)),         # streamed once
                pl.BlockSpec((1, tv), lambda v: (0, v)),
            ],
            out_specs=pl.BlockSpec((B * Td, tv), lambda v: (0, v)),
            scratch_shapes=[pltpu.VMEM((B * Td, HP), jnp.bfloat16)],
        ),
        compiler_params=pltpu.CompilerParams(
            dimension_semantics=("arbitrary",),    # scratch reuse needs sequential
            vmem_limit_bytes=_vmem_limit(resident_bytes * 2 + per_tile_bytes * 2)),
    )(dec_h, enc_h, wc_ctx_t, wc_dec_t, w_out_t, b_out)
    return flat_logits.reshape(B, Td, VP)


# -------------------------- Parameters & operand prep ------------------------


def init_params(key, V, E, H):
    """PyTorch-layout parameters (nn.LSTM / nn.Linear shapes, gate order i,f,g,o)."""
    ks = jax.random.split(key, 12)
    s = 1.0 / jnp.sqrt(H)
    u = lambda k, shape: jax.random.uniform(k, shape, jnp.float32, -s, s)
    return {
        "embed": jax.random.normal(ks[0], (V, E), jnp.float32) * 0.1,  # tied enc/dec
        "enc_w_ih": u(ks[1], (4 * H, E)),
        "enc_w_hh": u(ks[2], (4 * H, H)),
        "enc_b_ih": u(ks[3], (4 * H,)),
        "enc_b_hh": u(ks[4], (4 * H,)),
        "dec_w_ih": u(ks[5], (4 * H, E)),
        "dec_w_hh": u(ks[6], (4 * H, H)),
        "dec_b_ih": u(ks[7], (4 * H,)),
        "dec_b_hh": u(ks[8], (4 * H,)),
        "w_c": u(ks[9], (H, 2 * H)),      # attention combine (no bias)
        "w_out": u(ks[10], (V, H)),
        "b_out": u(ks[11], (V,)),
    }


def prepare_operands(params, hp, vp):
    """Pad / transpose / cast PyTorch-layout weights into kernel layout.

    Hidden size padded to hp (multiple of 128) so every gate slice and every
    hidden-state / logits store is lane-aligned; vocab padded to vp (multiple of
    the vocab tile).  Padded lanes carry exact zeros through the whole network
    (zero weight rows/cols + zero initial state), so results are unchanged.
    MXU operands are bf16; biases, gates, cell state and softmax stay f32.
    """
    H = params["enc_w_hh"].shape[1]
    V, _ = params["embed"].shape

    def gate_pad(w_t):                       # (K, 4H) -> (K, 4*hp), gate-slot layout
        K = w_t.shape[0]
        out = jnp.zeros((K, 4 * hp), w_t.dtype)
        for g in range(4):
            out = out.at[:, g * hp:g * hp + H].set(w_t[:, g * H:(g + 1) * H])
        return out

    def pad2(x, rows, cols):
        return jnp.pad(x, ((0, rows - x.shape[0]), (0, cols - x.shape[1])))

    ops = {"V": V, "embed": params["embed"].astype(jnp.bfloat16)}
    for side in ("enc", "dec"):
        w_ih = params[f"{side}_w_ih"]        # (4H, E)
        w_hh = params[f"{side}_w_hh"]        # (4H, H)
        b = (params[f"{side}_b_ih"] + params[f"{side}_b_hh"])[None, :]   # (1, 4H)
        ops[f"{side}_w_ih_t"] = gate_pad(w_ih.T).astype(jnp.bfloat16)             # (E, 4*hp)
        ops[f"{side}_w_hh_t"] = pad2(gate_pad(w_hh.T), hp, 4 * hp).astype(jnp.bfloat16)
        ops[f"{side}_b"] = gate_pad(b).astype(jnp.float32)                         # (1, 4*hp)
    w_c_t = params["w_c"].T                  # (2H, H): rows [:H] -> ctx, [H:] -> dec
    ops["wc_ctx_t"] = pad2(w_c_t[:H], hp, hp).astype(jnp.bfloat16)
    ops["wc_dec_t"] = pad2(w_c_t[H:], hp, hp).astype(jnp.bfloat16)
    ops["w_out_t"] = pad2(params["w_out"].T, hp, vp).astype(jnp.bfloat16)
    ops["b_out"] = pad2(params["b_out"][None, :], 1, vp).astype(jnp.float32)
    return ops


# ----------------------------- Model (glue) ---------------------------------


def encoder_decoder_forward(ops, encoder_inputs, decoder_inputs):
    B, _ = encoder_inputs.shape
    HP = ops["enc_w_hh_t"].shape[0]
    zeros = jnp.zeros((B, HP), jnp.float32)

    # TODO(synk): the embedding row gather stays in XLA (jnp.take); it could be
    # fused into lstm_layer with PrefetchScalarGridSpec(num_scalar_prefetch=1)
    # + pl.Element row index_map on the embedding table.
    xe = jnp.take(ops["embed"], encoder_inputs.T, axis=0)      # (Te, B, E) bf16
    enc_hseq, enc_hT, enc_cT = lstm_layer(
        xe, ops["enc_w_ih_t"], ops["enc_b"], ops["enc_w_hh_t"], zeros, zeros)

    xd = jnp.take(ops["embed"], decoder_inputs.T, axis=0)      # (Td, B, E) bf16
    dec_hseq, _, _ = lstm_layer(
        xd, ops["dec_w_ih_t"], ops["dec_b"], ops["dec_w_hh_t"], enc_hT, enc_cT)

    logits = attention_project(dec_hseq, enc_hseq, ops["wc_ctx_t"],
                               ops["wc_dec_t"], ops["w_out_t"], ops["b_out"])
    return logits[:, :, :ops["V"]]          # drop padded vocab columns


# ----------------------------- Pure-JAX reference ---------------------------
# Original (unpadded) layout, same bf16-at-MXU / f32-elsewhere policy.


def lstm_ref(x, w_ih, w_hh, b_ih, b_hh, h0, c0):
    H = w_hh.shape[1]
    w_ih_t = w_ih.T.astype(jnp.bfloat16)
    w_hh_t = w_hh.T.astype(jnp.bfloat16)
    b = (b_ih + b_hh).astype(jnp.float32)
    xg = jnp.dot(x.astype(jnp.bfloat16), w_ih_t,
                 preferred_element_type=jnp.float32) + b      # (B, T, 4H)

    def step(carry, xg_t):
        h, c = carry
        gates = xg_t + jnp.dot(h.astype(jnp.bfloat16), w_hh_t,
                               preferred_element_type=jnp.float32)
        i = jax.nn.sigmoid(gates[:, 0 * H:1 * H])
        f = jax.nn.sigmoid(gates[:, 1 * H:2 * H])
        g = jnp.tanh(gates[:, 2 * H:3 * H])
        o = jax.nn.sigmoid(gates[:, 3 * H:4 * H])
        c = f * c + i * g
        h = o * jnp.tanh(c)
        return (h, c), h

    (hT, cT), hs = lax.scan(step, (h0, c0), jnp.swapaxes(xg, 0, 1))
    return jnp.swapaxes(hs, 0, 1), hT, cT     # (B, T, H), (B, H), (B, H)


def forward_ref(params, encoder_inputs, decoder_inputs):
    B = encoder_inputs.shape[0]
    H = params["enc_w_hh"].shape[1]
    zeros = jnp.zeros((B, H), jnp.float32)
    emb = params["embed"]

    enc_hs, enc_hT, enc_cT = lstm_ref(
        jnp.take(emb, encoder_inputs, axis=0), params["enc_w_ih"],
        params["enc_w_hh"], params["enc_b_ih"], params["enc_b_hh"], zeros, zeros)
    dec_hs, _, _ = lstm_ref(
        jnp.take(emb, decoder_inputs, axis=0), params["dec_w_ih"],
        params["dec_w_hh"], params["dec_b_ih"], params["dec_b_hh"],
        enc_hT, enc_cT)

    dec_b = dec_hs.astype(jnp.bfloat16)
    enc_b = enc_hs.astype(jnp.bfloat16)
    scores = jnp.einsum("bqh,bkh->bqk", dec_b, enc_b,
                        preferred_element_type=jnp.float32)
    attn = jax.nn.softmax(scores, axis=-1)
    ctx = jnp.einsum("bqk,bkh->bqh", attn.astype(jnp.bfloat16), enc_b,
                     preferred_element_type=jnp.float32)
    w_c_t = params["w_c"].T.astype(jnp.bfloat16)       # (2H, H)
    av = jnp.tanh(
        jnp.dot(ctx.astype(jnp.bfloat16), w_c_t[:H],
                preferred_element_type=jnp.float32)
        + jnp.dot(dec_b, w_c_t[H:], preferred_element_type=jnp.float32))
    logits = jnp.dot(av.astype(jnp.bfloat16),
                     params["w_out"].T.astype(jnp.bfloat16),
                     preferred_element_type=jnp.float32) + params["b_out"]
    return logits


# ----------------------------------- main ------------------------------------


if __name__ == "__main__":
    V, E, H = 64, 32, 32
    B, Te, Td = 2, 8, 8

    key = jax.random.PRNGKey(0)
    kp, ke, kd = jax.random.split(key, 3)
    params = init_params(kp, V, E, H)
    encoder_inputs = jax.random.randint(ke, (B, Te), 0, V, dtype=jnp.int32)
    decoder_inputs = jax.random.randint(kd, (B, Td), 0, V, dtype=jnp.int32)

    hp = _round_up(H, LANES)
    vp = _round_up(V, LANES)
    if vp > VOCAB_TILE:                      # pad vocab to a tile multiple
        vp = _round_up(V, VOCAB_TILE)        # (no full-dimension tile fallback)
    ops = prepare_operands(params, hp=hp, vp=vp)

    logits = encoder_decoder_forward(ops, encoder_inputs, decoder_inputs)
    logits = jax.block_until_ready(logits)

    ref = forward_ref(params, encoder_inputs, decoder_inputs)
    assert logits.shape == (B, Td, V)
    err = float(jnp.max(jnp.abs(logits - ref)))
    assert jnp.allclose(logits, ref, atol=1e-2, rtol=1e-2), \
        f"mismatch vs reference, max abs err = {err}"

    print("KERNEL_OK")
</pallas_src>

<mosaic_0001>
module attributes {stable_mosaic.version = 11 : i64} {
  func.func @lstm_kernel(%arg0: i32, %arg1: memref<8x2x32xbf16, #tpu.memory_space<vmem>>, %arg2: memref<32x512xbf16, #tpu.memory_space<vmem>>, %arg3: memref<1x512xf32, #tpu.memory_space<vmem>>, %arg4: memref<128x512xbf16, #tpu.memory_space<vmem>>, %arg5: memref<2x128xf32, #tpu.memory_space<vmem>>, %arg6: memref<2x128xf32, #tpu.memory_space<vmem>>, %arg7: memref<2x8x128xbf16, #tpu.memory_space<vmem>>, %arg8: memref<2x128xf32, #tpu.memory_space<vmem>>, %arg9: memref<2x128xf32, #tpu.memory_space<vmem>>) attributes {dimension_semantics = [#tpu.dimension_semantics<parallel>], iteration_bounds = array<i64: 1>, scalar_prefetch = 0 : i64, scratch_operands = 0 : i64, tpu.core_type = #tpu.core_type<tc>, window_params = [{transform_indices = @transform_0, window_bounds = array<i64: 8, 2, 32>}, {pipeline_mode = #tpu.pipeline_mode<synchronous>, transform_indices = @transform_1, window_bounds = array<i64: 32, 512>}, {pipeline_mode = #tpu.pipeline_mode<synchronous>, transform_indices = @transform_2, window_bounds = array<i64: 1, 512>}, {pipeline_mode = #tpu.pipeline_mode<synchronous>, transform_indices = @transform_3, window_bounds = array<i64: 128, 512>}, {transform_indices = @transform_4, window_bounds = array<i64: 2, 128>}, {transform_indices = @transform_5, window_bounds = array<i64: 2, 128>}, {transform_indices = @transform_6, window_bounds = array<i64: 2, 8, 128>}, {transform_indices = @transform_7, window_bounds = array<i64: 2, 128>}, {transform_indices = @transform_8, window_bounds = array<i64: 2, 128>}]} {
    %c0 = arith.constant 0 : index
    %c0_0 = arith.constant 0 : index
    %0 = vector.load %arg5[%c0, %c0_0] : memref<2x128xf32, #tpu.memory_space<vmem>>, vector<2x128xf32>
    %c0_1 = arith.constant 0 : index
    %c0_2 = arith.constant 0 : index
    %1 = vector.load %arg6[%c0_1, %c0_2] : memref<2x128xf32, #tpu.memory_space<vmem>>, vector<2x128xf32>
    %c0_3 = arith.constant 0 : index
    %c0_4 = arith.constant 0 : index
    %c0_5 = arith.constant 0 : index
    %2 = vector.load %arg1[%c0_3, %c0_4, %c0_5] : memref<8x2x32xbf16, #tpu.memory_space<vmem>>, vector<1x2x32xbf16>
    %3 = vector.shape_cast %2 : vector<1x2x32xbf16> to vector<2x32xbf16>
    %c0_6 = arith.constant 0 : index
    %c0_7 = arith.constant 0 : index
    %4 = vector.load %arg2[%c0_6, %c0_7] : memref<32x512xbf16, #tpu.memory_space<vmem>>, vector<32x512xbf16>
    %cst = arith.constant dense<0.000000e+00> : vector<2x512xf32>
    %5 = tpu.matmul %3, %4, %cst {dimension_numbers = #tpu.dot_dimension_numbers<[1], [0], [0], [1], [0, 0, 1, 1], [], []>} : vector<2x32xbf16>, vector<32x512xbf16>, vector<2x512xf32> -> vector<2x512xf32>
    %6 = arith.truncf %0 : vector<2x128xf32> to vector<2x128xbf16>
    %c0_8 = arith.constant 0 : index
    %c0_9 = arith.constant 0 : index
    %7 = vector.load %arg4[%c0_8, %c0_9] : memref<128x512xbf16, #tpu.memory_space<vmem>>, vector<128x512xbf16>
    %cst_10 = arith.constant dense<0.000000e+00> : vector<2x512xf32>
    %8 = tpu.matmul %6, %7, %cst_10 {dimension_numbers = #tpu.dot_dimension_numbers<[1], [0], [0], [1], [0, 0, 1, 1], [], []>} : vector<2x128xbf16>, vector<128x512xbf16>, vector<2x512xf32> -> vector<2x512xf32>
    %9 = arith.addf %5, %8 : vector<2x512xf32>
    %c0_11 = arith.constant 0 : index
    %c0_12 = arith.constant 0 : index
    %10 = vector.load %arg3[%c0_11, %c0_12] : memref<1x512xf32, #tpu.memory_space<vmem>>, vector<1x512xf32>
    %11 = vector.broadcast %10 : vector<1x512xf32> to vector<2x512xf32>
    %12 = arith.addf %9, %11 : vector<2x512xf32>
    %13 = vector.extract_strided_slice %12 {offsets = [0, 0], sizes = [2, 128], strides = [1, 1]} : vector<2x512xf32> to vector<2x128xf32>
    %14 = arith.negf %13 : vector<2x128xf32>
    %15 = math.exp %14 : vector<2x128xf32>
    %cst_13 = arith.constant 1.000000e+00 : f32
    %16 = vector.broadcast %cst_13 : f32 to vector<2x128xf32>
    %17 = arith.addf %16, %15 : vector<2x128xf32>
    %18 = arith.divf %16, %17 : vector<2x128xf32>
    %19 = vector.extract_strided_slice %12 {offsets = [0, 128], sizes = [2, 128], strides = [1, 1]} : vector<2x512xf32> to vector<2x128xf32>
    %20 = arith.negf %19 : vector<2x128xf32>
    %21 = math.exp %20 : vector<2x128xf32>
    %cst_14 = arith.constant 1.000000e+00 : f32
    %22 = vector.broadcast %cst_14 : f32 to vector<2x128xf32>
    %23 = arith.addf %22, %21 : vector<2x128xf32>
    %24 = arith.divf %22, %23 : vector<2x128xf32>
    %25 = vector.extract_strided_slice %12 {offsets = [0, 256], sizes = [2, 128], strides = [1, 1]} : vector<2x512xf32> to vector<2x128xf32>
    %26 = math.tanh %25 : vector<2x128xf32>
    %27 = vector.extract_strided_slice %12 {offsets = [0, 384], sizes = [2, 128], strides = [1, 1]} : vector<2x512xf32> to vector<2x128xf32>
    %28 = arith.negf %27 : vector<2x128xf32>
    %29 = math.exp %28 : vector<2x128xf32>
    %cst_15 = arith.constant 1.000000e+00 : f32
    %30 = vector.broadcast %cst_15 : f32 to vector<2x128xf32>
    %31 = arith.addf %30, %29 : vector<2x128xf32>
    %32 = arith.divf %30, %31 : vector<2x128xf32>
    %33 = arith.mulf %24, %1 : vector<2x128xf32>
    %34 = arith.mulf %18, %26 : vector<2x128xf32>
    %35 = arith.addf %33, %34 : vector<2x128xf32>
    %36 = math.tanh %35 : vector<2x128xf32>
    %37 = arith.mulf %32, %36 : vector<2x128xf32>
    %38 = arith.truncf %37 : vector<2x128xf32> to vector<2x128xbf16>
    %c0_16 = arith.constant 0 : index
    %c0_17 = arith.constant 0 : index
    %c0_18 = arith.constant 0 : index
    %39 = vector.load %arg7[%c0_16, %c0_17, %c0_18] : memref<2x8x128xbf16, #tpu.memory_space<vmem>>, vector<2x1x128xbf16>
    %40 = vector.shape_cast %39 : vector<2x1x128xbf16> to vector<2x128xbf16>
    %41 = vector.shape_cast %38 : vector<2x128xbf16> to vector<2x1x128xbf16>
    tpu.vector_store %arg7[%c0_16, %c0_17, %c0_18], %41 {strides = array<i32>} : memref<2x8x128xbf16, #tpu.memory_space<vmem>>, vector<2x1x128xbf16>,
    %c1 = arith.constant 1 : index
    %c0_19 = arith.constant 0 : index
    %c0_20 = arith.constant 0 : index
    %42 = vector.load %arg1[%c1, %c0_19, %c0_20] : memref<8x2x32xbf16, #tpu.memory_space<vmem>>, vector<1x2x32xbf16>
    %43 = vector.shape_cast %42 : vector<1x2x32xbf16> to vector<2x32xbf16>
    %c0_21 = arith.constant 0 : index
    %c0_22 = arith.constant 0 : index
    %44 = vector.load %arg2[%c0_21, %c0_22] : memref<32x512xbf16, #tpu.memory_space<vmem>>, vector<32x512xbf16>
    %cst_23 = arith.constant dense<0.000000e+00> : vector<2x512xf32>
    %45 = tpu.matmul %43, %44, %cst_23 {dimension_numbers = #tpu.dot_dimension_numbers<[1], [0], [0], [1], [0, 0, 1, 1], [], []>} : vector<2x32xbf16>, vector<32x512xbf16>, vector<2x512xf32> -> vector<2x512xf32>
    %46 = arith.truncf %37 : vector<2x128xf32> to vector<2x128xbf16>
    %c0_24 = arith.constant 0 : index
    %c0_25 = arith.constant 0 : index
    %47 = vector.load %arg4[%c0_24, %c0_25] : memref<128x512xbf16, #tpu.memory_space<vmem>>, vector<128x512xbf16>
    %cst_26 = arith.constant dense<0.000000e+00> : vector<2x512xf32>
    %48 = tpu.matmul %46, %47, %cst_26 {dimension_numbers = #tpu.dot_dimension_numbers<[1], [0], [0], [1], [0, 0, 1, 1], [], []>} : vector<2x128xbf16>, vector<128x512xbf16>, vector<2x512xf32> -> vector<2x512xf32>
    %49 = arith.addf %45, %48 : vector<2x512xf32>
    %c0_27 = arith.constant 0 : index
    %c0_28 = arith.constant 0 : index
    %50 = vector.load %arg3[%c0_27, %c0_28] : memref<1x512xf32, #tpu.memory_space<vmem>>, vector<1x512xf32>
    %51 = vector.broadcast %50 : vector<1x512xf32> to vector<2x512xf32>
    %52 = arith.addf %49, %51 : vector<2x512xf32>
    %53 = vector.extract_strided_slice %52 {offsets = [0, 0], sizes = [2, 128], strides = [1, 1]} : vector<2x512xf32> to vector<2x128xf32>
    %54 = arith.negf %53 : vector<2x128xf32>
    %55 = math.exp %54 : vector<2x128xf32>
    %cst_29 = arith.constant 1.000000e+00 : f32
    %56 = vector.broadcast %cst_29 : f32 to vector<2x128xf32>
    %57 = arith.addf %56, %55 : vector<2x128xf32>
    %58 = arith.divf %56, %57 : vector<2x128xf32>
    %59 = vector.extract_strided_slice %52 {offsets = [0, 128], sizes = [2, 128], strides = [1, 1]} : vector<2x512xf32> to vector<2x128xf32>
    %60 = arith.negf %59 : vector<2x128xf32>
    %61 = math.exp %60 : vector<2x128xf32>
    %cst_30 = arith.constant 1.000000e+00 : f32
    %62 = vector.broadcast %cst_30 : f32 to vector<2x128xf32>
    %63 = arith.addf %62, %61 : vector<2x128xf32>
    %64 = arith.divf %62, %63 : vector<2x128xf32>
    %65 = vector.extract_strided_slice %52 {offsets = [0, 256], sizes = [2, 128], strides = [1, 1]} : vector<2x512xf32> to vector<2x128xf32>
    %66 = math.tanh %65 : vector<2x128xf32>
    %67 = vector.extract_strided_slice %52 {offsets = [0, 384], sizes = [2, 128], strides = [1, 1]} : vector<2x512xf32> to vector<2x128xf32>
    %68 = arith.negf %67 : vector<2x128xf32>
    %69 = math.exp %68 : vector<2x128xf32>
    %cst_31 = arith.constant 1.000000e+00 : f32
    %70 = vector.broadcast %cst_31 : f32 to vector<2x128xf32>
    %71 = arith.addf %70, %69 : vector<2x128xf32>
    %72 = arith.divf %70, %71 : vector<2x128xf32>
    %73 = arith.mulf %64, %35 : vector<2x128xf32>
    %74 = arith.mulf %58, %66 : vector<2x128xf32>
    %75 = arith.addf %73, %74 : vector<2x128xf32>
    %76 = math.tanh %75 : vector<2x128xf32>
    %77 = arith.mulf %72, %76 : vector<2x128xf32>
    %78 = arith.truncf %77 : vector<2x128xf32> to vector<2x128xbf16>
    %c0_32 = arith.constant 0 : index
    %c1_33 = arith.constant 1 : index
    %c0_34 = arith.constant 0 : index
    %79 = vector.load %arg7[%c0_32, %c1_33, %c0_34] : memref<2x8x128xbf16, #tpu.memory_space<vmem>>, vector<2x1x128xbf16>
    %80 = vector.shape_cast %79 : vector<2x1x128xbf16> to vector<2x128xbf16>
    %81 = vector.shape_cast %78 : vector<2x128xbf16> to vector<2x1x128xbf16>
    tpu.vector_store %arg7[%c0_32, %c1_33, %c0_34], %81 {strides = array<i32>} : memref<2x8x128xbf16, #tpu.memory_space<vmem>>, vector<2x1x128xbf16>,
    %c2 = arith.constant 2 : index
    %c0_35 = arith.constant 0 : index
    %c0_36 = arith.constant 0 : index
    %82 = vector.load %arg1[%c2, %c0_35, %c0_36] : memref<8x2x32xbf16, #tpu.memory_space<vmem>>, vector<1x2x32xbf16>
    %83 = vector.shape_cast %82 : vector<1x2x32xbf16> to vector<2x32xbf16>
    %c0_37 = arith.constant 0 : index
    %c0_38 = arith.constant 0 : index
    %84 = vector.load %arg2[%c0_37, %c0_38] : memref<32x512xbf16, #tpu.memory_space<vmem>>, vector<32x512xbf16>
    %cst_39 = arith.constant dense<0.000000e+00> : vector<2x512xf32>
    %85 = tpu.matmul %83, %84, %cst_39 {dimension_numbers = #tpu.dot_dimension_numbers<[1], [0], [0], [1], [0, 0, 1, 1], [], []>} : vector<2x32xbf16>, vector<32x512xbf16>, vector<2x512xf32> -> vector<2x512xf32>
    %86 = arith.truncf %77 : vector<2x128xf32> to vector<2x128xbf16>
    %c0_40 = arith.constant 0 : index
    %c0_41 = arith.constant 0 : index
    %87 = vector.load %arg4[%c0_40, %c0_41] : memref<128x512xbf16, #tpu.memory_space<vmem>>, vector<128x512xbf16>
    %cst_42 = arith.constant dense<0.000000e+00> : vector<2x512xf32>
    %88 = tpu.matmul %86, %87, %cst_42 {dimension_numbers = #tpu.dot_dimension_numbers<[1], [0], [0], [1], [0, 0, 1, 1], [], []>} : vector<2x128xbf16>, vector<128x512xbf16>, vector<2x512xf32> -> vector<2x512xf32>
    %89 = arith.addf %85, %88 : vector<2x512xf32>
    %c0_43 = arith.constant 0 : index
    %c0_44 = arith.constant 0 : index
    %90 = vector.load %arg3[%c0_43, %c0_44] : memref<1x512xf32, #tpu.memory_space<vmem>>, vector<1x512xf32>
    %91 = vector.broadcast %90 : vector<1x512xf32> to vector<2x512xf32>
    %92 = arith.addf %89, %91 : vector<2x512xf32>
    %93 = vector.extract_strided_slice %92 {offsets = [0, 0], sizes = [2, 128], strides = [1, 1]} : vector<2x512xf32> to vector<2x128xf32>
    %94 = arith.negf %93 : vector<2x128xf32>
    %95 = math.exp %94 : vector<2x128xf32>
    %cst_45 = arith.constant 1.000000e+00 : f32
    %96 = vector.broadcast %cst_45 : f32 to vector<2x128xf32>
    %97 = arith.addf %96, %95 : vector<2x128xf32>
    %98 = arith.divf %96, %97 : vector<2x128xf32>
    %99 = vector.extract_strided_slice %92 {offsets = [0, 128], sizes = [2, 128], strides = [1, 1]} : vector<2x512xf32> to vector<2x128xf32>
    %100 = arith.negf %99 : vector<2x128xf32>
    %101 = math.exp %100 : vector<2x128xf32>
    %cst_46 = arith.constant 1.000000e+00 : f32
    %102 = vector.broadcast %cst_46 : f32 to vector<2x128xf32>
    %103 = arith.addf %102, %101 : vector<2x128xf32>
    %104 = arith.divf %102, %103 : vector<2x128xf32>
    %105 = vector.extract_strided_slice %92 {offsets = [0, 256], sizes = [2, 128], strides = [1, 1]} : vector<2x512xf32> to vector<2x128xf32>
    %106 = math.tanh %105 : vector<2x128xf32>
    %107 = vector.extract_strided_slice %92 {offsets = [0, 384], sizes = [2, 128], strides = [1, 1]} : vector<2x512xf32> to vector<2x128xf32>
    %108 = arith.negf %107 : vector<2x128xf32>
    %109 = math.exp %108 : vector<2x128xf32>
    %cst_47 = arith.constant 1.000000e+00 : f32
    %110 = vector.broadcast %cst_47 : f32 to vector<2x128xf32>
    %111 = arith.addf %110, %109 : vector<2x128xf32>
    %112 = arith.divf %110, %111 : vector<2x128xf32>
    %113 = arith.mulf %104, %75 : vector<2x128xf32>
    %114 = arith.mulf %98, %106 : vector<2x128xf32>
    %115 = arith.addf %113, %114 : vector<2x128xf32>
    %116 = math.tanh %115 : vector<2x128xf32>
    %117 = arith.mulf %112, %116 : vector<2x128xf32>
    %118 = arith.truncf %117 : vector<2x128xf32> to vector<2x128xbf16>
    %c0_48 = arith.constant 0 : index
    %c2_49 = arith.constant 2 : index
    %c0_50 = arith.constant 0 : index
    %119 = vector.load %arg7[%c0_48, %c2_49, %c0_50] : memref<2x8x128xbf16, #tpu.memory_space<vmem>>, vector<2x1x128xbf16>
    %120 = vector.shape_cast %119 : vector<2x1x128xbf16> to vector<2x128xbf16>
    %121 = vector.shape_cast %118 : vector<2x128xbf16> to vector<2x1x128xbf16>
    tpu.vector_store %arg7[%c0_48, %c2_49, %c0_50], %121 {strides = array<i32>} : memref<2x8x128xbf16, #tpu.memory_space<vmem>>, vector<2x1x128xbf16>,
    %c3 = arith.constant 3 : index
    %c0_51 = arith.constant 0 : index
    %c0_52 = arith.constant 0 : index
    %122 = vector.load %arg1[%c3, %c0_51, %c0_52] : memref<8x2x32xbf16, #tpu.memory_space<vmem>>, vector<1x2x32xbf16>
    %123 = vector.shape_cast %122 : vector<1x2x32xbf16> to vector<2x32xbf16>
    %c0_53 = arith.constant 0 : index
    %c0_54 = arith.constant 0 : index
    %124 = vector.load %arg2[%c0_53, %c0_54] : memref<32x512xbf16, #tpu.memory_space<vmem>>, vector<32x512xbf16>
    %cst_55 = arith.constant dense<0.000000e+00> : vector<2x512xf32>
    %125 = tpu.matmul %123, %124, %cst_55 {dimension_numbers = #tpu.dot_dimension_numbers<[1], [0], [0], [1], [0, 0, 1, 1], [], []>} : vector<2x32xbf16>, vector<32x512xbf16>, vector<2x512xf32> -> vector<2x512xf32>
    %126 = arith.truncf %117 : vector<2x128xf32> to vector<2x128xbf16>
    %c0_56 = arith.constant 0 : index
    %c0_57 = arith.constant 0 : index
    %127 = vector.load %arg4[%c0_56, %c0_57] : memref<128x512xbf16, #tpu.memory_space<vmem>>, vector<128x512xbf16>
    %cst_58 = arith.constant dense<0.000000e+00> : vector<2x512xf32>
    %128 = tpu.matmul %126, %127, %cst_58 {dimension_numbers = #tpu.dot_dimension_numbers<[1], [0], [0], [1], [0, 0, 1, 1], [], []>} : vector<2x128xbf16>, vector<128x512xbf16>, vector<2x512xf32> -> vector<2x512xf32>
    %129 = arith.addf %125, %128 : vector<2x512xf32>
    %c0_59 = arith.constant 0 : index
    %c0_60 = arith.constant 0 : index
    %130 = vector.load %arg3[%c0_59, %c0_60] : memref<1x512xf32, #tpu.memory_space<vmem>>, vector<1x512xf32>
    %131 = vector.broadcast %130 : vector<1x512xf32> to vector<2x512xf32>
    %132 = arith.addf %129, %131 : vector<2x512xf32>
    %133 = vector.extract_strided_slice %132 {offsets = [0, 0], sizes = [2, 128], strides = [1, 1]} : vector<2x512xf32> to vector<2x128xf32>
    %134 = arith.negf %133 : vector<2x128xf32>
    %135 = math.exp %134 : vector<2x128xf32>
    %cst_61 = arith.constant 1.000000e+00 : f32
    %136 = vector.broadcast %cst_61 : f32 to vector<2x128xf32>
    %137 = arith.addf %136, %135 : vector<2x128xf32>
    %138 = arith.divf %136, %137 : vector<2x128xf32>
    %139 = vector.extract_strided_slice %132 {offsets = [0, 128], sizes = [2, 128], strides = [1, 1]} : vector<2x512xf32> to vector<2x128xf32>
    %140 = arith.negf %139 : vector<2x128xf32>
    %141 = math.exp %140 : vector<2x128xf32>
    %cst_62 = arith.constant 1.000000e+00 : f32
    %142 = vector.broadcast %cst_62 : f32 to vector<2x128xf32>
    %143 = arith.addf %142, %141 : vector<2x128xf32>
    %144 = arith.divf %142, %143 : vector<2x128xf32>
    %145 = vector.extract_strided_slice %132 {offsets = [0, 256], sizes = [2, 128], strides = [1, 1]} : vector<2x512xf32> to vector<2x128xf32>
    %146 = math.tanh %145 : vector<2x128xf32>
    %147 = vector.extract_strided_slice %132 {offsets = [0, 384], sizes = [2, 128], strides = [1, 1]} : vector<2x512xf32> to vector<2x128xf32>
    %148 = arith.negf %147 : vector<2x128xf32>
    %149 = math.exp %148 : vector<2x128xf32>
    %cst_63 = arith.constant 1.000000e+00 : f32
    %150 = vector.broadcast %cst_63 : f32 to vector<2x128xf32>
    %151 = arith.addf %150, %149 : vector<2x128xf32>
    %152 = arith.divf %150, %151 : vector<2x128xf32>
    %153 = arith.mulf %144, %115 : vector<2x128xf32>
    %154 = arith.mulf %138, %146 : vector<2x128xf32>
    %155 = arith.addf %153, %154 : vector<2x128xf32>
    %156 = math.tanh %155 : vector<2x128xf32>
    %157 = arith.mulf %152, %156 : vector<2x128xf32>
    %158 = arith.truncf %157 : vector<2x128xf32> to vector<2x128xbf16>
    %c0_64 = arith.constant 0 : index
    %c3_65 = arith.constant 3 : index
    %c0_66 = arith.constant 0 : index
    %159 = vector.load %arg7[%c0_64, %c3_65, %c0_66] : memref<2x8x128xbf16, #tpu.memory_space<vmem>>, vector<2x1x128xbf16>
    %160 = vector.shape_cast %159 : vector<2x1x128xbf16> to vector<2x128xbf16>
    %161 = vector.shape_cast %158 : vector<2x128xbf16> to vector<2x1x128xbf16>
    tpu.vector_store %arg7[%c0_64, %c3_65, %c0_66], %161 {strides = array<i32>} : memref<2x8x128xbf16, #tpu.memory_space<vmem>>, vector<2x1x128xbf16>,
    %c4 = arith.constant 4 : index
    %c0_67 = arith.constant 0 : index
    %c0_68 = arith.constant 0 : index
    %162 = vector.load %arg1[%c4, %c0_67, %c0_68] : memref<8x2x32xbf16, #tpu.memory_space<vmem>>, vector<1x2x32xbf16>
    %163 = vector.shape_cast %162 : vector<1x2x32xbf16> to vector<2x32xbf16>
    %c0_69 = arith.constant 0 : index
    %c0_70 = arith.constant 0 : index
    %164 = vector.load %arg2[%c0_69, %c0_70] : memref<32x512xbf16, #tpu.memory_space<vmem>>, vector<32x512xbf16>
    %cst_71 = arith.constant dense<0.000000e+00> : vector<2x512xf32>
    %165 = tpu.matmul %163, %164, %cst_71 {dimension_numbers = #tpu.dot_dimension_numbers<[1], [0], [0], [1], [0, 0, 1, 1], [], []>} : vector<2x32xbf16>, vector<32x512xbf16>, vector<2x512xf32> -> vector<2x512xf32>
    %166 = arith.truncf %157 : vector<2x128xf32> to vector<2x128xbf16>
    %c0_72 = arith.constant 0 : index
    %c0_73 = arith.constant 0 : index
    %167 = vector.load %arg4[%c0_72, %c0_73] : memref<128x512xbf16, #tpu.memory_space<vmem>>, vector<128x512xbf16>
    %cst_74 = arith.constant dense<0.000000e+00> : vector<2x512xf32>
    %168 = tpu.matmul %166, %167, %cst_74 {dimension_numbers = #tpu.dot_dimension_numbers<[1], [0], [0], [1], [0, 0, 1, 1], [], []>} : vector<2x128xbf16>, vector<128x512xbf16>, vector<2x512xf32> -> vector<2x512xf32>
    %169 = arith.addf %165, %168 : vector<2x512xf32>
    %c0_75 = arith.constant 0 : index
    %c0_76 = arith.constant 0 : index
    %170 = vector.load %arg3[%c0_75, %c0_76] : memref<1x512xf32, #tpu.memory_space<vmem>>, vector<1x512xf32>
    %171 = vector.broadcast %170 : vector<1x512xf32> to vector<2x512xf32>
    %172 = arith.addf %169, %171 : vector<2x512xf32>
    %173 = vector.extract_strided_slice %172 {offsets = [0, 0], sizes = [2, 128], strides = [1, 1]} : vector<2x512xf32> to vector<2x128xf32>
    %174 = arith.negf %173 : vector<2x128xf32>
    %175 = math.exp %174 : vector<2x128xf32>
    %cst_77 = arith.constant 1.000000e+00 : f32
    %176 = vector.broadcast %cst_77 : f32 to vector<2x128xf32>
    %177 = arith.addf %176, %175 : vector<2x128xf32>
    %178 = arith.divf %176, %177 : vector<2x128xf32>
    %179 = vector.extract_strided_slice %172 {offsets = [0, 128], sizes = [2, 128], strides = [1, 1]} : vector<2x512xf32> to vector<2x128xf32>
    %180 = arith.negf %179 : vector<2x128xf32>
    %181 = math.exp %180 : vector<2x128xf32>
    %cst_78 = arith.constant 1.000000e+00 : f32
    %182 = vector.broadcast %cst_78 : f32 to vector<2x128xf32>
    %183 = arith.addf %182, %181 : vector<2x128xf32>
    %184 = arith.divf %182, %183 : vector<2x128xf32>
    %185 = vector.extract_strided_slice %172 {offsets = [0, 256], sizes = [2, 128], strides = [1, 1]} : vector<2x512xf32> to vector<2x128xf32>
    %186 = math.tanh %185 : vector<2x128xf32>
    %187 = vector.extract_strided_slice %172 {offsets = [0, 384], sizes = [2, 128], strides = [1, 1]} : vector<2x512xf32> to vector<2x128xf32>
    %188 = arith.negf %187 : vector<2x128xf32>
    %189 = math.exp %188 : vector<2x128xf32>
    %cst_79 = arith.constant 1.000000e+00 : f32
    %190 = vector.broadcast %cst_79 : f32 to vector<2x128xf32>
    %191 = arith.addf %190, %189 : vector<2x128xf32>
    %192 = arith.divf %190, %191 : vector<2x128xf32>
    %193 = arith.mulf %184, %155 : vector<2x128xf32>
    %194 = arith.mulf %178, %186 : vector<2x128xf32>
    %195 = arith.addf %193, %194 : vector<2x128xf32>
    %196 = math.tanh %195 : vector<2x128xf32>
    %197 = arith.mulf %192, %196 : vector<2x128xf32>
    %198 = arith.truncf %197 : vector<2x128xf32> to vector<2x128xbf16>
    %c0_80 = arith.constant 0 : index
    %c4_81 = arith.constant 4 : index
    %c0_82 = arith.constant 0 : index
    %199 = vector.load %arg7[%c0_80, %c4_81, %c0_82] : memref<2x8x128xbf16, #tpu.memory_space<vmem>>, vector<2x1x128xbf16>
    %200 = vector.shape_cast %199 : vector<2x1x128xbf16> to vector<2x128xbf16>
    %201 = vector.shape_cast %198 : vector<2x128xbf16> to vector<2x1x128xbf16>
    tpu.vector_store %arg7[%c0_80, %c4_81, %c0_82], %201 {strides = array<i32>} : memref<2x8x128xbf16, #tpu.memory_space<vmem>>, vector<2x1x128xbf16>,
    %c5 = arith.constant 5 : index
    %c0_83 = arith.constant 0 : index
    %c0_84 = arith.constant 0 : index
    %202 = vector.load %arg1[%c5, %c0_83, %c0_84] : memref<8x2x32xbf16, #tpu.memory_space<vmem>>, vector<1x2x32xbf16>
    %203 = vector.shape_cast %202 : vector<1x2x32xbf16> to vector<2x32xbf16>
    %c0_85 = arith.constant 0 : index
    %c0_86 = arith.constant 0 : index
    %204 = vector.load %arg2[%c0_85, %c0_86] : memref<32x512xbf16, #tpu.memory_space<vmem>>, vector<32x512xbf16>
    %cst_87 = arith.constant dense<0.000000e+00> : vector<2x512xf32>
    %205 = tpu.matmul %203, %204, %cst_87 {dimension_numbers = #tpu.dot_dimension_numbers<[1], [0], [0], [1], [0, 0, 1, 1], [], []>} : vector<2x32xbf16>, vector<32x512xbf16>, vector<2x512xf32> -> vector<2x512xf32>
    %206 = arith.truncf %197 : vector<2x128xf32> to vector<2x128xbf16>
    %c0_88 = arith.constant 0 : index
    %c0_89 = arith.constant 0 : index
    %207 = vector.load %arg4[%c0_88, %c0_89] : memref<128x512xbf16, #tpu.memory_space<vmem>>, vector<128x512xbf16>
    %cst_90 = arith.constant dense<0.000000e+00> : vector<2x512xf32>
    %208 = tpu.matmul %206, %207, %cst_90 {dimension_numbers = #tpu.dot_dimension_numbers<[1], [0], [0], [1], [0, 0, 1, 1], [], []>} : vector<2x128xbf16>, vector<128x512xbf16>, vector<2x512xf32> -> vector<2x512xf32>
    %209 = arith.addf %205, %208 : vector<2x512xf32>
    %c0_91 = arith.constant 0 : index
    %c0_92 = arith.constant 0 : index
    %210 = vector.load %arg3[%c0_91, %c0_92] : memref<1x512xf32, #tpu.memory_space<vmem>>, vector<1x512xf32>
    %211 = vector.broadcast %210 : vector<1x512xf32> to vector<2x512xf32>
    %212 = arith.addf %209, %211 : vector<2x512xf32>
    %213 = vector.extract_strided_slice %212 {offsets = [0, 0], sizes = [2, 128], strides = [1, 1]} : vector<2x512xf32> to vector<2x128xf32>
    %214 = arith.negf %213 : vector<2x128xf32>
    %215 = math.exp %214 : vector<2x128xf32>
    %cst_93 = arith.constant 1.000000e+00 : f32
    %216 = vector.broadcast %cst_93 : f32 to vector<2x128xf32>
    %217 = arith.addf %216, %215 : vector<2x128xf32>
    %218 = arith.divf %216, %217 : vector<2x128xf32>
    %219 = vector.extract_strided_slice %212 {offsets = [0, 128], sizes = [2, 128], strides = [1, 1]} : vector<2x512xf32> to vector<2x128xf32>
    %220 = arith.negf %219 : vector<2x128xf32>
    %221 = math.exp %220 : vector<2x128xf32>
    %cst_94 = arith.constant 1.000000e+00 : f32
    %222 = vector.broadcast %cst_94 : f32 to vector<2x128xf32>
    %223 = arith.addf %222, %221 : vector<2x128xf32>
    %224 = arith.divf %222, %223 : vector<2x128xf32>
    %225 = vector.extract_strided_slice %212 {offsets = [0, 256], sizes = [2, 128], strides = [1, 1]} : vector<2x512xf32> to vector<2x128xf32>
    %226 = math.tanh %225 : vector<2x128xf32>
    %227 = vector.extract_strided_slice %212 {offsets = [0, 384], sizes = [2, 128], strides = [1, 1]} : vector<2x512xf32> to vector<2x128xf32>
    %228 = arith.negf %227 : vector<2x128xf32>
    %229 = math.exp %228 : vector<2x128xf32>
    %cst_95 = arith.constant 1.000000e+00 : f32
    %230 = vector.broadcast %cst_95 : f32 to vector<2x128xf32>
    %231 = arith.addf %230, %229 : vector<2x128xf32>
    %232 = arith.divf %230, %231 : vector<2x128xf32>
    %233 = arith.mulf %224, %195 : vector<2x128xf32>
    %234 = arith.mulf %218, %226 : vector<2x128xf32>
    %235 = arith.addf %233, %234 : vector<2x128xf32>
    %236 = math.tanh %235 : vector<2x128xf32>
    %237 = arith.mulf %232, %236 : vector<2x128xf32>
    %238 = arith.truncf %237 : vector<2x128xf32> to vector<2x128xbf16>
    %c0_96 = arith.constant 0 : index
    %c5_97 = arith.constant 5 : index
    %c0_98 = arith.constant 0 : index
    %239 = vector.load %arg7[%c0_96, %c5_97, %c0_98] : memref<2x8x128xbf16, #tpu.memory_space<vmem>>, vector<2x1x128xbf16>
    %240 = vector.shape_cast %239 : vector<2x1x128xbf16> to vector<2x128xbf16>
    %241 = vector.shape_cast %238 : vector<2x128xbf16> to vector<2x1x128xbf16>
    tpu.vector_store %arg7[%c0_96, %c5_97, %c0_98], %241 {strides = array<i32>} : memref<2x8x128xbf16, #tpu.memory_space<vmem>>, vector<2x1x128xbf16>,
    %c6 = arith.constant 6 : index
    %c0_99 = arith.constant 0 : index
    %c0_100 = arith.constant 0 : index
    %242 = vector.load %arg1[%c6, %c0_99, %c0_100] : memref<8x2x32xbf16, #tpu.memory_space<vmem>>, vector<1x2x32xbf16>
    %243 = vector.shape_cast %242 : vector<1x2x32xbf16> to vector<2x32xbf16>
    %c0_101 = arith.constant 0 : index
    %c0_102 = arith.constant 0 : index
    %244 = vector.load %arg2[%c0_101, %c0_102] : memref<32x512xbf16, #tpu.memory_space<vmem>>, vector<32x512xbf16>
    %cst_103 = arith.constant dense<0.000000e+00> : vector<2x512xf32>
    %245 = tpu.matmul %243, %244, %cst_103 {dimension_numbers = #tpu.dot_dimension_numbers<[1], [0], [0], [1], [0, 0, 1, 1], [], []>} : vector<2x32xbf16>, vector<32x512xbf16>, vector<2x512xf32> -> vector<2x512xf32>
    %246 = arith.truncf %237 : vector<2x128xf32> to vector<2x128xbf16>
    %c0_104 = arith.constant 0 : index
    %c0_105 = arith.constant 0 : index
    %247 = vector.load %arg4[%c0_104, %c0_105] : memref<128x512xbf16, #tpu.memory_space<vmem>>, vector<128x512xbf16>
    %cst_106 = arith.constant dense<0.000000e+00> : vector<2x512xf32>
    %248 = tpu.matmul %246, %247, %cst_106 {dimension_numbers = #tpu.dot_dimension_numbers<[1], [0], [0], [1], [0, 0, 1, 1], [], []>} : vector<2x128xbf16>, vector<128x512xbf16>, vector<2x512xf32> -> vector<2x512xf32>
    %249 = arith.addf %245, %248 : vector<2x512xf32>
    %c0_107 = arith.constant 0 : index
    %c0_108 = arith.constant 0 : index
    %250 = vector.load %arg3[%c0_107, %c0_108] : memref<1x512xf32, #tpu.memory_space<vmem>>, vector<1x512xf32>
    %251 = vector.broadcast %250 : vector<1x512xf32> to vector<2x512xf32>
    %252 = arith.addf %249, %251 : vector<2x512xf32>
    %253 = vector.extract_strided_slice %252 {offsets = [0, 0], sizes = [2, 128], strides = [1, 1]} : vector<2x512xf32> to vector<2x128xf32>
    %254 = arith.negf %253 : vector<2x128xf32>
    %255 = math.exp %254 : vector<2x128xf32>
    %cst_109 = arith.constant 1.000000e+00 : f32
    %256 = vector.broadcast %cst_109 : f32 to vector<2x128xf32>
    %257 = arith.addf %256, %255 : vector<2x128xf32>
    %258 = arith.divf %256, %257 : vector<2x128xf32>
    %259 = vector.extract_strided_slice %252 {offsets = [0, 128], sizes = [2, 128], strides = [1, 1]} : vector<2x512xf32> to vector<2x128xf32>
    %260 = arith.negf %259 : vector<2x128xf32>
    %261 = math.exp %260 : vector<2x128xf32>
    %cst_110 = arith.constant 1.000000e+00 : f32
    %262 = vector.broadcast %cst_110 : f32 to vector<2x128xf32>
    %263 = arith.addf %262, %261 : vector<2x128xf32>
    %264 = arith.divf %262, %263 : vector<2x128xf32>
    %265 = vector.extract_strided_slice %252 {offsets = [0, 256], sizes = [2, 128], strides = [1, 1]} : vector<2x512xf32> to vector<2x128xf32>
    %266 = math.tanh %265 : vector<2x128xf32>
    %267 = vector.extract_strided_slice %252 {offsets = [0, 384], sizes = [2, 128], strides = [1, 1]} : vector<2x512xf32> to vector<2x128xf32>
    %268 = arith.negf %267 : vector<2x128xf32>
    %269 = math.exp %268 : vector<2x128xf32>
    %cst_111 = arith.constant 1.000000e+00 : f32
    %270 = vector.broadcast %cst_111 : f32 to vector<2x128xf32>
    %271 = arith.addf %270, %269 : vector<2x128xf32>
    %272 = arith.divf %270, %271 : vector<2x128xf32>
    %273 = arith.mulf %264, %235 : vector<2x128xf32>
    %274 = arith.mulf %258, %266 : vector<2x128xf32>
    %275 = arith.addf %273, %274 : vector<2x128xf32>
    %276 = math.tanh %275 : vector<2x128xf32>
    %277 = arith.mulf %272, %276 : vector<2x128xf32>
    %278 = arith.truncf %277 : vector<2x128xf32> to vector<2x128xbf16>
    %c0_112 = arith.constant 0 : index
    %c6_113 = arith.constant 6 : index
    %c0_114 = arith.constant 0 : index
    %279 = vector.load %arg7[%c0_112, %c6_113, %c0_114] : memref<2x8x128xbf16, #tpu.memory_space<vmem>>, vector<2x1x128xbf16>
    %280 = vector.shape_cast %279 : vector<2x1x128xbf16> to vector<2x128xbf16>
    %281 = vector.shape_cast %278 : vector<2x128xbf16> to vector<2x1x128xbf16>
    tpu.vector_store %arg7[%c0_112, %c6_113, %c0_114], %281 {strides = array<i32>} : memref<2x8x128xbf16, #tpu.memory_space<vmem>>, vector<2x1x128xbf16>,
    %c7 = arith.constant 7 : index
    %c0_115 = arith.constant 0 : index
    %c0_116 = arith.constant 0 : index
    %282 = vector.load %arg1[%c7, %c0_115, %c0_116] : memref<8x2x32xbf16, #tpu.memory_space<vmem>>, vector<1x2x32xbf16>
    %283 = vector.shape_cast %282 : vector<1x2x32xbf16> to vector<2x32xbf16>
    %c0_117 = arith.constant 0 : index
    %c0_118 = arith.constant 0 : index
    %284 = vector.load %arg2[%c0_117, %c0_118] : memref<32x512xbf16, #tpu.memory_space<vmem>>, vector<32x512xbf16>
    %cst_119 = arith.constant dense<0.000000e+00> : vector<2x512xf32>
    %285 = tpu.matmul %283, %284, %cst_119 {dimension_numbers = #tpu.dot_dimension_numbers<[1], [0], [0], [1], [0, 0, 1, 1], [], []>} : vector<2x32xbf16>, vector<32x512xbf16>, vector<2x512xf32> -> vector<2x512xf32>
    %286 = arith.truncf %277 : vector<2x128xf32> to vector<2x128xbf16>
    %c0_120 = arith.constant 0 : index
    %c0_121 = arith.constant 0 : index
    %287 = vector.load %arg4[%c0_120, %c0_121] : memref<128x512xbf16, #tpu.memory_space<vmem>>, vector<128x512xbf16>
    %cst_122 = arith.constant dense<0.000000e+00> : vector<2x512xf32>
    %288 = tpu.matmul %286, %287, %cst_122 {dimension_numbers = #tpu.dot_dimension_numbers<[1], [0], [0], [1], [0, 0, 1, 1], [], []>} : vector<2x128xbf16>, vector<128x512xbf16>, vector<2x512xf32> -> vector<2x512xf32>
    %289 = arith.addf %285, %288 : vector<2x512xf32>
    %c0_123 = arith.constant 0 : index
    %c0_124 = arith.constant 0 : index
    %290 = vector.load %arg3[%c0_123, %c0_124] : memref<1x512xf32, #tpu.memory_space<vmem>>, vector<1x512xf32>
    %291 = vector.broadcast %290 : vector<1x512xf32> to vector<2x512xf32>
    %292 = arith.addf %289, %291 : vector<2x512xf32>
    %293 = vector.extract_strided_slice %292 {offsets = [0, 0], sizes = [2, 128], strides = [1, 1]} : vector<2x512xf32> to vector<2x128xf32>
    %294 = arith.negf %293 : vector<2x128xf32>
    %295 = math.exp %294 : vector<2x128xf32>
    %cst_125 = arith.constant 1.000000e+00 : f32
    %296 = vector.broadcast %cst_125 : f32 to vector<2x128xf32>
    %297 = arith.addf %296, %295 : vector<2x128xf32>
    %298 = arith.divf %296, %297 : vector<2x128xf32>
    %299 = vector.extract_strided_slice %292 {offsets = [0, 128], sizes = [2, 128], strides = [1, 1]} : vector<2x512xf32> to vector<2x128xf32>
    %300 = arith.negf %299 : vector<2x128xf32>
    %301 = math.exp %300 : vector<2x128xf32>
    %cst_126 = arith.constant 1.000000e+00 : f32
    %302 = vector.broadcast %cst_126 : f32 to vector<2x128xf32>
    %303 = arith.addf %302, %301 : vector<2x128xf32>
    %304 = arith.divf %302, %303 : vector<2x128xf32>
    %305 = vector.extract_strided_slice %292 {offsets = [0, 256], sizes = [2, 128], strides = [1, 1]} : vector<2x512xf32> to vector<2x128xf32>
    %306 = math.tanh %305 : vector<2x128xf32>
    %307 = vector.extract_strided_slice %292 {offsets = [0, 384], sizes = [2, 128], strides = [1, 1]} : vector<2x512xf32> to vector<2x128xf32>
    %308 = arith.negf %307 : vector<2x128xf32>
    %309 = math.exp %308 : vector<2x128xf32>
    %cst_127 = arith.constant 1.000000e+00 : f32
    %310 = vector.broadcast %cst_127 : f32 to vector<2x128xf32>
    %311 = arith.addf %310, %309 : vector<2x128xf32>
    %312 = arith.divf %310, %311 : vector<2x128xf32>
    %313 = arith.mulf %304, %275 : vector<2x128xf32>
    %314 = arith.mulf %298, %306 : vector<2x128xf32>
    %315 = arith.addf %313, %314 : vector<2x128xf32>
    %316 = math.tanh %315 : vector<2x128xf32>
    %317 = arith.mulf %312, %316 : vector<2x128xf32>
    %318 = arith.truncf %317 : vector<2x128xf32> to vector<2x128xbf16>
    %c0_128 = arith.constant 0 : index
    %c7_129 = arith.constant 7 : index
    %c0_130 = arith.constant 0 : index
    %319 = vector.load %arg7[%c0_128, %c7_129, %c0_130] : memref<2x8x128xbf16, #tpu.memory_space<vmem>>, vector<2x1x128xbf16>
    %320 = vector.shape_cast %319 : vector<2x1x128xbf16> to vector<2x128xbf16>
    %321 = vector.shape_cast %318 : vector<2x128xbf16> to vector<2x1x128xbf16>
    tpu.vector_store %arg7[%c0_128, %c7_129, %c0_130], %321 {strides = array<i32>} : memref<2x8x128xbf16, #tpu.memory_space<vmem>>, vector<2x1x128xbf16>,
    %c0_131 = arith.constant 0 : index
    %c0_132 = arith.constant 0 : index
    %322 = vector.load %arg8[%c0_131, %c0_132] : memref<2x128xf32, #tpu.memory_space<vmem>>, vector<2x128xf32>
    tpu.vector_store %arg8[%c0_131, %c0_132], %317 {strides = array<i32>} : memref<2x128xf32, #tpu.memory_space<vmem>>, vector<2x128xf32>,
    %c0_133 = arith.constant 0 : index
    %c0_134 = arith.constant 0 : index
    %323 = vector.load %arg9[%c0_133, %c0_134] : memref<2x128xf32, #tpu.memory_space<vmem>>, vector<2x128xf32>
    tpu.vector_store %arg9[%c0_133, %c0_134], %315 {strides = array<i32>} : memref<2x128xf32, #tpu.memory_space<vmem>>, vector<2x128xf32>,
    return
  }
  func.func @transform_0(%arg0: i32) -> (i32, i32, i32) {
    %c0_i32 = arith.constant 0 : i32
    %c0_i32_0 = arith.constant 0 : i32
    %c0_i32_1 = arith.constant 0 : i32
    return %c0_i32, %arg0, %c0_i32_0 : i32, i32, i32
  }
  func.func @transform_1(%arg0: i32) -> (i32, i32) {
    %c0_i32 = arith.constant 0 : i32
    %c0_i32_0 = arith.constant 0 : i32
    %c0_i32_1 = arith.constant 0 : i32
    return %c0_i32, %c0_i32_0 : i32, i32
  }
  func.func @transform_2(%arg0: i32) -> (i32, i32) {
    %c0_i32 = arith.constant 0 : i32
    %c0_i32_0 = arith.constant 0 : i32
    %c0_i32_1 = arith.constant 0 : i32
    return %c0_i32, %c0_i32_0 : i32, i32
  }
  func.func @transform_3(%arg0: i32) -> (i32, i32) {
    %c0_i32 = arith.constant 0 : i32
    %c0_i32_0 = arith.constant 0 : i32
    %c0_i32_1 = arith.constant 0 : i32
    return %c0_i32, %c0_i32_0 : i32, i32
  }
  func.func @transform_4(%arg0: i32) -> (i32, i32) {
    %c0_i32 = arith.constant 0 : i32
    %c0_i32_0 = arith.constant 0 : i32
    return %arg0, %c0_i32 : i32, i32
  }
  func.func @transform_5(%arg0: i32) -> (i32, i32) {
    %c0_i32 = arith.constant 0 : i32
    %c0_i32_0 = arith.constant 0 : i32
    return %arg0, %c0_i32 : i32, i32
  }
  func.func @transform_6(%arg0: i32) -> (i32, i32, i32) {
    %c0_i32 = arith.constant 0 : i32
    %c0_i32_0 = arith.constant 0 : i32
    %c0_i32_1 = arith.constant 0 : i32
    return %arg0, %c0_i32, %c0_i32_0 : i32, i32, i32
  }
  func.func @transform_7(%arg0: i32) -> (i32, i32) {
    %c0_i32 = arith.constant 0 : i32
    %c0_i32_0 = arith.constant 0 : i32
    return %arg0, %c0_i32 : i32, i32
  }
  func.func @transform_8(%arg0: i32) -> (i32, i32) {
    %c0_i32 = arith.constant 0 : i32
    %c0_i32_0 = arith.constant 0 : i32
    return %arg0, %c0_i32 : i32, i32
  }
}

</mosaic_0001>

<llo_original>
// kernel: tpu_custom_call.1
$region0: #{tpu_custom_call.1}
  #allocation0 [shape = 'u32[]', space=smem, size = 0x4, offset = 0x4, fixed_abs, tag = 'smem constant byte address 0x4 - core index']
  #allocation1 [shape = 'u32[144,128]{1,0:T(1,128)}', space=vmem, size = 0x12000, scoped, tag = 'internal scratch']
  %s0 = inlined_call_operand.hbm [shape: bf16[8,2,32], index: 0, kind: input, shape index: {}]
  %s1 = inlined_call_operand.hbm [shape: bf16[32,512], index: 1, kind: input, shape index: {}]
  %s2 = inlined_call_operand.hbm [shape: f32[1,512], index: 2, kind: input, shape index: {}]
  %s3 = inlined_call_operand.hbm [shape: bf16[128,512], index: 3, kind: input, shape index: {}]
  %s4 = inlined_call_operand.vmem [shape: f32[2,128], index: 4, kind: input, shape index: {}]
  %s5 = inlined_call_operand.vmem [shape: f32[2,128], index: 5, kind: input, shape index: {}]
  %s6 = inlined_call_operand.hbm [shape: bf16[2,8,128], index: 6, kind: output, shape index: {0}]
  %s7 = inlined_call_operand.hbm [shape: f32[2,128], index: 7, kind: output, shape index: {1}]
  %s8 = inlined_call_operand.hbm [shape: f32[2,128], index: 8, kind: output, shape index: {2}]
  %9 = xla_tuple %s6, %s7, %s8
  %s10 = sld [smem:[#allocation0]]
  $region66: #{tpu_custom_call.1} parent=0
    _
  %s12 = ssub.s32 1, %s10
  %s13 = scalar_select 0, %s12, %s10
  $region1: #{tpu_custom_call.1} parent=0
    #allocation2 [shape = 'u8[4096]{0}', space=vmem, size = 0x1000, scoped, tag = 'input window, operand 0, single buffered']
    #allocation3 [shape = 's32[1]{0}', space=sflag, size = 0x4, scoped, tag = 'scoped memory for tpu_custom_call.1']
    #allocation4 [shape = 's32[1]{0}', space=sflag, size = 0x4, scoped, tag = 'scoped memory for tpu_custom_call.1']
    #allocation5 [shape = 'u8[32768]{0}', space=vmem, size = 0x8000, scoped, tag = 'input window, operand 1, single buffered']
    #allocation6 [shape = 's32[1]{0}', space=sflag, size = 0x4, scoped, tag = 'scoped memory for tpu_custom_call.1']
    #allocation7 [shape = 'u8[2048]{0}', space=vmem, size = 0x800, scoped, tag = 'input window, operand 2, single buffered']
    #allocation8 [shape = 'u8[131072]{0}', space=vmem, size = 0x20000, scoped, tag = 'input window, operand 3, single buffered']
    #allocation9 [shape = 's32[1]{0}', space=sflag, size = 0x4, scoped, tag = 'scoped memory for tpu_custom_call.1']
    #allocation10 [shape = 'u8[4096]{0}', space=vmem, size = 0x1000, scoped, tag = 'output window, operand 0, single buffered']
    #allocation11 [shape = 'u8[1024]{0}', space=vmem, size = 0x400, scoped, tag = 'output window, operand 1, single buffered']
    #allocation12 [shape = 's32[1]{0}', space=sflag, size = 0x4, scoped, tag = 'scoped memory for tpu_custom_call.1']
    #allocation13 [shape = 'u8[1024]{0}', space=vmem, size = 0x400, scoped, tag = 'output window, operand 2, single buffered']
    %14 = vsyncpa [#allocation3], 0
    %15 = vsyncpa [#allocation6], 0
    %16 = vsyncpa [#allocation9], 0
    %17 = vsyncpa [#allocation4], 0
    %18 = vsyncpa [#allocation12], 0
    // Predicated region
    $region2: #{tpu_custom_call.1} parent=1 // pred_check
      _
    $region3: #{tpu_custom_call.1} parent=1 // pred_check_branch
      %20 = sbr.rel (0) target = $region5
    $region4: #{tpu_custom_call.1} parent=1 // pred_region
      %s22 = ssub.s32 128, 128
      %23 = vsyncadd [#allocation3], %s22
      %s24 = sshll.u32 [#allocation2], 4
      %s25 = int_to_ptr.vmem [resolvable:$true] %s24
      %30 = dma.hbm_to_vmem [thread:$0]  %s0, 128, %s25, [#allocation3], 16, 16, 1
    $region5: #{tpu_custom_call.1} parent=1 // pred_fallthru
      _
    // Predicated region
    $region6: #{tpu_custom_call.1} parent=1 // pred_check
      _
    $region7: #{tpu_custom_call.1} parent=1 // pred_check_branch
      %32 = sbr.rel (0) target = $region9
    $region8: #{tpu_custom_call.1} parent=1 // pred_region
      %s34 = ssub.s32 1024, 1024
      %35 = vsyncadd [#allocation6], %s34
      %s36 = sshll.u32 [#allocation5], 4
      %s37 = int_to_ptr.vmem [resolvable:$true] %s36
      %42 = dma.hbm_to_vmem [thread:$0]  %s1, 1024, %s37, [#allocation6], 256, 256, 16
    $region9: #{tpu_custom_call.1} parent=1 // pred_fallthru
      _
    // Predicated region
    $region10: #{tpu_custom_call.1} parent=1 // pred_check
      _
    $region11: #{tpu_custom_call.1} parent=1 // pred_check_branch
      %44 = sbr.rel (0) target = $region13
    $region12: #{tpu_custom_call.1} parent=1 // pred_region
      %s46 = ssub.s32 64, 64
      %47 = vsyncadd [#allocation6], %s46
      %s49 = sshll.u32 [#allocation7], 4
      %s50 = int_to_ptr.vmem [resolvable:$true] %s49
      %52 = dma.hbm_to_vmem [thread:$0]  %s2, 64, %s50, [#allocation6]
    $region13: #{tpu_custom_call.1} parent=1 // pred_fallthru
      _
    // Predicated region
    $region14: #{tpu_custom_call.1} parent=1 // pred_check
      _
    $region15: #{tpu_custom_call.1} parent=1 // pred_check_branch
      %54 = sbr.rel (0) target = $region17
    $region16: #{tpu_custom_call.1} parent=1 // pred_region
      %s56 = ssub.s32 4096, 4096
      %57 = vsyncadd [#allocation9], %s56
      %s58 = sshll.u32 [#allocation8], 4
      %s59 = int_to_ptr.vmem [resolvable:$true] %s58
      %64 = dma.hbm_to_vmem [thread:$0]  %s3, 4096, %s59, [#allocation9], 256, 256, 16
    $region17: #{tpu_custom_call.1} parent=1 // pred_fallthru
      _
    // Predicated region
    $region18: #{tpu_custom_call.1} parent=1 // pred_check
      _
    $region19: #{tpu_custom_call.1} parent=1 // pred_check_branch
      %66 = sbr.rel (0) target = $region21
    $region20: #{tpu_custom_call.1} parent=1 // pred_region
      _
    $region21: #{tpu_custom_call.1} parent=1 // pred_fallthru
      _
    // Predicated region
    $region22: #{tpu_custom_call.1} parent=1 // pred_check
      _
    $region23: #{tpu_custom_call.1} parent=1 // pred_check_branch
      %68 = sbr.rel (0) target = $region25
    $region24: #{tpu_custom_call.1} parent=1 // pred_region
      _
    $region25: #{tpu_custom_call.1} parent=1 // pred_fallthru
      _
    // Predicated region
    $region26: #{tpu_custom_call.1} parent=1 // pred_check
      _
    $region27: #{tpu_custom_call.1} parent=1 // pred_check_branch
      %70 = sbr.rel (0) target = $region29
    $region28: #{tpu_custom_call.1} parent=1 // pred_region
      %71 = dma.done [#allocation3], 128
    $region29: #{tpu_custom_call.1} parent=1 // pred_fallthru
      _
    // Predicated region
    $region30: #{tpu_custom_call.1} parent=1 // pred_check
      _
    $region31: #{tpu_custom_call.1} parent=1 // pred_check_branch
      %73 = sbr.rel (0) target = $region33
    $region32: #{tpu_custom_call.1} parent=1 // pred_region
      %74 = dma.done [#allocation6], 1024
    $region33: #{tpu_custom_call.1} parent=1 // pred_fallthru
      _
    // Predicated region
    $region34: #{tpu_custom_call.1} parent=1 // pred_check
      _
    $region35: #{tpu_custom_call.1} parent=1 // pred_check_branch
      %76 = sbr.rel (0) target = $region37
    $region36: #{tpu_custom_call.1} parent=1 // pred_region
      %77 = dma.done [#allocation6], 64
    $region37: #{tpu_custom_call.1} parent=1 // pred_fallthru
      _
    // Predicated region
    $region38: #{tpu_custom_call.1} parent=1 // pred_check
      _
    $region39: #{tpu_custom_call.1} parent=1 // pred_check_branch
      %79 = sbr.rel (0) target = $region41
    $region40: #{tpu_custom_call.1} parent=1 // pred_region
      %80 = dma.done [#allocation9], 4096
    $region41: #{tpu_custom_call.1} parent=1 // pred_fallthru
      _
    %v82 = vld [vmem:[%s4] sm:$0x3]
    %v83 = vld [vmem:[%s5] sm:$0x3]
    %v84 = vld [vmem:[#allocation2] sm:$0x1]
    %v85 = vld [vmem:[#allocation5] sm:$0xff]
    %v86 = vld [vmem:[#allocation5 + $0x8] sm:$0xff]
    %v87 = vld [vmem:[#allocation5 + $0x10] sm:$0xff]
    %v88 = vld [vmem:[#allocation5 + $0x18] sm:$0xff]
    %v89 = vld [vmem:[#allocation5 + $0x20] sm:$0xff]
    %v90 = vld [vmem:[#allocation5 + $0x28] sm:$0xff]
    %v91 = vld [vmem:[#allocation5 + $0x30] sm:$0xff]
    %v92 = vld [vmem:[#allocation5 + $0x38] sm:$0xff]
    %v93 = vpack.c.bf16 %v82, %v82
    %v94 = vld [vmem:[#allocation8] sm:$0xff]
    %v95 = vld [vmem:[#allocation8 + $0x8] sm:$0xff]
    %v96 = vld [vmem:[#allocation8 + $0x10] sm:$0xff]
    %v97 = vld [vmem:[#allocation8 + $0x18] sm:$0xff]
    %v98 = vld [vmem:[#allocation8 + $0x20] sm:$0xff]
    %v99 = vld [vmem:[#allocation8 + $0x28] sm:$0xff]
    %v100 = vld [vmem:[#allocation8 + $0x30] sm:$0xff]
    %v101 = vld [vmem:[#allocation8 + $0x38] sm:$0xff]
    %v102 = vld [vmem:[#allocation8 + $0x40] sm:$0xff]
    %v103 = vld [vmem:[#allocation8 + $0x48] sm:$0xff]
    %v104 = vld [vmem:[#allocation8 + $0x50] sm:$0xff]
    %v105 = vld [vmem:[#allocation8 + $0x58] sm:$0xff]
    %v106 = vld [vmem:[#allocation8 + $0x60] sm:$0xff]
    %v107 = vld [vmem:[#allocation8 + $0x68] sm:$0xff]
    %v108 = vld [vmem:[#allocation8 + $0x70] sm:$0xff]
    %v109 = vld [vmem:[#allocation8 + $0x78] sm:$0xff]
    %v110 = vld [vmem:[#allocation8 + $0x80] sm:$0xff]
    %v111 = vld [vmem:[#allocation8 + $0x88] sm:$0xff]
    %v112 = vld [vmem:[#allocation8 + $0x90] sm:$0xff]
    %v113 = vld [vmem:[#allocation8 + $0x98] sm:$0xff]
    %v114 = vld [vmem:[#allocation8 + $0xa0] sm:$0xff]
    %v115 = vld [vmem:[#allocation8 + $0xa8] sm:$0xff]
    %v116 = vld [vmem:[#allocation8 + $0xb0] sm:$0xff]
    %v117 = vld [vmem:[#allocation8 + $0xb8] sm:$0xff]
    %v118 = vld [vmem:[#allocation8 + $0xc0] sm:$0xff]
    %v119 = vld [vmem:[#allocation8 + $0xc8] sm:$0xff]
    %v120 = vld [vmem:[#allocation8 + $0xd0] sm:$0xff]
    %v121 = vld [vmem:[#allocation8 + $0xd8] sm:$0xff]
    %v122 = vld [vmem:[#allocation8 + $0xe0] sm:$0xff]
    %v123 = vld [vmem:[#allocation8 + $0xe8] sm:$0xff]
    %v124 = vld [vmem:[#allocation8 + $0xf0] sm:$0xff]
    %v125 = vld [vmem:[#allocation8 + $0xf8] sm:$0xff]
    %v158 = vunpack.c.l.b16 %v94
    %v159 = vunpack.c.h.b16 %v94
    %v160 = vunpack.c.l.b16 %v95
    %v161 = vunpack.c.h.b16 %v95
    %v162 = vunpack.c.l.b16 %v96
    %v163 = vunpack.c.h.b16 %v96
    %v164 = vunpack.c.l.b16 %v97
    %v165 = vunpack.c.h.b16 %v97
    %v166 = vunpack.c.l.b16 %v98
    %v167 = vunpack.c.h.b16 %v98
    %v168 = vunpack.c.l.b16 %v99
    %v169 = vunpack.c.h.b16 %v99
    %v170 = vunpack.c.l.b16 %v100
    %v171 = vunpack.c.h.b16 %v100
    %v172 = vunpack.c.l.b16 %v101
    %v173 = vunpack.c.h.b16 %v101
    %v174 = vunpack.c.l.b16 %v102
    %v175 = vunpack.c.h.b16 %v102
    %v176 = vunpack.c.l.b16 %v103
    %v177 = vunpack.c.h.b16 %v103
    %v178 = vunpack.c.l.b16 %v104
    %v179 = vunpack.c.h.b16 %v104
    %v180 = vunpack.c.l.b16 %v105
    %v181 = vunpack.c.h.b16 %v105
    %v182 = vunpack.c.l.b16 %v106
    %v183 = vunpack.c.h.b16 %v106
    %v184 = vunpack.c.l.b16 %v107
    %v185 = vunpack.c.h.b16 %v107
    %v186 = vunpack.c.l.b16 %v108
    %v187 = vunpack.c.h.b16 %v108
    %v188 = vunpack.c.l.b16 %v109
    %v189 = vunpack.c.h.b16 %v109
    %v190 = vunpack.c.l.b16 %v110
    %v191 = vunpack.c.h.b16 %v110
    %v192 = vunpack.c.l.b16 %v111
    %v193 = vunpack.c.h.b16 %v111
    %v194 = vunpack.c.l.b16 %v112
    %v195 = vunpack.c.h.b16 %v112
    %v196 = vunpack.c.l.b16 %v113
    %v197 = vunpack.c.h.b16 %v113
    %v198 = vunpack.c.l.b16 %v114
    %v199 = vunpack.c.h.b16 %v114
    %v200 = vunpack.c.l.b16 %v115
    %v201 = vunpack.c.h.b16 %v115
    %v202 = vunpack.c.l.b16 %v116
    %v203 = vunpack.c.h.b16 %v116
    %v204 = vunpack.c.l.b16 %v117
    %v205 = vunpack.c.h.b16 %v117
    %v206 = vunpack.c.l.b16 %v118
    %v207 = vunpack.c.h.b16 %v118
    %v208 = vunpack.c.l.b16 %v119
    %v209 = vunpack.c.h.b16 %v119
    %v210 = vunpack.c.l.b16 %v120
    %v211 = vunpack.c.h.b16 %v120
    %v212 = vunpack.c.l.b16 %v121
    %v213 = vunpack.c.h.b16 %v121
    %v214 = vunpack.c.l.b16 %v122
    %v215 = vunpack.c.h.b16 %v122
    %v216 = vunpack.c.l.b16 %v123
    %v217 = vunpack.c.h.b16 %v123
    %v218 = vunpack.c.l.b16 %v124
    %v219 = vunpack.c.h.b16 %v124
    %v220 = vunpack.c.l.b16 %v125
    %v221 = vunpack.c.h.b16 %v125
    %v222 = vpack.c.b16 %v162, %v158
    %v223 = vpack.c.b16 %v163, %v159
    %v224 = vpack.c.b16 %v164, %v160
    %v225 = vpack.c.b16 %v165, %v161
    %v226 = vpack.c.b16 %v170, %v166
    %v227 = vpack.c.b16 %v171, %v167
    %v228 = vpack.c.b16 %v172, %v168
    %v229 = vpack.c.b16 %v173, %v169
    %v230 = vpack.c.b16 %v178, %v174
    %v231 = vpack.c.b16 %v179, %v175
    %v232 = vpack.c.b16 %v180, %v176
    %v233 = vpack.c.b16 %v181, %v177
    %v234 = vpack.c.b16 %v186, %v182
    %v235 = vpack.c.b16 %v187, %v183
    %v236 = vpack.c.b16 %v188, %v184
    %v237 = vpack.c.b16 %v189, %v185
    %v238 = vpack.c.b16 %v194, %v190
    %v239 = vpack.c.b16 %v195, %v191
    %v240 = vpack.c.b16 %v196, %v192
    %v241 = vpack.c.b16 %v197, %v193
    %v242 = vpack.c.b16 %v202, %v198
    %v243 = vpack.c.b16 %v203, %v199
    %v244 = vpack.c.b16 %v204, %v200
    %v245 = vpack.c.b16 %v205, %v201
    %v246 = vpack.c.b16 %v210, %v206
    %v247 = vpack.c.b16 %v211, %v207
    %v248 = vpack.c.b16 %v212, %v208
    %v249 = vpack.c.b16 %v213, %v209
    %v250 = vpack.c.b16 %v218, %v214
    %v251 = vpack.c.b16 %v219, %v215
    %v252 = vpack.c.b16 %v220, %v216
    %v253 = vpack.c.b16 %v221, %v217
    %286 = vmatprep.subr.bf16.mxu0 %v251
    %287 = vmatpush1.bf16.msra.mxu0 %v250
    %288 = vmatprep.subr.bf16.mxu0 %v247
    %289 = vmatpush1.bf16.msra.mxu0 %v246
    %290 = vmatprep.subr.bf16.mxu0 %v243
    %291 = vmatpush1.bf16.msra.mxu0 %v242
    %292 = vmatprep.subr.bf16.mxu0 %v239
    %293 = vmatpush1.bf16.msra.mxu0 %v238
    %294 = vmatprep.subr.bf16.mxu0 %v235
    %295 = vmatpush1.bf16.msra.mxu0 %v234
    %296 = vmatprep.subr.bf16.mxu0 %v231
    %297 = vmatpush1.bf16.msra.mxu0 %v230
    %298 = vmatprep.subr.bf16.mxu0 %v227
    %299 = vmatpush1.bf16.msra.mxu0 %v226
    %300 = vmatprep.subr.bf16.mxu0 %v223
    %301 = vmatpush1.bf16.msra.mxu0 %v222
    %302 = vmatprep.subr.bf16.mxu0 0
    %303 = vmatpush2.bf16.msra.mxu0 0
    %304 = vmatprep.subr.bf16.mxu0 0
    %305 = vmatpush2.bf16.msra.mxu0 0
    %306 = vmatprep.subr.bf16.mxu0 0
    %307 = vmatpush2.bf16.msra.mxu0 0
    %308 = vmatprep.subr.bf16.mxu0 0
    %309 = vmatpush2.bf16.msra.mxu0 0
    %310 = vmatprep.subr.bf16.mxu0 0
    %311 = vmatpush2.bf16.msra.mxu0 0
    %312 = vmatprep.subr.bf16.mxu0 0
    %313 = vmatpush2.bf16.msra.mxu0 0
    %314 = vmatprep.subr.bf16.mxu0 0
    %315 = vmatpush2.bf16.msra.mxu0 0
    %316 = vmatprep.subr.bf16.mxu0 0
    %317 = vmatpush2.bf16.msra.mxu0 0
    %318 = vmatprep.mubr.bf16.mxu0 0
    %319 = vmatmul.mubr.bf16.gmra.mxu0 %v93
    %v320 = vpop.f32.mrf.mxu0
    %v321 = vadd.f32 0.0, %v320
    %v322 = vpop.f32.mrf.mxu0
    %v323 = vadd.f32 0.0, %v322
    %v324 = vpop.f32.mrf.mxu0
    %v325 = vpop.f32.mrf.mxu0
    %326 = vdwg.mxu0
    %327 = vmatprep.subr.bf16.mxu0 %v253
    %328 = vmatpush1.bf16.msra.mxu0 %v252
    %329 = vmatprep.subr.bf16.mxu0 %v249
    %330 = vmatpush1.bf16.msra.mxu0 %v248
    %331 = vmatprep.subr.bf16.mxu0 %v245
    %332 = vmatpush1.bf16.msra.mxu0 %v244
    %333 = vmatprep.subr.bf16.mxu0 %v241
    %334 = vmatpush1.bf16.msra.mxu0 %v240
    %335 = vmatprep.subr.bf16.mxu0 %v237
    %336 = vmatpush1.bf16.msra.mxu0 %v236
    %337 = vmatprep.subr.bf16.mxu0 %v233
    %338 = vmatpush1.bf16.msra.mxu0 %v232
    %339 = vmatprep.subr.bf16.mxu0 %v229
    %340 = vmatpush1.bf16.msra.mxu0 %v228
    %341 = vmatprep.subr.bf16.mxu0 %v225
    %342 = vmatpush1.bf16.msra.mxu0 %v224
    %343 = vmatprep.subr.bf16.mxu0 0
    %344 = vmatpush2.bf16.msra.mxu0 0
    %345 = vmatprep.subr.bf16.mxu0 0
    %346 = vmatpush2.bf16.msra.mxu0 0
    %347 = vmatprep.subr.bf16.mxu0 0
    %348 = vmatpush2.bf16.msra.mxu0 0
    %349 = vmatprep.subr.bf16.mxu0 0
    %350 = vmatpush2.bf16.msra.mxu0 0
    %351 = vmatprep.subr.bf16.mxu0 0
    %352 = vmatpush2.bf16.msra.mxu0 0
    %353 = vmatprep.subr.bf16.mxu0 0
    %354 = vmatpush2.bf16.msra.mxu0 0
    %355 = vmatprep.subr.bf16.mxu0 0
    %356 = vmatpush2.bf16.msra.mxu0 0
    %357 = vmatprep.subr.bf16.mxu0 0
    %358 = vmatpush2.bf16.msra.mxu0 0
    %359 = vmatprep.mubr.bf16.mxu0 0
    %360 = vmatmul.mubr.bf16.gmra.mxu0 %v93
    %v361 = vpop.f32.mrf.mxu0
    %v362 = vadd.f32 0.0, %v361
    %v363 = vpop.f32.mrf.mxu0
    %v364 = vadd.f32 0.0, %v363
    %v365 = vpop.f32.mrf.mxu0
    %v366 = vpop.f32.mrf.mxu0
    %367 = vdwg.mxu0
    %v376 = vunpack.c.l.b16 %v85
    %v377 = vunpack.c.h.b16 %v85
    %v378 = vunpack.c.l.b16 %v86
    %v379 = vunpack.c.h.b16 %v86
    %v380 = vunpack.c.l.b16 %v87
    %v381 = vunpack.c.h.b16 %v87
    %v382 = vunpack.c.l.b16 %v88
    %v383 = vunpack.c.h.b16 %v88
    %v384 = vunpack.c.l.b16 %v89
    %v385 = vunpack.c.h.b16 %v89
    %v386 = vunpack.c.l.b16 %v90
    %v387 = vunpack.c.h.b16 %v90
    %v388 = vunpack.c.l.b16 %v91
    %v389 = vunpack.c.h.b16 %v91
    %v390 = vunpack.c.l.b16 %v92
    %v391 = vunpack.c.h.b16 %v92
    %v392 = vpack.c.b16 %v380, %v376
    %v393 = vpack.c.b16 %v381, %v377
    %v394 = vpack.c.b16 %v382, %v378
    %v395 = vpack.c.b16 %v383, %v379
    %v396 = vpack.c.b16 %v388, %v384
    %v397 = vpack.c.b16 %v389, %v385
    %v398 = vpack.c.b16 %v390, %v386
    %v399 = vpack.c.b16 %v391, %v387
    %vm408 = vcmask 261120
    %v410 = vsel %vm408, %v84, 0
    %412 = vmatprep.subr.bf16.mxu0 0
    %413 = vmatpush1.bf16.msra.mxu0 0
    %414 = vmatprep.subr.bf16.mxu0 0
    %415 = vmatpush1.bf16.msra.mxu0 0
    %416 = vmatprep.subr.bf16.mxu0 0
    %417 = vmatpush1.bf16.msra.mxu0 0
    %418 = vmatprep.subr.bf16.mxu0 0
    %419 = vmatpush1.bf16.msra.mxu0 0
    %420 = vmatprep.subr.bf16.mxu0 0
    %421 = vmatpush1.bf16.msra.mxu0 0
    %422 = vmatprep.subr.bf16.mxu0 0
    %423 = vmatpush1.bf16.msra.mxu0 0
    %424 = vmatprep.subr.bf16.mxu0 %v397
    %425 = vmatpush1.bf16.msra.mxu0 %v396
    %426 = vmatprep.subr.bf16.mxu0 %v393
    %427 = vmatpush1.bf16.msra.mxu0 %v392
    %428 = vmatprep.subr.bf16.mxu0 0
    %429 = vmatpush2.bf16.msra.mxu0 0
    %430 = vmatprep.subr.bf16.mxu0 0
    %431 = vmatpush2.bf16.msra.mxu0 0
    %432 = vmatprep.subr.bf16.mxu0 0
    %433 = vmatpush2.bf16.msra.mxu0 0
    %434 = vmatprep.subr.bf16.mxu0 0
    %435 = vmatpush2.bf16.msra.mxu0 0
    %436 = vmatprep.subr.bf16.mxu0 0
    %437 = vmatpush2.bf16.msra.mxu0 0
    %438 = vmatprep.subr.bf16.mxu0 0
    %439 = vmatpush2.bf16.msra.mxu0 0
    %440 = vmatprep.subr.bf16.mxu0 0
    %441 = vmatpush2.bf16.msra.mxu0 0
    %442 = vmatprep.subr.bf16.mxu0 0
    %443 = vmatpush2.bf16.msra.mxu0 0
    %444 = vmatprep.mubr.bf16.mxu0 0
    %445 = vmatmul.mubr.bf16.gmra.mxu0 %v410
    %v446 = vpop.f32.mrf.mxu0
    %v447 = vadd.f32 %v321, %v446
    %v448 = vpop.f32.mrf.mxu0
    %v449 = vadd.f32 %v323, %v448
    %v450 = vpop.f32.mrf.mxu0
    %v451 = vpop.f32.mrf.mxu0
    %452 = vdwg.mxu0
    %453 = vmatprep.subr.bf16.mxu0 0
    %454 = vmatpush1.bf16.msra.mxu0 0
    %455 = vmatprep.subr.bf16.mxu0 0
    %456 = vmatpush1.bf16.msra.mxu0 0
    %457 = vmatprep.subr.bf16.mxu0 0
    %458 = vmatpush1.bf16.msra.mxu0 0
    %459 = vmatprep.subr.bf16.mxu0 0
    %460 = vmatpush1.bf16.msra.mxu0 0
    %461 = vmatprep.subr.bf16.mxu0 0
    %462 = vmatpush1.bf16.msra.mxu0 0
    %463 = vmatprep.subr.bf16.mxu0 0
    %464 = vmatpush1.bf16.msra.mxu0 0
    %465 = vmatprep.subr.bf16.mxu0 %v399
    %466 = vmatpush1.bf16.msra.mxu0 %v398
    %467 = vmatprep.subr.bf16.mxu0 %v395
    %468 = vmatpush1.bf16.msra.mxu0 %v394
    %469 = vmatprep.subr.bf16.mxu0 0
    %470 = vmatpush2.bf16.msra.mxu0 0
    %471 = vmatprep.subr.bf16.mxu0 0
    %472 = vmatpush2.bf16.msra.mxu0 0
    %473 = vmatprep.subr.bf16.mxu0 0
    %474 = vmatpush2.bf16.msra.mxu0 0
    %475 = vmatprep.subr.bf16.mxu0 0
    %476 = vmatpush2.bf16.msra.mxu0 0
    %477 = vmatprep.subr.bf16.mxu0 0
    %478 = vmatpush2.bf16.msra.mxu0 0
    %479 = vmatprep.subr.bf16.mxu0 0
    %480 = vmatpush2.bf16.msra.mxu0 0
    %481 = vmatprep.subr.bf16.mxu0 0
    %482 = vmatpush2.bf16.msra.mxu0 0
    %483 = vmatprep.subr.bf16.mxu0 0
    %484 = vmatpush2.bf16.msra.mxu0 0
    %485 = vmatprep.mubr.bf16.mxu0 0
    %486 = vmatmul.mubr.bf16.gmra.mxu0 %v410
    %v487 = vpop.f32.mrf.mxu0
    %v488 = vadd.f32 %v362, %v487
    %v489 = vpop.f32.mrf.mxu0
    %v490 = vadd.f32 %v364, %v489
    %v491 = vpop.f32.mrf.mxu0
    %v492 = vpop.f32.mrf.mxu0
    %493 = vdwg.mxu0
    %v494 = vld [vmem:[#allocation7] sm:$0xf]
    %v496 = vlaneseq
    %v497 = vshrl.u32 %v496, 7
    %v498 = vsub.s32 0, %v497
    %v499 = vrot.slane %v494, %v498
    %v500 = vlaneseq
    %v501 = vshrl.u32 %v500, 7
    %v502 = vsub.s32 1, %v501
    %v503 = vrot.slane %v494, %v502
    %v504 = vlaneseq
    %v505 = vshrl.u32 %v504, 7
    %v506 = vsub.s32 2, %v505
    %v507 = vrot.slane %v494, %v506
    %v508 = vlaneseq
    %v509 = vshrl.u32 %v508, 7
    %v510 = vsub.s32 3, %v509
    %v511 = vrot.slane %v494, %v510
    %v516 = vadd.f32 %v447, %v499
    %v517 = vadd.f32 %v449, %v503
    %v518 = vadd.f32 %v488, %v507
    %v519 = vadd.f32 %v490, %v511
    %v520 = vxor.u32 %v516, 2147483648
    %v521 = vmul.f32 %v520, 1.442695
    %v522 = vpow.pop %v521
    %v523 = vadd.f32 %v522, 1.0
    %v524 = vrcp.pop %v523
    %v525 = vmul.f32 1.0, %v524
    %v526 = vxor.u32 %v517, 2147483648
    %v527 = vmul.f32 %v526, 1.442695
    %v528 = vpow.pop %v527
    %v529 = vadd.f32 %v528, 1.0
    %v530 = vrcp.pop %v529
    %v531 = vmul.f32 1.0, %v530
    %v532 = vtanh.pop %v518
    %v533 = vxor.u32 %v519, 2147483648
    %v534 = vmul.f32 %v533, 1.442695
    %v535 = vpow.pop %v534
    %v536 = vadd.f32 %v535, 1.0
    %v537 = vrcp.pop %v536
    %v538 = vmul.f32 1.0, %v537
    %v539 = vmul.f32 %v531, %v83
    %v540 = vmul.f32 %v525, %v532
    %v541 = vadd.f32 %v539, %v540
    %v542 = vtanh.pop %v541
    %v543 = vmul.f32 %v538, %v542
    %v544 = vpack.c.bf16 %v543, %v543
    %v547 = vunpack.c.l.s4 1966171168
    %v548 = vunpack.c.0.s8 %v547
    %v549 = vlaneseq
    %v550 = vshrl.u32 %v549, 7
    %v551 = vsub.s32 %v548, %v550
    %v552 = vrot.slane %v544, %v551
    %v554 = vunpack.c.l.s4 1966171168
    %v555 = vunpack.c.0.s8 %v554
    %v556 = vlaneseq
    %v557 = vshrl.u32 %v556, 7
    %v558 = vsub.s32 %v555, %v557
    %v559 = vrot.slane %v552, %v558
    %v560 = vunpack.i.l.s16 %v559
    %v561 = vunpack.i.h.s16 %v559
    %v562 = vpack.i.b16 %v560, %v560
    %v563 = vpack.i.b16 %v561, %v561
    %v565 = vunpack.c.l.s4 286326784
    %v566 = vunpack.c.0.s8 %v565
    %v567 = vlaneseq
    %v568 = vshrl.u32 %v567, 7
    %v569 = vsub.s32 %v566, %v568
    %v570 = vrot.slane %v562, %v569
    %v572 = vunpack.c.l.s4 286326784
    %v573 = vunpack.c.0.s8 %v572
    %v574 = vlaneseq
    %v575 = vshrl.u32 %v574, 7
    %v576 = vsub.s32 %v573, %v575
    %v577 = vrot.slane %v563, %v576
    %vm580 = vcmask 1040384
    %vm581 = vsmask.f32 256
    %vm582 = vmand %vm580, %vm581
    %v583 = vld [vmem:[#allocation10] sm:$0x1]
    %v584 = vsel %vm582, %v570, %v583
    %585 = vst [vmem:[#allocation10] sm:$0x1] %v584
    %v586 = vld [vmem:[#allocation10 + $0x4] sm:$0x1]
    %v587 = vsel %vm582, %v577, %v586
    %588 = vst [vmem:[#allocation10 + $0x4] sm:$0x1] %v587
    %s589 = scalar_lea.vmem [#allocation2], 1
    %v590 = vld [vmem:[%s589] sm:$0x1]
    %v591 = vld [vmem:[#allocation5] sm:$0xff]
    %v592 = vld [vmem:[#allocation5 + $0x8] sm:$0xff]
    %v593 = vld [vmem:[#allocation5 + $0x10] sm:$0xff]
    %v594 = vld [vmem:[#allocation5 + $0x18] sm:$0xff]
    %v595 = vld [vmem:[#allocation5 + $0x20] sm:$0xff]
    %v596 = vld [vmem:[#allocation5 + $0x28] sm:$0xff]
    %v597 = vld [vmem:[#allocation5 + $0x30] sm:$0xff]
    %v598 = vld [vmem:[#allocation5 + $0x38] sm:$0xff]
    %v599 = vld [vmem:[#allocation8] sm:$0xff]
    %v600 = vld [vmem:[#allocation8 + $0x8] sm:$0xff]
    %v601 = vld [vmem:[#allocation8 + $0x10] sm:$0xff]
    %v602 = vld [vmem:[#allocation8 + $0x18] sm:$0xff]
    %v603 = vld [vmem:[#allocation8 + $0x20] sm:$0xff]
    %v604 = vld [vmem:[#allocation8 + $0x28] sm:$0xff]
    %v605 = vld [vmem:[#allocation8 + $0x30] sm:$0xff]
    %v606 = vld [vmem:[#allocation8 + $0x38] sm:$0xff]
    %v607 = vld [vmem:[#allocation8 + $0x40] sm:$0xff]
    %v608 = vld [vmem:[#allocation8 + $0x48] sm:$0xff]
    %v609 = vld [vmem:[#allocation8 + $0x50] sm:$0xff]
    %v610 = vld [vmem:[#allocation8 + $0x58] sm:$0xff]
    %v611 = vld [vmem:[#allocation8 + $0x60] sm:$0xff]
    %v612 = vld [vmem:[#allocation8 + $0x68] sm:$0xff]
    %v613 = vld [vmem:[#allocation8 + $0x70] sm:$0xff]
    %v614 = vld [vmem:[#allocation8 + $0x78] sm:$0xff]
    %v615 = vld [vmem:[#allocation8 + $0x80] sm:$0xff]
    %v616 = vld [vmem:[#allocation8 + $0x88] sm:$0xff]
    %v617 = vld [vmem:[#allocation8 + $0x90] sm:$0xff]
    %v618 = vld [vmem:[#allocation8 + $0x98] sm:$0xff]
    %v619 = vld [vmem:[#allocation8 + $0xa0] sm:$0xff]
    %v620 = vld [vmem:[#allocation8 + $0xa8] sm:$0xff]
    %v621 = vld [vmem:[#allocation8 + $0xb0] sm:$0xff]
    %v622 = vld [vmem:[#allocation8 + $0xb8] sm:$0xff]
    %v623 = vld [vmem:[#allocation8 + $0xc0] sm:$0xff]
    %v624 = vld [vmem:[#allocation8 + $0xc8] sm:$0xff]
    %v625 = vld [vmem:[#allocation8 + $0xd0] sm:$0xff]
    %v626 = vld [vmem:[#allocation8 + $0xd8] sm:$0xff]
    %v627 = vld [vmem:[#allocation8 + $0xe0] sm:$0xff]
    %v628 = vld [vmem:[#allocation8 + $0xe8] sm:$0xff]
    %v629 = vld [vmem:[#allocation8 + $0xf0] sm:$0xff]
    %v630 = vld [vmem:[#allocation8 + $0xf8] sm:$0xff]
    %v663 = vunpack.c.l.b16 %v599
    %v664 = vunpack.c.h.b16 %v599
    %v665 = vunpack.c.l.b16 %v600
    %v666 = vunpack.c.h.b16 %v600
    %v667 = vunpack.c.l.b16 %v601
    %v668 = vunpack.c.h.b16 %v601
    %v669 = vunpack.c.l.b16 %v602
    %v670 = vunpack.c.h.b16 %v602
    %v671 = vunpack.c.l.b16 %v603
    %v672 = vunpack.c.h.b16 %v603
    %v673 = vunpack.c.l.b16 %v604
    %v674 = vunpack.c.h.b16 %v604
    %v675 = vunpack.c.l.b16 %v605
    %v676 = vunpack.c.h.b16 %v605
    %v677 = vunpack.c.l.b16 %v606
    %v678 = vunpack.c.h.b16 %v606
    %v679 = vunpack.c.l.b16 %v607
    %v680 = vunpack.c.h.b16 %v607
    %v681 = vunpack.c.l.b16 %v608
    %v682 = vunpack.c.h.b16 %v608
    %v683 = vunpack.c.l.b16 %v609
    %v684 = vunpack.c.h.b16 %v609
    %v685 = vunpack.c.l.b16 %v610
    %v686 = vunpack.c.h.b16 %v610
    %v687 = vunpack.c.l.b16 %v611
    %v688 = vunpack.c.h.b16 %v611
    %v689 = vunpack.c.l.b16 %v612
    %v690 = vunpack.c.h.b16 %v612
    %v691 = vunpack.c.l.b16 %v613
    %v692 = vunpack.c.h.b16 %v613
    %v693 = vunpack.c.l.b16 %v614
    %v694 = vunpack.c.h.b16 %v614
    %v695 = vunpack.c.l.b16 %v615
    %v696 = vunpack.c.h.b16 %v615
    %v697 = vunpack.c.l.b16 %v616
    %v698 = vunpack.c.h.b16 %v616
    %v699 = vunpack.c.l.b16 %v617
    %v700 = vunpack.c.h.b16 %v617
    %v701 = vunpack.c.l.b16 %v618
    %v702 = vunpack.c.h.b16 %v618
    %v703 = vunpack.c.l.b16 %v619
    %v704 = vunpack.c.h.b16 %v619
    %v705 = vunpack.c.l.b16 %v620
    %v706 = vunpack.c.h.b16 %v620
    %v707 = vunpack.c.l.b16 %v621
    %v708 = vunpack.c.h.b16 %v621
    %v709 = vunpack.c.l.b16 %v622
    %v710 = vunpack.c.h.b16 %v622
    %v711 = vunpack.c.l.b16 %v623
    %v712 = vunpack.c.h.b16 %v623
    %v713 = vunpack.c.l.b16 %v624
    %v714 = vunpack.c.h.b16 %v624
    %v715 = vunpack.c.l.b16 %v625
    %v716 = vunpack.c.h.b16 %v625
    %v717 = vunpack.c.l.b16 %v626
    %v718 = vunpack.c.h.b16 %v626
    %v719 = vunpack.c.l.b16 %v627
    %v720 = vunpack.c.h.b16 %v627
    %v721 = vunpack.c.l.b16 %v628
    %v722 = vunpack.c.h.b16 %v628
    %v723 = vunpack.c.l.b16 %v629
    %v724 = vunpack.c.h.b16 %v629
    %v725 = vunpack.c.l.b16 %v630
    %v726 = vunpack.c.h.b16 %v630
    %v727 = vpack.c.b16 %v667, %v663
    %v728 = vpack.c.b16 %v668, %v664
    %v729 = vpack.c.b16 %v669, %v665
    %v730 = vpack.c.b16 %v670, %v666
    %v731 = vpack.c.b16 %v675, %v671
    %v732 = vpack.c.b16 %v676, %v672
    %v733 = vpack.c.b16 %v677, %v673
    %v734 = vpack.c.b16 %v678, %v674
    %v735 = vpack.c.b16 %v683, %v679
    %v736 = vpack.c.b16 %v684, %v680
    %v737 = vpack.c.b16 %v685, %v681
    %v738 = vpack.c.b16 %v686, %v682
    %v739 = vpack.c.b16 %v691, %v687
    %v740 = vpack.c.b16 %v692, %v688
    %v741 = vpack.c.b16 %v693, %v689
    %v742 = vpack.c.b16 %v694, %v690
    %v743 = vpack.c.b16 %v699, %v695
    %v744 = vpack.c.b16 %v700, %v696
    %v745 = vpack.c.b16 %v701, %v697
    %v746 = vpack.c.b16 %v702, %v698
    %v747 = vpack.c.b16 %v707, %v703
    %v748 = vpack.c.b16 %v708, %v704
    %v749 = vpack.c.b16 %v709, %v705
    %v750 = vpack.c.b16 %v710, %v706
    %v751 = vpack.c.b16 %v715, %v711
    %v752 = vpack.c.b16 %v716, %v712
    %v753 = vpack.c.b16 %v717, %v713
    %v754 = vpack.c.b16 %v718, %v714
    %v755 = vpack.c.b16 %v723, %v719
    %v756 = vpack.c.b16 %v724, %v720
    %v757 = vpack.c.b16 %v725, %v721
    %v758 = vpack.c.b16 %v726, %v722
    %791 = vmatprep.subr.bf16.mxu0 %v756
    %792 = vmatpush1.bf16.msra.mxu0 %v755
    %793 = vmatprep.subr.bf16.mxu0 %v752
    %794 = vmatpush1.bf16.msra.mxu0 %v751
    %795 = vmatprep.subr.bf16.mxu0 %v748
    %796 = vmatpush1.bf16.msra.mxu0 %v747
    %797 = vmatprep.subr.bf16.mxu0 %v744
    %798 = vmatpush1.bf16.msra.mxu0 %v743
    %799 = vmatprep.subr.bf16.mxu0 %v740
    %800 = vmatpush1.bf16.msra.mxu0 %v739
    %801 = vmatprep.subr.bf16.mxu0 %v736
    %802 = vmatpush1.bf16.msra.mxu0 %v735
    %803 = vmatprep.subr.bf16.mxu0 %v732
    %804 = vmatpush1.bf16.msra.mxu0 %v731
    %805 = vmatprep.subr.bf16.mxu0 %v728
    %806 = vmatpush1.bf16.msra.mxu0 %v727
    %807 = vmatprep.subr.bf16.mxu0 0
    %808 = vmatpush2.bf16.msra.mxu0 0
    %809 = vmatprep.subr.bf16.mxu0 0
    %810 = vmatpush2.bf16.msra.mxu0 0
    %811 = vmatprep.subr.bf16.mxu0 0
    %812 = vmatpush2.bf16.msra.mxu0 0
    %813 = vmatprep.subr.bf16.mxu0 0
    %814 = vmatpush2.bf16.msra.mxu0 0
    %815 = vmatprep.subr.bf16.mxu0 0
    %816 = vmatpush2.bf16.msra.mxu0 0
    %817 = vmatprep.subr.bf16.mxu0 0
    %818 = vmatpush2.bf16.msra.mxu0 0
    %819 = vmatprep.subr.bf16.mxu0 0
    %820 = vmatpush2.bf16.msra.mxu0 0
    %821 = vmatprep.subr.bf16.mxu0 0
    %822 = vmatpush2.bf16.msra.mxu0 0
    %823 = vmatprep.mubr.bf16.mxu0 0
    %824 = vmatmul.mubr.bf16.gmra.mxu0 %v544
    %v825 = vpop.f32.mrf.mxu0
    %v826 = vadd.f32 0.0, %v825
    %v827 = vpop.f32.mrf.mxu0
    %v828 = vadd.f32 0.0, %v827
    %v829 = vpop.f32.mrf.mxu0
    %v830 = vpop.f32.mrf.mxu0
    %831 = vdwg.mxu0
    %832 = vmatprep.subr.bf16.mxu0 %v758
    %833 = vmatpush1.bf16.msra.mxu0 %v757
    %834 = vmatprep.subr.bf16.mxu0 %v754
    %835 = vmatpush1.bf16.msra.mxu0 %v753
    %836 = vmatprep.subr.bf16.mxu0 %v750
    %837 = vmatpush1.bf16.msra.mxu0 %v749
    %838 = vmatprep.subr.bf16.mxu0 %v746
    %839 = vmatpush1.bf16.msra.mxu0 %v745
    %840 = vmatprep.subr.bf16.mxu0 %v742
    %841 = vmatpush1.bf16.msra.mxu0 %v741
    %842 = vmatprep.subr.bf16.mxu0 %v738
    %843 = vmatpush1.bf16.msra.mxu0 %v737
    %844 = vmatprep.subr.bf16.mxu0 %v734
    %845 = vmatpush1.bf16.msra.mxu0 %v733
    %846 = vmatprep.subr.bf16.mxu0 %v730
    %847 = vmatpush1.bf16.msra.mxu0 %v729
    %848 = vmatprep.subr.bf16.mxu0 0
    %849 = vmatpush2.bf16.msra.mxu0 0
    %850 = vmatprep.subr.bf16.mxu0 0
    %851 = vmatpush2.bf16.msra.mxu0 0
    %852 = vmatprep.subr.bf16.mxu0 0
    %853 = vmatpush2.bf16.msra.mxu0 0
    %854 = vmatprep.subr.bf16.mxu0 0
    %855 = vmatpush2.bf16.msra.mxu0 0
    %856 = vmatprep.subr.bf16.mxu0 0
    %857 = vmatpush2.bf16.msra.mxu0 0
    %858 = vmatprep.subr.bf16.mxu0 0
    %859 = vmatpush2.bf16.msra.mxu0 0
    %860 = vmatprep.subr.bf16.mxu0 0
    %861 = vmatpush2.bf16.msra.mxu0 0
    %862 = vmatprep.subr.bf16.mxu0 0
    %863 = vmatpush2.bf16.msra.mxu0 0
    %864 = vmatprep.mubr.bf16.mxu0 0
    %865 = vmatmul.mubr.bf16.gmra.mxu0 %v544
    %v866 = vpop.f32.mrf.mxu0
    %v867 = vadd.f32 0.0, %v866
    %v868 = vpop.f32.mrf.mxu0
    %v869 = vadd.f32 0.0, %v868
    %v870 = vpop.f32.mrf.mxu0
    %v871 = vpop.f32.mrf.mxu0
    %872 = vdwg.mxu0
    %v881 = vunpack.c.l.b16 %v591
    %v882 = vunpack.c.h.b16 %v591
    %v883 = vunpack.c.l.b16 %v592
    %v884 = vunpack.c.h.b16 %v592
    %v885 = vunpack.c.l.b16 %v593
    %v886 = vunpack.c.h.b16 %v593
    %v887 = vunpack.c.l.b16 %v594
    %v888 = vunpack.c.h.b16 %v594
    %v889 = vunpack.c.l.b16 %v595
    %v890 = vunpack.c.h.b16 %v595
    %v891 = vunpack.c.l.b16 %v596
    %v892 = vunpack.c.h.b16 %v596
    %v893 = vunpack.c.l.b16 %v597
    %v894 = vunpack.c.h.b16 %v597
    %v895 = vunpack.c.l.b16 %v598
    %v896 = vunpack.c.h.b16 %v598
    %v897 = vpack.c.b16 %v885, %v881
    %v898 = vpack.c.b16 %v886, %v882
    %v899 = vpack.c.b16 %v887, %v883
    %v900 = vpack.c.b16 %v888, %v884
    %v901 = vpack.c.b16 %v893, %v889
    %v902 = vpack.c.b16 %v894, %v890
    %v903 = vpack.c.b16 %v895, %v891
    %v904 = vpack.c.b16 %v896, %v892
    %v914 = vsel %vm408, %v590, 0
    %916 = vmatprep.subr.bf16.mxu0 0
    %917 = vmatpush1.bf16.msra.mxu0 0
    %918 = vmatprep.subr.bf16.mxu0 0
    %919 = vmatpush1.bf16.msra.mxu0 0
    %920 = vmatprep.subr.bf16.mxu0 0
    %921 = vmatpush1.bf16.msra.mxu0 0
    %922 = vmatprep.subr.bf16.mxu0 0
    %923 = vmatpush1.bf16.msra.mxu0 0
    %924 = vmatprep.subr.bf16.mxu0 0
    %925 = vmatpush1.bf16.msra.mxu0 0
    %926 = vmatprep.subr.bf16.mxu0 0
    %927 = vmatpush1.bf16.msra.mxu0 0
    %928 = vmatprep.subr.bf16.mxu0 %v902
    %929 = vmatpush1.bf16.msra.mxu0 %v901
    %930 = vmatprep.subr.bf16.mxu0 %v898
    %931 = vmatpush1.bf16.msra.mxu0 %v897
    %932 = vmatprep.subr.bf16.mxu0 0
    %933 = vmatpush2.bf16.msra.mxu0 0
    %934 = vmatprep.subr.bf16.mxu0 0
    %935 = vmatpush2.bf16.msra.mxu0 0
    %936 = vmatprep.subr.bf16.mxu0 0
    %937 = vmatpush2.bf16.msra.mxu0 0
    %938 = vmatprep.subr.bf16.mxu0 0
    %939 = vmatpush2.bf16.msra.mxu0 0
    %940 = vmatprep.subr.bf16.mxu0 0
    %941 = vmatpush2.bf16.msra.mxu0 0
    %942 = vmatprep.subr.bf16.mxu0 0
    %943 = vmatpush2.bf16.msra.mxu0 0
    %944 = vmatprep.subr.bf16.mxu0 0
    %945 = vmatpush2.bf16.msra.mxu0 0
    %946 = vmatprep.subr.bf16.mxu0 0
    %947 = vmatpush2.bf16.msra.mxu0 0
    %948 = vmatprep.mubr.bf16.mxu0 0
    %949 = vmatmul.mubr.bf16.gmra.mxu0 %v914
    %v950 = vpop.f32.mrf.mxu0
    %v951 = vadd.f32 %v826, %v950
    %v952 = vpop.f32.mrf.mxu0
    %v953 = vadd.f32 %v828, %v952
    %v954 = vpop.f32.mrf.mxu0
    %v955 = vpop.f32.mrf.mxu0
    %956 = vdwg.mxu0
    %957 = vmatprep.subr.bf16.mxu0 0
    %958 = vmatpush1.bf16.msra.mxu0 0
    %959 = vmatprep.subr.bf16.mxu0 0
    %960 = vmatpush1.bf16.msra.mxu0 0
    %961 = vmatprep.subr.bf16.mxu0 0
    %962 = vmatpush1.bf16.msra.mxu0 0
    %963 = vmatprep.subr.bf16.mxu0 0
    %964 = vmatpush1.bf16.msra.mxu0 0
    %965 = vmatprep.subr.bf16.mxu0 0
    %966 = vmatpush1.bf16.msra.mxu0 0
    %967 = vmatprep.subr.bf16.mxu0 0
    %968 = vmatpush1.bf16.msra.mxu0 0
    %969 = vmatprep.subr.bf16.mxu0 %v904
    %970 = vmatpush1.bf16.msra.mxu0 %v903
    %971 = vmatprep.subr.bf16.mxu0 %v900
    %972 = vmatpush1.bf16.msra.mxu0 %v899
    %973 = vmatprep.subr.bf16.mxu0 0
    %974 = vmatpush2.bf16.msra.mxu0 0
    %975 = vmatprep.subr.bf16.mxu0 0
    %976 = vmatpush2.bf16.msra.mxu0 0
    %977 = vmatprep.subr.bf16.mxu0 0
    %978 = vmatpush2.bf16.msra.mxu0 0
    %979 = vmatprep.subr.bf16.mxu0 0
    %980 = vmatpush2.bf16.msra.mxu0 0
    %981 = vmatprep.subr.bf16.mxu0 0
    %982 = vmatpush2.bf16.msra.mxu0 0
    %983 = vmatprep.subr.bf16.mxu0 0
    %984 = vmatpush2.bf16.msra.mxu0 0
    %985 = vmatprep.subr.bf16.mxu0 0
    %986 = vmatpush2.bf16.msra.mxu0 0
    %987 = vmatprep.subr.bf16.mxu0 0
    %988 = vmatpush2.bf16.msra.mxu0 0
    %989 = vmatprep.mubr.bf16.mxu0 0
    %990 = vmatmul.mubr.bf16.gmra.mxu0 %v914
    %v991 = vpop.f32.mrf.mxu0
    %v992 = vadd.f32 %v867, %v991
    %v993 = vpop.f32.mrf.mxu0
    %v994 = vadd.f32 %v869, %v993
    %v995 = vpop.f32.mrf.mxu0
    %v996 = vpop.f32.mrf.mxu0
    %997 = vdwg.mxu0
    %v998 = vld [vmem:[#allocation7] sm:$0xf]
    %v1000 = vlaneseq
    %v1001 = vshrl.u32 %v1000, 7
    %v1002 = vsub.s32 0, %v1001
    %v1003 = vrot.slane %v998, %v1002
    %v1004 = vlaneseq
    %v1005 = vshrl.u32 %v1004, 7
    %v1006 = vsub.s32 1, %v1005
    %v1007 = vrot.slane %v998, %v1006
    %v1008 = vlaneseq
    %v1009 = vshrl.u32 %v1008, 7
    %v1010 = vsub.s32 2, %v1009
    %v1011 = vrot.slane %v998, %v1010
    %v1012 = vlaneseq
    %v1013 = vshrl.u32 %v1012, 7
    %v1014 = vsub.s32 3, %v1013
    %v1015 = vrot.slane %v998, %v1014
    %v1020 = vadd.f32 %v951, %v1003
    %v1021 = vadd.f32 %v953, %v1007
    %v1022 = vadd.f32 %v992, %v1011
    %v1023 = vadd.f32 %v994, %v1015
    %v1024 = vxor.u32 %v1020, 2147483648
    %v1025 = vmul.f32 %v1024, 1.442695
    %v1026 = vpow.pop %v1025
    %v1027 = vadd.f32 %v1026, 1.0
    %v1028 = vrcp.pop %v1027
    %v1029 = vmul.f32 1.0, %v1028
    %v1030 = vxor.u32 %v1021, 2147483648
    %v1031 = vmul.f32 %v1030, 1.442695
    %v1032 = vpow.pop %v1031
    %v1033 = vadd.f32 %v1032, 1.0
    %v1034 = vrcp.pop %v1033
    %v1035 = vmul.f32 1.0, %v1034
    %v1036 = vtanh.pop %v1022
    %v1037 = vxor.u32 %v1023, 2147483648
    %v1038 = vmul.f32 %v1037, 1.442695
    %v1039 = vpow.pop %v1038
    %v1040 = vadd.f32 %v1039, 1.0
    %v1041 = vrcp.pop %v1040
    %v1042 = vmul.f32 1.0, %v1041
    %v1043 = vmul.f32 %v1035, %v541
    %v1044 = vmul.f32 %v1029, %v1036
    %v1045 = vadd.f32 %v1043, %v1044
    %v1046 = vtanh.pop %v1045
    %v1047 = vmul.f32 %v1042, %v1046
    %v1048 = vpack.c.bf16 %v1047, %v1047
    %v1051 = vunpack.c.l.s4 1966171168
    %v1052 = vunpack.c.0.s8 %v1051
    %v1053 = vlaneseq
    %v1054 = vshrl.u32 %v1053, 7
    %v1055 = vsub.s32 %v1052, %v1054
    %v1056 = vrot.slane %v1048, %v1055
    %v1058 = vunpack.c.l.s4 1966171168
    %v1059 = vunpack.c.0.s8 %v1058
    %v1060 = vlaneseq
    %v1061 = vshrl.u32 %v1060, 7
    %v1062 = vsub.s32 %v1059, %v1061
    %v1063 = vrot.slane %v1056, %v1062
    %v1064 = vunpack.i.l.s16 %v1063
    %v1065 = vunpack.i.h.s16 %v1063
    %v1066 = vpack.i.b16 %v1064, %v1064
    %v1067 = vpack.i.b16 %v1065, %v1065
    %v1069 = vunpack.c.l.s4 286326784
    %v1070 = vunpack.c.0.s8 %v1069
    %v1071 = vlaneseq
    %v1072 = vshrl.u32 %v1071, 7
    %v1073 = vsub.s32 %v1070, %v1072
    %v1074 = vrot.slane %v1066, %v1073
    %v1076 = vunpack.c.l.s4 286326784
    %v1077 = vunpack.c.0.s8 %v1076
    %v1078 = vlaneseq
    %v1079 = vshrl.u32 %v1078, 7
    %v1080 = vsub.s32 %v1077, %v1079
    %v1081 = vrot.slane %v1067, %v1080
    %vm1084 = vsmask.f32 7938
    %vm1085 = vmand %vm580, %vm1084
    %v1086 = vld [vmem:[#allocation10] sm:$0x1]
    %v1087 = vsel %vm1085, %v1074, %v1086
    %1088 = vst [vmem:[#allocation10] sm:$0x1] %v1087
    %v1089 = vld [vmem:[#allocation10 + $0x4] sm:$0x1]
    %v1090 = vsel %vm1085, %v1081, %v1089
    %1091 = vst [vmem:[#allocation10 + $0x4] sm:$0x1] %v1090
    %s1092 = scalar_lea.vmem [#allocation2], 2
    %v1093 = vld [vmem:[%s1092] sm:$0x1]
    %v1094 = vld [vmem:[#allocation5] sm:$0xff]
    %v1095 = vld [vmem:[#allocation5 + $0x8] sm:$0xff]
    %v1096 = vld [vmem:[#allocation5 + $0x10] sm:$0xff]
    %v1097 = vld [vmem:[#allocation5 + $0x18] sm:$0xff]
    %v1098 = vld [vmem:[#allocation5 + $0x20] sm:$0xff]
    %v1099 = vld [vmem:[#allocation5 + $0x28] sm:$0xff]
    %v1100 = vld [vmem:[#allocation5 + $0x30] sm:$0xff]
    %v1101 = vld [vmem:[#allocation5 + $0x38] sm:$0xff]
    %v1102 = vld [vmem:[#allocation8] sm:$0xff]
    %v1103 = vld [vmem:[#allocation8 + $0x8] sm:$0xff]
    %v1104 = vld [vmem:[#allocation8 + $0x10] sm:$0xff]
    %v1105 = vld [vmem:[#allocation8 + $0x18] sm:$0xff]
    %v1106 = vld [vmem:[#allocation8 + $0x20] sm:$0xff]
    %v1107 = vld [vmem:[#allocation8 + $0x28] sm:$0xff]
    %v1108 = vld [vmem:[#allocation8 + $0x30] sm:$0xff]
    %v1109 = vld [vmem:[#allocation8 + $0x38] sm:$0xff]
    %v1110 = vld [vmem:[#allocation8 + $0x40] sm:$0xff]
    %v1111 = vld [vmem:[#allocation8 + $0x48] sm:$0xff]
    %v1112 = vld [vmem:[#allocation8 + $0x50] sm:$0xff]
    %v1113 = vld [vmem:[#allocation8 + $0x58] sm:$0xff]
    %v1114 = vld [vmem:[#allocation8 + $0x60] sm:$0xff]
    %v1115 = vld [vmem:[#allocation8 + $0x68] sm:$0xff]
    %v1116 = vld [vmem:[#allocation8 + $0x70] sm:$0xff]
    %v1117 = vld [vmem:[#allocation8 + $0x78] sm:$0xff]
    %v1118 = vld [vmem:[#allocation8 + $0x80] sm:$0xff]
    %v1119 = vld [vmem:[#allocation8 + $0x88] sm:$0xff]
    %v1120 = vld [vmem:[#allocation8 + $0x90] sm:$0xff]
    %v1121 = vld [vmem:[#allocation8 + $0x98] sm:$0xff]
    %v1122 = vld [vmem:[#allocation8 + $0xa0] sm:$0xff]
    %v1123 = vld [vmem:[#allocation8 + $0xa8] sm:$0xff]
    %v1124 = vld [vmem:[#allocation8 + $0xb0] sm:$0xff]
    %v1125 = vld [vmem:[#allocation8 + $0xb8] sm:$0xff]
    %v1126 = vld [vmem:[#allocation8 + $0xc0] sm:$0xff]
    %v1127 = vld [vmem:[#allocation8 + $0xc8] sm:$0xff]
    %v1128 = vld [vmem:[#allocation8 + $0xd0] sm:$0xff]
    %v1129 = vld [vmem:[#allocation8 + $0xd8] sm:$0xff]
    %v1130 = vld [vmem:[#allocation8 + $0xe0] sm:$0xff]
    %v1131 = vld [vmem:[#allocation8 + $0xe8] sm:$0xff]
    %v1132 = vld [vmem:[#allocation8 + $0xf0] sm:$0xff]
    %v1133 = vld [vmem:[#allocation8 + $0xf8] sm:$0xff]
    %v1166 = vunpack.c.l.b16 %v1102
    %v1167 = vunpack.c.h.b16 %v1102
    %v1168 = vunpack.c.l.b16 %v1103
    %v1169 = vunpack.c.h.b16 %v1103
    %v1170 = vunpack.c.l.b16 %v1104
    %v1171 = vunpack.c.h.b16 %v1104
    %v1172 = vunpack.c.l.b16 %v1105
    %v1173 = vunpack.c.h.b16 %v1105
    %v1174 = vunpack.c.l.b16 %v1106
    %v1175 = vunpack.c.h.b16 %v1106
    %v1176 = vunpack.c.l.b16 %v1107
    %v1177 = vunpack.c.h.b16 %v1107
    %v1178 = vunpack.c.l.b16 %v1108
    %v1179 = vunpack.c.h.b16 %v1108
    %v1180 = vunpack.c.l.b16 %v1109
    %v1181 = vunpack.c.h.b16 %v1109
    %v1182 = vunpack.c.l.b16 %v1110
    %v1183 = vunpack.c.h.b16 %v1110
    %v1184 = vunpack.c.l.b16 %v1111
    %v1185 = vunpack.c.h.b16 %v1111
    %v1186 = vunpack.c.l.b16 %v1112
    %v1187 = vunpack.c.h.b16 %v1112
    %v1188 = vunpack.c.l.b16 %v1113
    %v1189 = vunpack.c.h.b16 %v1113
    %v1190 = vunpack.c.l.b16 %v1114
    %v1191 = vunpack.c.h.b16 %v1114
    %v1192 = vunpack.c.l.b16 %v1115
    %v1193 = vunpack.c.h.b16 %v1115
    %v1194 = vunpack.c.l.b16 %v1116
    %v1195 = vunpack.c.h.b16 %v1116
    %v1196 = vunpack.c.l.b16 %v1117
    %v1197 = vunpack.c.h.b16 %v1117
    %v1198 = vunpack.c.l.b16 %v1118
    %v1199 = vunpack.c.h.b16 %v1118
    %v1200 = vunpack.c.l.b16 %v1119
    %v1201 = vunpack.c.h.b16 %v1119
    %v1202 = vunpack.c.l.b16 %v1120
    %v1203 = vunpack.c.h.b16 %v1120
    %v1204 = vunpack.c.l.b16 %v1121
    %v1205 = vunpack.c.h.b16 %v1121
    %v1206 = vunpack.c.l.b16 %v1122
    %v1207 = vunpack.c.h.b16 %v1122
    %v1208 = vunpack.c.l.b16 %v1123
    %v1209 = vunpack.c.h.b16 %v1123
    %v1210 = vunpack.c.l.b16 %v1124
    %v1211 = vunpack.c.h.b16 %v1124
    %v1212 = vunpack.c.l.b16 %v1125
    %v1213 = vunpack.c.h.b16 %v1125
    %v1214 = vunpack.c.l.b16 %v1126
    %v1215 = vunpack.c.h.b16 %v1126
    %v1216 = vunpack.c.l.b16 %v1127
    %v1217 = vunpack.c.h.b16 %v1127
    %v1218 = vunpack.c.l.b16 %v1128
    %v1219 = vunpack.c.h.b16 %v1128
    %v1220 = vunpack.c.l.b16 %v1129
    %v1221 = vunpack.c.h.b16 %v1129
    %v1222 = vunpack.c.l.b16 %v1130
    %v1223 = vunpack.c.h.b16 %v1130
    %v1224 = vunpack.c.l.b16 %v1131
    %v1225 = vunpack.c.h.b16 %v1131
    %v1226 = vunpack.c.l.b16 %v1132
    %v1227 = vunpack.c.h.b16 %v1132
    %v1228 = vunpack.c.l.b16 %v1133
    %v1229 = vunpack.c.h.b16 %v1133
    %v1230 = vpack.c.b16 %v1170, %v1166
    %v1231 = vpack.c.b16 %v1171, %v1167
    %v1232 = vpack.c.b16 %v1172, %v1168
    %v1233 = vpack.c.b16 %v1173, %v1169
    %v1234 = vpack.c.b16 %v1178, %v1174
    %v1235 = vpack.c.b16 %v1179, %v1175
    %v1236 = vpack.c.b16 %v1180, %v1176
    %v1237 = vpack.c.b16 %v1181, %v1177
    %v1238 = vpack.c.b16 %v1186, %v1182
    %v1239 = vpack.c.b16 %v1187, %v1183
    %v1240 = vpack.c.b16 %v1188, %v1184
    %v1241 = vpack.c.b16 %v1189, %v1185
    %v1242 = vpack.c.b16 %v1194, %v1190
    %v1243 = vpack.c.b16 %v1195, %v1191
    %v1244 = vpack.c.b16 %v1196, %v1192
    %v1245 = vpack.c.b16 %v1197, %v1193
    %v1246 = vpack.c.b16 %v1202, %v1198
    %v1247 = vpack.c.b16 %v1203, %v1199
    %v1248 = vpack.c.b16 %v1204, %v1200
    %v1249 = vpack.c.b16 %v1205, %v1201
    %v1250 = vpack.c.b16 %v1210, %v1206
    %v1251 = vpack.c.b16 %v1211, %v1207
    %v1252 = vpack.c.b16 %v1212, %v1208
    %v1253 = vpack.c.b16 %v1213, %v1209
    %v1254 = vpack.c.b16 %v1218, %v1214
    %v1255 = vpack.c.b16 %v1219, %v1215
    %v1256 = vpack.c.b16 %v1220, %v1216
    %v1257 = vpack.c.b16 %v1221, %v1217
    %v1258 = vpack.c.b16 %v1226, %v1222
    %v1259 = vpack.c.b16 %v1227, %v1223
    %v1260 = vpack.c.b16 %v1228, %v1224
    %v1261 = vpack.c.b16 %v1229, %v1225
    %1294 = vmatprep.subr.bf16.mxu0 %v1259
    %1295 = vmatpush1.bf16.msra.mxu0 %v1258
    %1296 = vmatprep.subr.bf16.mxu0 %v1255
    %1297 = vmatpush1.bf16.msra.mxu0 %v1254
    %1298 = vmatprep.subr.bf16.mxu0 %v1251
    %1299 = vmatpush1.bf16.msra.mxu0 %v1250
    %1300 = vmatprep.subr.bf16.mxu0 %v1247
    %1301 = vmatpush1.bf16.msra.mxu0 %v1246
    %1302 = vmatprep.subr.bf16.mxu0 %v1243
    %1303 = vmatpush1.bf16.msra.mxu0 %v1242
    %1304 = vmatprep.subr.bf16.mxu0 %v1239
    %1305 = vmatpush1.bf16.msra.mxu0 %v1238
    %1306 = vmatprep.subr.bf16.mxu0 %v1235
    %1307 = vmatpush1.bf16.msra.mxu0 %v1234
    %1308 = vmatprep.subr.bf16.mxu0 %v1231
    %1309 = vmatpush1.bf16.msra.mxu0 %v1230
    %1310 = vmatprep.subr.bf16.mxu0 0
    %1311 = vmatpush2.bf16.msra.mxu0 0
    %1312 = vmatprep.subr.bf16.mxu0 0
    %1313 = vmatpush2.bf16.msra.mxu0 0
    %1314 = vmatprep.subr.bf16.mxu0 0
    %1315 = vmatpush2.bf16.msra.mxu0 0
    %1316 = vmatprep.subr.bf16.mxu0 0
    %1317 = vmatpush2.bf16.msra.mxu0 0
    %1318 = vmatprep.subr.bf16.mxu0 0
    %1319 = vmatpush2.bf16.msra.mxu0 0
    %1320 = vmatprep.subr.bf16.mxu0 0
    %1321 = vmatpush2.bf16.msra.mxu0 0
    %1322 = vmatprep.subr.bf16.mxu0 0
    %1323 = vmatpush2.bf16.msra.mxu0 0
    %1324 = vmatprep.subr.bf16.mxu0 0
    %1325 = vmatpush2.bf16.msra.mxu0 0
    %1326 = vmatprep.mubr.bf16.mxu0 0
    %1327 = vmatmul.mubr.bf16.gmra.mxu0 %v1048
    %v1328 = vpop.f32.mrf.mxu0
    %v1329 = vadd.f32 0.0, %v1328
    %v1330 = vpop.f32.mrf.mxu0
    %v1331 = vadd.f32 0.0, %v1330
    %v1332 = vpop.f32.mrf.mxu0
    %v1333 = vpop.f32.mrf.mxu0
    %1334 = vdwg.mxu0
    %1335 = vmatprep.subr.bf16.mxu0 %v1261
    %1336 = vmatpush1.bf16.msra.mxu0 %v1260
    %1337 = vmatprep.subr.bf16.mxu0 %v1257
    %1338 = vmatpush1.bf16.msra.mxu0 %v1256
    %1339 = vmatprep.subr.bf16.mxu0 %v1253
    %1340 = vmatpush1.bf16.msra.mxu0 %v1252
    %1341 = vmatprep.subr.bf16.mxu0 %v1249
    %1342 = vmatpush1.bf16.msra.mxu0 %v1248
    %1343 = vmatprep.subr.bf16.mxu0 %v1245
    %1344 = vmatpush1.bf16.msra.mxu0 %v1244
    %1345 = vmatprep.subr.bf16.mxu0 %v1241
    %1346 = vmatpush1.bf16.msra.mxu0 %v1240
    %1347 = vmatprep.subr.bf16.mxu0 %v1237
    %1348 = vmatpush1.bf16.msra.mxu0 %v1236
    %1349 = vmatprep.subr.bf16.mxu0 %v1233
    %1350 = vmatpush1.bf16.msra.mxu0 %v1232
    %1351 = vmatprep.subr.bf16.mxu0 0
    %1352 = vmatpush2.bf16.msra.mxu0 0
    %1353 = vmatprep.subr.bf16.mxu0 0
    %1354 = vmatpush2.bf16.msra.mxu0 0
    %1355 = vmatprep.subr.bf16.mxu0 0
    %1356 = vmatpush2.bf16.msra.mxu0 0
    %1357 = vmatprep.subr.bf16.mxu0 0
    %1358 = vmatpush2.bf16.msra.mxu0 0
    %1359 = vmatprep.subr.bf16.mxu0 0
    %1360 = vmatpush2.bf16.msra.mxu0 0
    %1361 = vmatprep.subr.bf16.mxu0 0
    %1362 = vmatpush2.bf16.msra.mxu0 0
    %1363 = vmatprep.subr.bf16.mxu0 0
    %1364 = vmatpush2.bf16.msra.mxu0 0
    %1365 = vmatprep.subr.bf16.mxu0 0
    %1366 = vmatpush2.bf16.msra.mxu0 0
    %1367 = vmatprep.mubr.bf16.mxu0 0
    %1368 = vmatmul.mubr.bf16.gmra.mxu0 %v1048
    %v1369 = vpop.f32.mrf.mxu0
    %v1370 = vadd.f32 0.0, %v1369
    %v1371 = vpop.f32.mrf.mxu0
    %v1372 = vadd.f32 0.0, %v1371
    %v1373 = vpop.f32.mrf.mxu0
    %v1374 = vpop.f32.mrf.mxu0
    %1375 = vdwg.mxu0
    %v1384 = vunpack.c.l.b16 %v1094
    %v1385 = vunpack.c.h.b16 %v1094
    %v1386 = vunpack.c.l.b16 %v1095
    %v1387 = vunpack.c.h.b16 %v1095
    %v1388 = vunpack.c.l.b16 %v1096
    %v1389 = vunpack.c.h.b16 %v1096
    %v1390 = vunpack.c.l.b16 %v1097
    %v1391 = vunpack.c.h.b16 %v1097
    %v1392 = vunpack.c.l.b16 %v1098
    %v1393 = vunpack.c.h.b16 %v1098
    %v1394 = vunpack.c.l.b16 %v1099
    %v1395 = vunpack.c.h.b16 %v1099
    %v1396 = vunpack.c.l.b16 %v1100
    %v1397 = vunpack.c.h.b16 %v1100
    %v1398 = vunpack.c.l.b16 %v1101
    %v1399 = vunpack.c.h.b16 %v1101
    %v1400 = vpack.c.b16 %v1388, %v1384
    %v1401 = vpack.c.b16 %v1389, %v1385
    %v1402 = vpack.c.b16 %v1390, %v1386
    %v1403 = vpack.c.b16 %v1391, %v1387
    %v1404 = vpack.c.b16 %v1396, %v1392
    %v1405 = vpack.c.b16 %v1397, %v1393
    %v1406 = vpack.c.b16 %v1398, %v1394
    %v1407 = vpack.c.b16 %v1399, %v1395
    %v1417 = vsel %vm408, %v1093, 0
    %1419 = vmatprep.subr.bf16.mxu0 0
    %1420 = vmatpush1.bf16.msra.mxu0 0
    %1421 = vmatprep.subr.bf16.mxu0 0
    %1422 = vmatpush1.bf16.msra.mxu0 0
    %1423 = vmatprep.subr.bf16.mxu0 0
    %1424 = vmatpush1.bf16.msra.mxu0 0
    %1425 = vmatprep.subr.bf16.mxu0 0
    %1426 = vmatpush1.bf16.msra.mxu0 0
    %1427 = vmatprep.subr.bf16.mxu0 0
    %1428 = vmatpush1.bf16.msra.mxu0 0
    %1429 = vmatprep.subr.bf16.mxu0 0
    %1430 = vmatpush1.bf16.msra.mxu0 0
    %1431 = vmatprep.subr.bf16.mxu0 %v1405
    %1432 = vmatpush1.bf16.msra.mxu0 %v1404
    %1433 = vmatprep.subr.bf16.mxu0 %v1401
    %1434 = vmatpush1.bf16.msra.mxu0 %v1400
    %1435 = vmatprep.subr.bf16.mxu0 0
    %1436 = vmatpush2.bf16.msra.mxu0 0
    %1437 = vmatprep.subr.bf16.mxu0 0
    %1438 = vmatpush2.bf16.msra.mxu0 0
    %1439 = vmatprep.subr.bf16.mxu0 0
    %1440 = vmatpush2.bf16.msra.mxu0 0
    %1441 = vmatprep.subr.bf16.mxu0 0
    %1442 = vmatpush2.bf16.msra.mxu0 0
    %1443 = vmatprep.subr.bf16.mxu0 0
    %1444 = vmatpush2.bf16.msra.mxu0 0
    %1445 = vmatprep.subr.bf16.mxu0 0
    %1446 = vmatpush2.bf16.msra.mxu0 0
    %1447 = vmatprep.subr.bf16.mxu0 0
    %1448 = vmatpush2.bf16.msra.mxu0 0
    %1449 = vmatprep.subr.bf16.mxu0 0
    %1450 = vmatpush2.bf16.msra.mxu0 0
    %1451 = vmatprep.mubr.bf16.mxu0 0
    %1452 = vmatmul.mubr.bf16.gmra.mxu0 %v1417
    %v1453 = vpop.f32.mrf.mxu0
    %v1454 = vadd.f32 %v1329, %v1453
    %v1455 = vpop.f32.mrf.mxu0
    %v1456 = vadd.f32 %v1331, %v1455
    %v1457 = vpop.f32.mrf.mxu0
    %v1458 = vpop.f32.mrf.mxu0
    %1459 = vdwg.mxu0
    %1460 = vmatprep.subr.bf16.mxu0 0
    %1461 = vmatpush1.bf16.msra.mxu0 0
    %1462 = vmatprep.subr.bf16.mxu0 0
    %1463 = vmatpush1.bf16.msra.mxu0 0
    %1464 = vmatprep.subr.bf16.mxu0 0
    %1465 = vmatpush1.bf16.msra.mxu0 0
    %1466 = vmatprep.subr.bf16.mxu0 0
    %1467 = vmatpush1.bf16.msra.mxu0 0
    %1468 = vmatprep.subr.bf16.mxu0 0
    %1469 = vmatpush1.bf16.msra.mxu0 0
    %1470 = vmatprep.subr.bf16.mxu0 0
    %1471 = vmatpush1.bf16.msra.mxu0 0
    %1472 = vmatprep.subr.bf16.mxu0 %v1407
    %1473 = vmatpush1.bf16.msra.mxu0 %v1406
    %1474 = vmatprep.subr.bf16.mxu0 %v1403
    %1475 = vmatpush1.bf16.msra.mxu0 %v1402
    %1476 = vmatprep.subr.bf16.mxu0 0
    %1477 = vmatpush2.bf16.msra.mxu0 0
    %1478 = vmatprep.subr.bf16.mxu0 0
    %1479 = vmatpush2.bf16.msra.mxu0 0
    %1480 = vmatprep.subr.bf16.mxu0 0
    %1481 = vmatpush2.bf16.msra.mxu0 0
    %1482 = vmatprep.subr.bf16.mxu0 0
    %1483 = vmatpush2.bf16.msra.mxu0 0
    %1484 = vmatprep.subr.bf16.mxu0 0
    %1485 = vmatpush2.bf16.msra.mxu0 0
    %1486 = vmatprep.subr.bf16.mxu0 0
    %1487 = vmatpush2.bf16.msra.mxu0 0
    %1488 = vmatprep.subr.bf16.mxu0 0
    %1489 = vmatpush2.bf16.msra.mxu0 0
    %1490 = vmatprep.subr.bf16.mxu0 0
    %1491 = vmatpush2.bf16.msra.mxu0 0
    %1492 = vmatprep.mubr.bf16.mxu0 0
    %1493 = vmatmul.mubr.bf16.gmra.mxu0 %v1417
    %v1494 = vpop.f32.mrf.mxu0
    %v1495 = vadd.f32 %v1370, %v1494
    %v1496 = vpop.f32.mrf.mxu0
    %v1497 = vadd.f32 %v1372, %v1496
    %v1498 = vpop.f32.mrf.mxu0
    %v1499 = vpop.f32.mrf.mxu0
    %1500 = vdwg.mxu0
    %v1501 = vld [vmem:[#allocation7] sm:$0xf]
    %v1503 = vlaneseq
    %v1504 = vshrl.u32 %v1503, 7
    %v1505 = vsub.s32 0, %v1504
    %v1506 = vrot.slane %v1501, %v1505
    %v1507 = vlaneseq
    %v1508 = vshrl.u32 %v1507, 7
    %v1509 = vsub.s32 1, %v1508
    %v1510 = vrot.slane %v1501, %v1509
    %v1511 = vlaneseq
    %v1512 = vshrl.u32 %v1511, 7
    %v1513 = vsub.s32 2, %v1512
    %v1514 = vrot.slane %v1501, %v1513
    %v1515 = vlaneseq
    %v1516 = vshrl.u32 %v1515, 7
    %v1517 = vsub.s32 3, %v1516
    %v1518 = vrot.slane %v1501, %v1517
    %v1523 = vadd.f32 %v1454, %v1506
    %v1524 = vadd.f32 %v1456, %v1510
    %v1525 = vadd.f32 %v1495, %v1514
    %v1526 = vadd.f32 %v1497, %v1518
    %v1527 = vxor.u32 %v1523, 2147483648
    %v1528 = vmul.f32 %v1527, 1.442695
    %v1529 = vpow.pop %v1528
    %v1530 = vadd.f32 %v1529, 1.0
    %v1531 = vrcp.pop %v1530
    %v1532 = vmul.f32 1.0, %v1531
    %v1533 = vxor.u32 %v1524, 2147483648
    %v1534 = vmul.f32 %v1533, 1.442695
    %v1535 = vpow.pop %v1534
    %v1536 = vadd.f32 %v1535, 1.0
    %v1537 = vrcp.pop %v1536
    %v1538 = vmul.f32 1.0, %v1537
    %v1539 = vtanh.pop %v1525
    %v1540 = vxor.u32 %v1526, 2147483648
    %v1541 = vmul.f32 %v1540, 1.442695
    %v1542 = vpow.pop %v1541
    %v1543 = vadd.f32 %v1542, 1.0
    %v1544 = vrcp.pop %v1543
    %v1545 = vmul.f32 1.0, %v1544
    %v1546 = vmul.f32 %v1538, %v1045
    %v1547 = vmul.f32 %v1532, %v1539
    %v1548 = vadd.f32 %v1546, %v1547
    %v1549 = vtanh.pop %v1548
    %v1550 = vmul.f32 %v1545, %v1549
    %v1551 = vpack.c.bf16 %v1550, %v1550
    %v1554 = vunpack.c.l.s4 1966171168
    %v1555 = vunpack.c.0.s8 %v1554
    %v1556 = vlaneseq
    %v1557 = vshrl.u32 %v1556, 7
    %v1558 = vsub.s32 %v1555, %v1557
    %v1559 = vrot.slane %v1551, %v1558
    %v1561 = vunpack.c.l.s4 1966171168
    %v1562 = vunpack.c.0.s8 %v1561
    %v1563 = vlaneseq
    %v1564 = vshrl.u32 %v1563, 7
    %v1565 = vsub.s32 %v1562, %v1564
    %v1566 = vrot.slane %v1559, %v1565
    %v1567 = vunpack.i.l.s16 %v1566
    %v1568 = vunpack.i.h.s16 %v1566
    %v1569 = vpack.i.b16 %v1567, %v1567
    %v1570 = vpack.i.b16 %v1568, %v1568
    %v1572 = vunpack.c.l.s4 286326784
    %v1573 = vunpack.c.0.s8 %v1572
    %v1574 = vlaneseq
    %v1575 = vshrl.u32 %v1574, 7
    %v1576 = vsub.s32 %v1573, %v1575
    %v1577 = vrot.slane %v1569, %v1576
    %v1579 = vunpack.c.l.s4 286326784
    %v1580 = vunpack.c.0.s8 %v1579
    %v1581 = vlaneseq
    %v1582 = vshrl.u32 %v1581, 7
    %v1583 = vsub.s32 %v1580, %v1582
    %v1584 = vrot.slane %v1570, %v1583
    %vm1587 = vcmask 1041409
    %vm1588 = vsmask.f32 1280
    %vm1589 = vmand %vm1587, %vm1588
    %v1590 = vld [vmem:[#allocation10] sm:$0x2]
    %v1591 = vsel %vm1589, %v1577, %v1590
    %1592 = vst [vmem:[#allocation10] sm:$0x2] %v1591
    %v1593 = vld [vmem:[#allocation10 + $0x4] sm:$0x2]
    %v1594 = vsel %vm1589, %v1584, %v1593
    %1595 = vst [vmem:[#allocation10 + $0x4] sm:$0x2] %v1594
    %s1596 = scalar_lea.vmem [#allocation2], 3
    %v1597 = vld [vmem:[%s1596] sm:$0x1]
    %v1598 = vld [vmem:[#allocation5] sm:$0xff]
    %v1599 = vld [vmem:[#allocation5 + $0x8] sm:$0xff]
    %v1600 = vld [vmem:[#allocation5 + $0x10] sm:$0xff]
    %v1601 = vld [vmem:[#allocation5 + $0x18] sm:$0xff]
    %v1602 = vld [vmem:[#allocation5 + $0x20] sm:$0xff]
    %v1603 = vld [vmem:[#allocation5 + $0x28] sm:$0xff]
    %v1604 = vld [vmem:[#allocation5 + $0x30] sm:$0xff]
    %v1605 = vld [vmem:[#allocation5 + $0x38] sm:$0xff]
    %v1606 = vld [vmem:[#allocation8] sm:$0xff]
    %v1607 = vld [vmem:[#allocation8 + $0x8] sm:$0xff]
    %v1608 = vld [vmem:[#allocation8 + $0x10] sm:$0xff]
    %v1609 = vld [vmem:[#allocation8 + $0x18] sm:$0xff]
    %v1610 = vld [vmem:[#allocation8 + $0x20] sm:$0xff]
    %v1611 = vld [vmem:[#allocation8 + $0x28] sm:$0xff]
    %v1612 = vld [vmem:[#allocation8 + $0x30] sm:$0xff]
    %v1613 = vld [vmem:[#allocation8 + $0x38] sm:$0xff]
    %v1614 = vld [vmem:[#allocation8 + $0x40] sm:$0xff]
    %v1615 = vld [vmem:[#allocation8 + $0x48] sm:$0xff]
    %v1616 = vld [vmem:[#allocation8 + $0x50] sm:$0xff]
    %v1617 = vld [vmem:[#allocation8 + $0x58] sm:$0xff]
    %v1618 = vld [vmem:[#allocation8 + $0x60] sm:$0xff]
    %v1619 = vld [vmem:[#allocation8 + $0x68] sm:$0xff]
    %v1620 = vld [vmem:[#allocation8 + $0x70] sm:$0xff]
    %v1621 = vld [vmem:[#allocation8 + $0x78] sm:$0xff]
    %v1622 = vld [vmem:[#allocation8 + $0x80] sm:$0xff]
    %v1623 = vld [vmem:[#allocation8 + $0x88] sm:$0xff]
    %v1624 = vld [vmem:[#allocation8 + $0x90] sm:$0xff]
    %v1625 = vld [vmem:[#allocation8 + $0x98] sm:$0xff]
    %v1626 = vld [vmem:[#allocation8 + $0xa0] sm:$0xff]
    %v1627 = vld [vmem:[#allocation8 + $0xa8] sm:$0xff]
    %v1628 = vld [vmem:[#allocation8 + $0xb0] sm:$0xff]
    %v1629 = vld [vmem:[#allocation8 + $0xb8] sm:$0xff]
    %v1630 = vld [vmem:[#allocation8 + $0xc0] sm:$0xff]
    %v1631 = vld [vmem:[#allocation8 + $0xc8] sm:$0xff]
    %v1632 = vld [vmem:[#allocation8 + $0xd0] sm:$0xff]
    %v1633 = vld [vmem:[#allocation8 + $0xd8] sm:$0xff]
    %v1634 = vld [vmem:[#allocation8 + $0xe0] sm:$0xff]
    %v1635 = vld [vmem:[#allocation8 + $0xe8] sm:$0xff]
    %v1636 = vld [vmem:[#allocation8 + $0xf0] sm:$0xff]
    %v1637 = vld [vmem:[#allocation8 + $0xf8] sm:$0xff]
    %v1670 = vunpack.c.l.b16 %v1606
    %v1671 = vunpack.c.h.b16 %v1606
    %v1672 = vunpack.c.l.b16 %v1607
    %v1673 = vunpack.c.h.b16 %v1607
    %v1674 = vunpack.c.l.b16 %v1608
    %v1675 = vunpack.c.h.b16 %v1608
    %v1676 = vunpack.c.l.b16 %v1609
    %v1677 = vunpack.c.h.b16 %v1609
    %v1678 = vunpack.c.l.b16 %v1610
    %v1679 = vunpack.c.h.b16 %v1610
    %v1680 = vunpack.c.l.b16 %v1611
    %v1681 = vunpack.c.h.b16 %v1611
    %v1682 = vunpack.c.l.b16 %v1612
    %v1683 = vunpack.c.h.b16 %v1612
    %v1684 = vunpack.c.l.b16 %v1613
    %v1685 = vunpack.c.h.b16 %v1613
    %v1686 = vunpack.c.l.b16 %v1614
    %v1687 = vunpack.c.h.b16 %v1614
    %v1688 = vunpack.c.l.b16 %v1615
    %v1689 = vunpack.c.h.b16 %v1615
    %v1690 = vunpack.c.l.b16 %v1616
    %v1691 = vunpack.c.h.b16 %v1616
    %v1692 = vunpack.c.l.b16 %v1617
    %v1693 = vunpack.c.h.b16 %v1617
    %v1694 = vunpack.c.l.b16 %v1618
    %v1695 = vunpack.c.h.b16 %v1618
    %v1696 = vunpack.c.l.b16 %v1619
    %v1697 = vunpack.c.h.b16 %v1619
    %v1698 = vunpack.c.l.b16 %v1620
    %v1699 = vunpack.c.h.b16 %v1620
    %v1700 = vunpack.c.l.b16 %v1621
    %v1701 = vunpack.c.h.b16 %v1621
    %v1702 = vunpack.c.l.b16 %v1622
    %v1703 = vunpack.c.h.b16 %v1622
    %v1704 = vunpack.c.l.b16 %v1623
    %v1705 = vunpack.c.h.b16 %v1623
    %v1706 = vunpack.c.l.b16 %v1624
    %v1707 = vunpack.c.h.b16 %v1624
    %v1708 = vunpack.c.l.b16 %v1625
    %v1709 = vunpack.c.h.b16 %v1625
    %v1710 = vunpack.c.l.b16 %v1626
    %v1711 = vunpack.c.h.b16 %v1626
    %v1712 = vunpack.c.l.b16 %v1627
    %v1713 = vunpack.c.h.b16 %v1627
    %v1714 = vunpack.c.l.b16 %v1628
    %v1715 = vunpack.c.h.b16 %v1628
    %v1716 = vunpack.c.l.b16 %v1629
    %v1717 = vunpack.c.h.b16 %v1629
    %v1718 = vunpack.c.l.b16 %v1630
    %v1719 = vunpack.c.h.b16 %v1630
    %v1720 = vunpack.c.l.b16 %v1631
    %v1721 = vunpack.c.h.b16 %v1631
    %v1722 = vunpack.c.l.b16 %v1632
    %v1723 = vunpack.c.h.b16 %v1632
    %v1724 = vunpack.c.l.b16 %v1633
    %v1725 = vunpack.c.h.b16 %v1633
    %v1726 = vunpack.c.l.b16 %v1634
    %v1727 = vunpack.c.h.b16 %v1634
    %v1728 = vunpack.c.l.b16 %v1635
    %v1729 = vunpack.c.h.b16 %v1635
    %v1730 = vunpack.c.l.b16 %v1636
    %v1731 = vunpack.c.h.b16 %v1636
    %v1732 = vunpack.c.l.b16 %v1637
    %v1733 = vunpack.c.h.b16 %v1637
    %v1734 = vpack.c.b16 %v1674, %v1670
    %v1735 = vpack.c.b16 %v1675, %v1671
    %v1736 = vpack.c.b16 %v1676, %v1672
    %v1737 = vpack.c.b16 %v1677, %v1673
    %v1738 = vpack.c.b16 %v1682, %v1678
    %v1739 = vpack.c.b16 %v1683, %v1679
    %v1740 = vpack.c.b16 %v1684, %v1680
    %v1741 = vpack.c.b16 %v1685, %v1681
    %v1742 = vpack.c.b16 %v1690, %v1686
    %v1743 = vpack.c.b16 %v1691, %v1687
    %v1744 = vpack.c.b16 %v1692, %v1688
    %v1745 = vpack.c.b16 %v1693, %v1689
    %v1746 = vpack.c.b16 %v1698, %v1694
    %v1747 = vpack.c.b16 %v1699, %v1695
    %v1748 = vpack.c.b16 %v1700, %v1696
    %v1749 = vpack.c.b16 %v1701, %v1697
    %v1750 = vpack.c.b16 %v1706, %v1702
    %v1751 = vpack.c.b16 %v1707, %v1703
    %v1752 = vpack.c.b16 %v1708, %v1704
    %v1753 = vpack.c.b16 %v1709, %v1705
    %v1754 = vpack.c.b16 %v1714, %v1710
    %v1755 = vpack.c.b16 %v1715, %v1711
    %v1756 = vpack.c.b16 %v1716, %v1712
    %v1757 = vpack.c.b16 %v1717, %v1713
    %v1758 = vpack.c.b16 %v1722, %v1718
    %v1759 = vpack.c.b16 %v1723, %v1719
    %v1760 = vpack.c.b16 %v1724, %v1720
    %v1761 = vpack.c.b16 %v1725, %v1721
    %v1762 = vpack.c.b16 %v1730, %v1726
    %v1763 = vpack.c.b16 %v1731, %v1727
    %v1764 = vpack.c.b16 %v1732, %v1728
    %v1765 = vpack.c.b16 %v1733, %v1729
    %1798 = vmatprep.subr.bf16.mxu0 %v1763
    %1799 = vmatpush1.bf16.msra.mxu0 %v1762
    %1800 = vmatprep.subr.bf16.mxu0 %v1759
    %1801 = vmatpush1.bf16.msra.mxu0 %v1758
    %1802 = vmatprep.subr.bf16.mxu0 %v1755
    %1803 = vmatpush1.bf16.msra.mxu0 %v1754
    %1804 = vmatprep.subr.bf16.mxu0 %v1751
    %1805 = vmatpush1.bf16.msra.mxu0 %v1750
    %1806 = vmatprep.subr.bf16.mxu0 %v1747
    %1807 = vmatpush1.bf16.msra.mxu0 %v1746
    %1808 = vmatprep.subr.bf16.mxu0 %v1743
    %1809 = vmatpush1.bf16.msra.mxu0 %v1742
    %1810 = vmatprep.subr.bf16.mxu0 %v1739
    %1811 = vmatpush1.bf16.msra.mxu0 %v1738
    %1812 = vmatprep.subr.bf16.mxu0 %v1735
    %1813 = vmatpush1.bf16.msra.mxu0 %v1734
    %1814 = vmatprep.subr.bf16.mxu0 0
    %1815 = vmatpush2.bf16.msra.mxu0 0
    %1816 = vmatprep.subr.bf16.mxu0 0
    %1817 = vmatpush2.bf16.msra.mxu0 0
    %1818 = vmatprep.subr.bf16.mxu0 0
    %1819 = vmatpush2.bf16.msra.mxu0 0
    %1820 = vmatprep.subr.bf16.mxu0 0
    %1821 = vmatpush2.bf16.msra.mxu0 0
    %1822 = vmatprep.subr.bf16.mxu0 0
    %1823 = vmatpush2.bf16.msra.mxu0 0
    %1824 = vmatprep.subr.bf16.mxu0 0
    %1825 = vmatpush2.bf16.msra.mxu0 0
    %1826 = vmatprep.subr.bf16.mxu0 0
    %1827 = vmatpush2.bf16.msra.mxu0 0
    %1828 = vmatprep.subr.bf16.mxu0 0
    %1829 = vmatpush2.bf16.msra.mxu0 0
    %1830 = vmatprep.mubr.bf16.mxu0 0
    %1831 = vmatmul.mubr.bf16.gmra.mxu0 %v1551
    %v1832 = vpop.f32.mrf.mxu0
    %v1833 = vadd.f32 0.0, %v1832
    %v1834 = vpop.f32.mrf.mxu0
    %v1835 = vadd.f32 0.0, %v1834
    %v1836 = vpop.f32.mrf.mxu0
    %v1837 = vpop.f32.mrf.mxu0
    %1838 = vdwg.mxu0
    %1839 = vmatprep.subr.bf16.mxu0 %v1765
    %1840 = vmatpush1.bf16.msra.mxu0 %v1764
    %1841 = vmatprep.subr.bf16.mxu0 %v1761
    %1842 = vmatpush1.bf16.msra.mxu0 %v1760
    %1843 = vmatprep.subr.bf16.mxu0 %v1757
    %1844 = vmatpush1.bf16.msra.mxu0 %v1756
    %1845 = vmatprep.subr.bf16.mxu0 %v1753
    %1846 = vmatpush1.bf16.msra.mxu0 %v1752
    %1847 = vmatprep.subr.bf16.mxu0 %v1749
    %1848 = vmatpush1.bf16.msra.mxu0 %v1748
    %1849 = vmatprep.subr.bf16.mxu0 %v1745
    %1850 = vmatpush1.bf16.msra.mxu0 %v1744
    %1851 = vmatprep.subr.bf16.mxu0 %v1741
    %1852 = vmatpush1.bf16.msra.mxu0 %v1740
    %1853 = vmatprep.subr.bf16.mxu0 %v1737
    %1854 = vmatpush1.bf16.msra.mxu0 %v1736
    %1855 = vmatprep.subr.bf16.mxu0 0
    %1856 = vmatpush2.bf16.msra.mxu0 0
    %1857 = vmatprep.subr.bf16.mxu0 0
    %1858 = vmatpush2.bf16.msra.mxu0 0
    %1859 = vmatprep.subr.bf16.mxu0 0
    %1860 = vmatpush2.bf16.msra.mxu0 0
    %1861 = vmatprep.subr.bf16.mxu0 0
    %1862 = vmatpush2.bf16.msra.mxu0 0
    %1863 = vmatprep.subr.bf16.mxu0 0
    %1864 = vmatpush2.bf16.msra.mxu0 0
    %1865 = vmatprep.subr.bf16.mxu0 0
    %1866 = vmatpush2.bf16.msra.mxu0 0
    %1867 = vmatprep.subr.bf16.mxu0 0
    %1868 = vmatpush2.bf16.msra.mxu0 0
    %1869 = vmatprep.subr.bf16.mxu0 0
    %1870 = vmatpush2.bf16.msra.mxu0 0
    %1871 = vmatprep.mubr.bf16.mxu0 0
    %1872 = vmatmul.mubr.bf16.gmra.mxu0 %v1551
    %v1873 = vpop.f32.mrf.mxu0
    %v1874 = vadd.f32 0.0, %v1873
    %v1875 = vpop.f32.mrf.mxu0
    %v1876 = vadd.f32 0.0, %v1875
    %v1877 = vpop.f32.mrf.mxu0
    %v1878 = vpop.f32.mrf.mxu0
    %1879 = vdwg.mxu0
    %v1888 = vunpack.c.l.b16 %v1598
    %v1889 = vunpack.c.h.b16 %v1598
    %v1890 = vunpack.c.l.b16 %v1599
    %v1891 = vunpack.c.h.b16 %v1599
    %v1892 = vunpack.c.l.b16 %v1600
    %v1893 = vunpack.c.h.b16 %v1600
    %v1894 = vunpack.c.l.b16 %v1601
    %v1895 = vunpack.c.h.b16 %v1601
    %v1896 = vunpack.c.l.b16 %v1602
    %v1897 = vunpack.c.h.b16 %v1602
    %v1898 = vunpack.c.l.b16 %v1603
    %v1899 = vunpack.c.h.b16 %v1603
    %v1900 = vunpack.c.l.b16 %v1604
    %v1901 = vunpack.c.h.b16 %v1604
    %v1902 = vunpack.c.l.b16 %v1605
    %v1903 = vunpack.c.h.b16 %v1605
    %v1904 = vpack.c.b16 %v1892, %v1888
    %v1905 = vpack.c.b16 %v1893, %v1889
    %v1906 = vpack.c.b16 %v1894, %v1890
    %v1907 = vpack.c.b16 %v1895, %v1891
    %v1908 = vpack.c.b16 %v1900, %v1896
    %v1909 = vpack.c.b16 %v1901, %v1897
    %v1910 = vpack.c.b16 %v1902, %v1898
    %v1911 = vpack.c.b16 %v1903, %v1899
    %v1921 = vsel %vm408, %v1597, 0
    %1923 = vmatprep.subr.bf16.mxu0 0
    %1924 = vmatpush1.bf16.msra.mxu0 0
    %1925 = vmatprep.subr.bf16.mxu0 0
    %1926 = vmatpush1.bf16.msra.mxu0 0
    %1927 = vmatprep.subr.bf16.mxu0 0
    %1928 = vmatpush1.bf16.msra.mxu0 0
    %1929 = vmatprep.subr.bf16.mxu0 0
    %1930 = vmatpush1.bf16.msra.mxu0 0
    %1931 = vmatprep.subr.bf16.mxu0 0
    %1932 = vmatpush1.bf16.msra.mxu0 0
    %1933 = vmatprep.subr.bf16.mxu0 0
    %1934 = vmatpush1.bf16.msra.mxu0 0
    %1935 = vmatprep.subr.bf16.mxu0 %v1909
    %1936 = vmatpush1.bf16.msra.mxu0 %v1908
    %1937 = vmatprep.subr.bf16.mxu0 %v1905
    %1938 = vmatpush1.bf16.msra.mxu0 %v1904
    %1939 = vmatprep.subr.bf16.mxu0 0
    %1940 = vmatpush2.bf16.msra.mxu0 0
    %1941 = vmatprep.subr.bf16.mxu0 0
    %1942 = vmatpush2.bf16.msra.mxu0 0
    %1943 = vmatprep.subr.bf16.mxu0 0
    %1944 = vmatpush2.bf16.msra.mxu0 0
    %1945 = vmatprep.subr.bf16.mxu0 0
    %1946 = vmatpush2.bf16.msra.mxu0 0
    %1947 = vmatprep.subr.bf16.mxu0 0
    %1948 = vmatpush2.bf16.msra.mxu0 0
    %1949 = vmatprep.subr.bf16.mxu0 0
    %1950 = vmatpush2.bf16.msra.mxu0 0
    %1951 = vmatprep.subr.bf16.mxu0 0
    %1952 = vmatpush2.bf16.msra.mxu0 0
    %1953 = vmatprep.subr.bf16.mxu0 0
    %1954 = vmatpush2.bf16.msra.mxu0 0
    %1955 = vmatprep.mubr.bf16.mxu0 0
    %1956 = vmatmul.mubr.bf16.gmra.mxu0 %v1921
    %v1957 = vpop.f32.mrf.mxu0
    %v1958 = vadd.f32 %v1833, %v1957
    %v1959 = vpop.f32.mrf.mxu0
    %v1960 = vadd.f32 %v1835, %v1959
    %v1961 = vpop.f32.mrf.mxu0
    %v1962 = vpop.f32.mrf.mxu0
    %1963 = vdwg.mxu0
    %1964 = vmatprep.subr.bf16.mxu0 0
    %1965 = vmatpush1.bf16.msra.mxu0 0
    %1966 = vmatprep.subr.bf16.mxu0 0
    %1967 = vmatpush1.bf16.msra.mxu0 0
    %1968 = vmatprep.subr.bf16.mxu0 0
    %1969 = vmatpush1.bf16.msra.mxu0 0
    %1970 = vmatprep.subr.bf16.mxu0 0
    %1971 = vmatpush1.bf16.msra.mxu0 0
    %1972 = vmatprep.subr.bf16.mxu0 0
    %1973 = vmatpush1.bf16.msra.mxu0 0
    %1974 = vmatprep.subr.bf16.mxu0 0
    %1975 = vmatpush1.bf16.msra.mxu0 0
    %1976 = vmatprep.subr.bf16.mxu0 %v1911
    %1977 = vmatpush1.bf16.msra.mxu0 %v1910
    %1978 = vmatprep.subr.bf16.mxu0 %v1907
    %1979 = vmatpush1.bf16.msra.mxu0 %v1906
    %1980 = vmatprep.subr.bf16.mxu0 0
    %1981 = vmatpush2.bf16.msra.mxu0 0
    %1982 = vmatprep.subr.bf16.mxu0 0
    %1983 = vmatpush2.bf16.msra.mxu0 0
    %1984 = vmatprep.subr.bf16.mxu0 0
    %1985 = vmatpush2.bf16.msra.mxu0 0
    %1986 = vmatprep.subr.bf16.mxu0 0
    %1987 = vmatpush2.bf16.msra.mxu0 0
    %1988 = vmatprep.subr.bf16.mxu0 0
    %1989 = vmatpush2.bf16.msra.mxu0 0
    %1990 = vmatprep.subr.bf16.mxu0 0
    %1991 = vmatpush2.bf16.msra.mxu0 0
    %1992 = vmatprep.subr.bf16.mxu0 0
    %1993 = vmatpush2.bf16.msra.mxu0 0
    %1994 = vmatprep.subr.bf16.mxu0 0
    %1995 = vmatpush2.bf16.msra.mxu0 0
    %1996 = vmatprep.mubr.bf16.mxu0 0
    %1997 = vmatmul.mubr.bf16.gmra.mxu0 %v1921
    %v1998 = vpop.f32.mrf.mxu0
    %v1999 = vadd.f32 %v1874, %v1998
    %v2000 = vpop.f32.mrf.mxu0
    %v2001 = vadd.f32 %v1876, %v2000
    %v2002 = vpop.f32.mrf.mxu0
    %v2003 = vpop.f32.mrf.mxu0
    %2004 = vdwg.mxu0
    %v2005 = vld [vmem:[#allocation7] sm:$0xf]
    %v2007 = vlaneseq
    %v2008 = vshrl.u32 %v2007, 7
    %v2009 = vsub.s32 0, %v2008
    %v2010 = vrot.slane %v2005, %v2009
    %v2011 = vlaneseq
    %v2012 = vshrl.u32 %v2011, 7
    %v2013 = vsub.s32 1, %v2012
    %v2014 = vrot.slane %v2005, %v2013
    %v2015 = vlaneseq
    %v2016 = vshrl.u32 %v2015, 7
    %v2017 = vsub.s32 2, %v2016
    %v2018 = vrot.slane %v2005, %v2017
    %v2019 = vlaneseq
    %v2020 = vshrl.u32 %v2019, 7
    %v2021 = vsub.s32 3, %v2020
    %v2022 = vrot.slane %v2005, %v2021
    %v2027 = vadd.f32 %v1958, %v2010
    %v2028 = vadd.f32 %v1960, %v2014
    %v2029 = vadd.f32 %v1999, %v2018
    %v2030 = vadd.f32 %v2001, %v2022
    %v2031 = vxor.u32 %v2027, 2147483648
    %v2032 = vmul.f32 %v2031, 1.442695
    %v2033 = vpow.pop %v2032
    %v2034 = vadd.f32 %v2033, 1.0
    %v2035 = vrcp.pop %v2034
    %v2036 = vmul.f32 1.0, %v2035
    %v2037 = vxor.u32 %v2028, 2147483648
    %v2038 = vmul.f32 %v2037, 1.442695
    %v2039 = vpow.pop %v2038
    %v2040 = vadd.f32 %v2039, 1.0
    %v2041 = vrcp.pop %v2040
    %v2042 = vmul.f32 1.0, %v2041
    %v2043 = vtanh.pop %v2029
    %v2044 = vxor.u32 %v2030, 2147483648
    %v2045 = vmul.f32 %v2044, 1.442695
    %v2046 = vpow.pop %v2045
    %v2047 = vadd.f32 %v2046, 1.0
    %v2048 = vrcp.pop %v2047
    %v2049 = vmul.f32 1.0, %v2048
    %v2050 = vmul.f32 %v2042, %v1548
    %v2051 = vmul.f32 %v2036, %v2043
    %v2052 = vadd.f32 %v2050, %v2051
    %v2053 = vtanh.pop %v2052
    %v2054 = vmul.f32 %v2049, %v2053
    %v2055 = vpack.c.bf16 %v2054, %v2054
    %v2058 = vunpack.c.l.s4 1966171168
    %v2059 = vunpack.c.0.s8 %v2058
    %v2060 = vlaneseq
    %v2061 = vshrl.u32 %v2060, 7
    %v2062 = vsub.s32 %v2059, %v2061
    %v2063 = vrot.slane %v2055, %v2062
    %v2065 = vunpack.c.l.s4 1966171168
    %v2066 = vunpack.c.0.s8 %v2065
    %v2067 = vlaneseq
    %v2068 = vshrl.u32 %v2067, 7
    %v2069 = vsub.s32 %v2066, %v2068
    %v2070 = vrot.slane %v2063, %v2069
    %v2071 = vunpack.i.l.s16 %v2070
    %v2072 = vunpack.i.h.s16 %v2070
    %v2073 = vpack.i.b16 %v2071, %v2071
    %v2074 = vpack.i.b16 %v2072, %v2072
    %v2076 = vunpack.c.l.s4 286326784
    %v2077 = vunpack.c.0.s8 %v2076
    %v2078 = vlaneseq
    %v2079 = vshrl.u32 %v2078, 7
    %v2080 = vsub.s32 %v2077, %v2079
    %v2081 = vrot.slane %v2073, %v2080
    %v2083 = vunpack.c.l.s4 286326784
    %v2084 = vunpack.c.0.s8 %v2083
    %v2085 = vlaneseq
    %v2086 = vshrl.u32 %v2085, 7
    %v2087 = vsub.s32 %v2084, %v2086
    %v2088 = vrot.slane %v2074, %v2087
    %vm2091 = vsmask.f32 7942
    %vm2092 = vmand %vm1587, %vm2091
    %v2093 = vld [vmem:[#allocation10] sm:$0x2]
    %v2094 = vsel %vm2092, %v2081, %v2093
    %2095 = vst [vmem:[#allocation10] sm:$0x2] %v2094
    %v2096 = vld [vmem:[#allocation10 + $0x4] sm:$0x2]
    %v2097 = vsel %vm2092, %v2088, %v2096
    %2098 = vst [vmem:[#allocation10 + $0x4] sm:$0x2] %v2097
    %s2099 = scalar_lea.vmem [#allocation2], 4
    %v2100 = vld [vmem:[%s2099] sm:$0x1]
    %v2101 = vld [vmem:[#allocation5] sm:$0xff]
    %v2102 = vld [vmem:[#allocation5 + $0x8] sm:$0xff]
    %v2103 = vld [vmem:[#allocation5 + $0x10] sm:$0xff]
    %v2104 = vld [vmem:[#allocation5 + $0x18] sm:$0xff]
    %v2105 = vld [vmem:[#allocation5 + $0x20] sm:$0xff]
    %v2106 = vld [vmem:[#allocation5 + $0x28] sm:$0xff]
    %v2107 = vld [vmem:[#allocation5 + $0x30] sm:$0xff]
    %v2108 = vld [vmem:[#allocation5 + $0x38] sm:$0xff]
    %v2109 = vld [vmem:[#allocation8] sm:$0xff]
    %v2110 = vld [vmem:[#allocation8 + $0x8] sm:$0xff]
    %v2111 = vld [vmem:[#allocation8 + $0x10] sm:$0xff]
    %v2112 = vld [vmem:[#allocation8 + $0x18] sm:$0xff]
    %v2113 = vld [vmem:[#allocation8 + $0x20] sm:$0xff]
    %v2114 = vld [vmem:[#allocation8 + $0x28] sm:$0xff]
    %v2115 = vld [vmem:[#allocation8 + $0x30] sm:$0xff]
    %v2116 = vld [vmem:[#allocation8 + $0x38] sm:$0xff]
    %v2117 = vld [vmem:[#allocation8 + $0x40] sm:$0xff]
    %v2118 = vld [vmem:[#allocation8 + $0x48] sm:$0xff]
    %v2119 = vld [vmem:[#allocation8 + $0x50] sm:$0xff]
    %v2120 = vld [vmem:[#allocation8 + $0x58] sm:$0xff]
    %v2121 = vld [vmem:[#allocation8 + $0x60] sm:$0xff]
    %v2122 = vld [vmem:[#allocation8 + $0x68] sm:$0xff]
    %v2123 = vld [vmem:[#allocation8 + $0x70] sm:$0xff]
    %v2124 = vld [vmem:[#allocation8 + $0x78] sm:$0xff]
    %v2125 = vld [vmem:[#allocation8 + $0x80] sm:$0xff]
    %v2126 = vld [vmem:[#allocation8 + $0x88] sm:$0xff]
    %v2127 = vld [vmem:[#allocation8 + $0x90] sm:$0xff]
    %v2128 = vld [vmem:[#allocation8 + $0x98] sm:$0xff]
    %v2129 = vld [vmem:[#allocation8 + $0xa0] sm:$0xff]
    %v2130 = vld [vmem:[#allocation8 + $0xa8] sm:$0xff]
    %v2131 = vld [vmem:[#allocation8 + $0xb0] sm:$0xff]
    %v2132 = vld [vmem:[#allocation8 + $0xb8] sm:$0xff]
    %v2133 = vld [vmem:[#allocation8 + $0xc0] sm:$0xff]
    %v2134 = vld [vmem:[#allocation8 + $0xc8] sm:$0xff]
    %v2135 = vld [vmem:[#allocation8 + $0xd0] sm:$0xff]
    %v2136 = vld [vmem:[#allocation8 + $0xd8] sm:$0xff]
    %v2137 = vld [vmem:[#allocation8 + $0xe0] sm:$0xff]
    %v2138 = vld [vmem:[#allocation8 + $0xe8] sm:$0xff]
    %v2139 = vld [vmem:[#allocation8 + $0xf0] sm:$0xff]
    %v2140 = vld [vmem:[#allocation8 + $0xf8] sm:$0xff]
    %v2173 = vunpack.c.l.b16 %v2109
    %v2174 = vunpack.c.h.b16 %v2109
    %v2175 = vunpack.c.l.b16 %v2110
    %v2176 = vunpack.c.h.b16 %v2110
    %v2177 = vunpack.c.l.b16 %v2111
    %v2178 = vunpack.c.h.b16 %v2111
    %v2179 = vunpack.c.l.b16 %v2112
    %v2180 = vunpack.c.h.b16 %v2112
    %v2181 = vunpack.c.l.b16 %v2113
    %v2182 = vunpack.c.h.b16 %v2113
    %v2183 = vunpack.c.l.b16 %v2114
    %v2184 = vunpack.c.h.b16 %v2114
    %v2185 = vunpack.c.l.b16 %v2115
    %v2186 = vunpack.c.h.b16 %v2115
    %v2187 = vunpack.c.l.b16 %v2116
    %v2188 = vunpack.c.h.b16 %v2116
    %v2189 = vunpack.c.l.b16 %v2117
    %v2190 = vunpack.c.h.b16 %v2117
    %v2191 = vunpack.c.l.b16 %v2118
    %v2192 = vunpack.c.h.b16 %v2118
    %v2193 = vunpack.c.l.b16 %v2119
    %v2194 = vunpack.c.h.b16 %v2119
    %v2195 = vunpack.c.l.b16 %v2120
    %v2196 = vunpack.c.h.b16 %v2120
    %v2197 = vunpack.c.l.b16 %v2121
    %v2198 = vunpack.c.h.b16 %v2121
    %v2199 = vunpack.c.l.b16 %v2122
    %v2200 = vunpack.c.h.b16 %v2122
    %v2201 = vunpack.c.l.b16 %v2123
    %v2202 = vunpack.c.h.b16 %v2123
    %v2203 = vunpack.c.l.b16 %v2124
    %v2204 = vunpack.c.h.b16 %v2124
    %v2205 = vunpack.c.l.b16 %v2125
    %v2206 = vunpack.c.h.b16 %v2125
    %v2207 = vunpack.c.l.b16 %v2126
    %v2208 = vunpack.c.h.b16 %v2126
    %v2209 = vunpack.c.l.b16 %v2127
    %v2210 = vunpack.c.h.b16 %v2127
    %v2211 = vunpack.c.l.b16 %v2128
    %v2212 = vunpack.c.h.b16 %v2128
    %v2213 = vunpack.c.l.b16 %v2129
    %v2214 = vunpack.c.h.b16 %v2129
    %v2215 = vunpack.c.l.b16 %v2130
    %v2216 = vunpack.c.h.b16 %v2130
    %v2217 = vunpack.c.l.b16 %v2131
    %v2218 = vunpack.c.h.b16 %v2131
    %v2219 = vunpack.c.l.b16 %v2132
    %v2220 = vunpack.c.h.b16 %v2132
    %v2221 = vunpack.c.l.b16 %v2133
    %v2222 = vunpack.c.h.b16 %v2133
    %v2223 = vunpack.c.l.b16 %v2134
    %v2224 = vunpack.c.h.b16 %v2134
    %v2225 = vunpack.c.l.b16 %v2135
    %v2226 = vunpack.c.h.b16 %v2135
    %v2227 = vunpack.c.l.b16 %v2136
    %v2228 = vunpack.c.h.b16 %v2136
    %v2229 = vunpack.c.l.b16 %v2137
    %v2230 = vunpack.c.h.b16 %v2137
    %v2231 = vunpack.c.l.b16 %v2138
    %v2232 = vunpack.c.h.b16 %v2138
    %v2233 = vunpack.c.l.b16 %v2139
    %v2234 = vunpack.c.h.b16 %v2139
    %v2235 = vunpack.c.l.b16 %v2140
    %v2236 = vunpack.c.h.b16 %v2140
    %v2237 = vpack.c.b16 %v2177, %v2173
    %v2238 = vpack.c.b16 %v2178, %v2174
    %v2239 = vpack.c.b16 %v2179, %v2175
    %v2240 = vpack.c.b16 %v2180, %v2176
    %v2241 = vpack.c.b16 %v2185, %v2181
    %v2242 = vpack.c.b16 %v2186, %v2182
    %v2243 = vpack.c.b16 %v2187, %v2183
    %v2244 = vpack.c.b16 %v2188, %v2184
    %v2245 = vpack.c.b16 %v2193, %v2189
    %v2246 = vpack.c.b16 %v2194, %v2190
    %v2247 = vpack.c.b16 %v2195, %v2191
    %v2248 = vpack.c.b16 %v2196, %v2192
    %v2249 = vpack.c.b16 %v2201, %v2197
    %v2250 = vpack.c.b16 %v2202, %v2198
    %v2251 = vpack.c.b16 %v2203, %v2199
    %v2252 = vpack.c.b16 %v2204, %v2200
    %v2253 = vpack.c.b16 %v2209, %v2205
    %v2254 = vpack.c.b16 %v2210, %v2206
    %v2255 = vpack.c.b16 %v2211, %v2207
    %v2256 = vpack.c.b16 %v2212, %v2208
    %v2257 = vpack.c.b16 %v2217, %v2213
    %v2258 = vpack.c.b16 %v2218, %v2214
    %v2259 = vpack.c.b16 %v2219, %v2215
    %v2260 = vpack.c.b16 %v2220, %v2216
    %v2261 = vpack.c.b16 %v2225, %v2221
    %v2262 = vpack.c.b16 %v2226, %v2222
    %v2263 = vpack.c.b16 %v2227, %v2223
    %v2264 = vpack.c.b16 %v2228, %v2224
    %v2265 = vpack.c.b16 %v2233, %v2229
    %v2266 = vpack.c.b16 %v2234, %v2230
    %v2267 = vpack.c.b16 %v2235, %v2231
    %v2268 = vpack.c.b16 %v2236, %v2232
    %2301 = vmatprep.subr.bf16.mxu0 %v2266
    %2302 = vmatpush1.bf16.msra.mxu0 %v2265
    %2303 = vmatprep.subr.bf16.mxu0 %v2262
    %2304 = vmatpush1.bf16.msra.mxu0 %v2261
    %2305 = vmatprep.subr.bf16.mxu0 %v2258
    %2306 = vmatpush1.bf16.msra.mxu0 %v2257
    %2307 = vmatprep.subr.bf16.mxu0 %v2254
    %2308 = vmatpush1.bf16.msra.mxu0 %v2253
    %2309 = vmatprep.subr.bf16.mxu0 %v2250
    %2310 = vmatpush1.bf16.msra.mxu0 %v2249
    %2311 = vmatprep.subr.bf16.mxu0 %v2246
    %2312 = vmatpush1.bf16.msra.mxu0 %v2245
    %2313 = vmatprep.subr.bf16.mxu0 %v2242
    %2314 = vmatpush1.bf16.msra.mxu0 %v2241
    %2315 = vmatprep.subr.bf16.mxu0 %v2238
    %2316 = vmatpush1.bf16.msra.mxu0 %v2237
    %2317 = vmatprep.subr.bf16.mxu0 0
    %2318 = vmatpush2.bf16.msra.mxu0 0
    %2319 = vmatprep.subr.bf16.mxu0 0
    %2320 = vmatpush2.bf16.msra.mxu0 0
    %2321 = vmatprep.subr.bf16.mxu0 0
    %2322 = vmatpush2.bf16.msra.mxu0 0
    %2323 = vmatprep.subr.bf16.mxu0 0
    %2324 = vmatpush2.bf16.msra.mxu0 0
    %2325 = vmatprep.subr.bf16.mxu0 0
    %2326 = vmatpush2.bf16.msra.mxu0 0
    %2327 = vmatprep.subr.bf16.mxu0 0
    %2328 = vmatpush2.bf16.msra.mxu0 0
    %2329 = vmatprep.subr.bf16.mxu0 0
    %2330 = vmatpush2.bf16.msra.mxu0 0
    %2331 = vmatprep.subr.bf16.mxu0 0
    %2332 = vmatpush2.bf16.msra.mxu0 0
    %2333 = vmatprep.mubr.bf16.mxu0 0
    %2334 = vmatmul.mubr.bf16.gmra.mxu0 %v2055
    %v2335 = vpop.f32.mrf.mxu0
    %v2336 = vadd.f32 0.0, %v2335
    %v2337 = vpop.f32.mrf.mxu0
    %v2338 = vadd.f32 0.0, %v2337
    %v2339 = vpop.f32.mrf.mxu0
    %v2340 = vpop.f32.mrf.mxu0
    %2341 = vdwg.mxu0
    %2342 = vmatprep.subr.bf16.mxu0 %v2268
    %2343 = vmatpush1.bf16.msra.mxu0 %v2267
    %2344 = vmatprep.subr.bf16.mxu0 %v2264
    %2345 = vmatpush1.bf16.msra.mxu0 %v2263
    %2346 = vmatprep.subr.bf16.mxu0 %v2260
    %2347 = vmatpush1.bf16.msra.mxu0 %v2259
    %2348 = vmatprep.subr.bf16.mxu0 %v2256
    %2349 = vmatpush1.bf16.msra.mxu0 %v2255
    %2350 = vmatprep.subr.bf16.mxu0 %v2252
    %2351 = vmatpush1.bf16.msra.mxu0 %v2251
    %2352 = vmatprep.subr.bf16.mxu0 %v2248
    %2353 = vmatpush1.bf16.msra.mxu0 %v2247
    %2354 = vmatprep.subr.bf16.mxu0 %v2244
    %2355 = vmatpush1.bf16.msra.mxu0 %v2243
    %2356 = vmatprep.subr.bf16.mxu0 %v2240
    %2357 = vmatpush1.bf16.msra.mxu0 %v2239
    %2358 = vmatprep.subr.bf16.mxu0 0
    %2359 = vmatpush2.bf16.msra.mxu0 0
    %2360 = vmatprep.subr.bf16.mxu0 0
    %2361 = vmatpush2.bf16.msra.mxu0 0
    %2362 = vmatprep.subr.bf16.mxu0 0
    %2363 = vmatpush2.bf16.msra.mxu0 0
    %2364 = vmatprep.subr.bf16.mxu0 0
    %2365 = vmatpush2.bf16.msra.mxu0 0
    %2366 = vmatprep.subr.bf16.mxu0 0
    %2367 = vmatpush2.bf16.msra.mxu0 0
    %2368 = vmatprep.subr.bf16.mxu0 0
    %2369 = vmatpush2.bf16.msra.mxu0 0
    %2370 = vmatprep.subr.bf16.mxu0 0
    %2371 = vmatpush2.bf16.msra.mxu0 0
    %2372 = vmatprep.subr.bf16.mxu0 0
    %2373 = vmatpush2.bf16.msra.mxu0 0
    %2374 = vmatprep.mubr.bf16.mxu0 0
    %2375 = vmatmul.mubr.bf16.gmra.mxu0 %v2055
    %v2376 = vpop.f32.mrf.mxu0
    %v2377 = vadd.f32 0.0, %v2376
    %v2378 = vpop.f32.mrf.mxu0
    %v2379 = vadd.f32 0.0, %v2378
    %v2380 = vpop.f32.mrf.mxu0
    %v2381 = vpop.f32.mrf.mxu0
    %2382 = vdwg.mxu0
    %v2391 = vunpack.c.l.b16 %v2101
    %v2392 = vunpack.c.h.b16 %v2101
    %v2393 = vunpack.c.l.b16 %v2102
    %v2394 = vunpack.c.h.b16 %v2102
    %v2395 = vunpack.c.l.b16 %v2103
    %v2396 = vunpack.c.h.b16 %v2103
    %v2397 = vunpack.c.l.b16 %v2104
    %v2398 = vunpack.c.h.b16 %v2104
    %v2399 = vunpack.c.l.b16 %v2105
    %v2400 = vunpack.c.h.b16 %v2105
    %v2401 = vunpack.c.l.b16 %v2106
    %v2402 = vunpack.c.h.b16 %v2106
    %v2403 = vunpack.c.l.b16 %v2107
    %v2404 = vunpack.c.h.b16 %v2107
    %v2405 = vunpack.c.l.b16 %v2108
    %v2406 = vunpack.c.h.b16 %v2108
    %v2407 = vpack.c.b16 %v2395, %v2391
    %v2408 = vpack.c.b16 %v2396, %v2392
    %v2409 = vpack.c.b16 %v2397, %v2393
    %v2410 = vpack.c.b16 %v2398, %v2394
    %v2411 = vpack.c.b16 %v2403, %v2399
    %v2412 = vpack.c.b16 %v2404, %v2400
    %v2413 = vpack.c.b16 %v2405, %v2401
    %v2414 = vpack.c.b16 %v2406, %v2402
    %v2424 = vsel %vm408, %v2100, 0
    %2426 = vmatprep.subr.bf16.mxu0 0
    %2427 = vmatpush1.bf16.msra.mxu0 0
    %2428 = vmatprep.subr.bf16.mxu0 0
    %2429 = vmatpush1.bf16.msra.mxu0 0
    %2430 = vmatprep.subr.bf16.mxu0 0
    %2431 = vmatpush1.bf16.msra.mxu0 0
    %2432 = vmatprep.subr.bf16.mxu0 0
    %2433 = vmatpush1.bf16.msra.mxu0 0
    %2434 = vmatprep.subr.bf16.mxu0 0
    %2435 = vmatpush1.bf16.msra.mxu0 0
    %2436 = vmatprep.subr.bf16.mxu0 0
    %2437 = vmatpush1.bf16.msra.mxu0 0
    %2438 = vmatprep.subr.bf16.mxu0 %v2412
    %2439 = vmatpush1.bf16.msra.mxu0 %v2411
    %2440 = vmatprep.subr.bf16.mxu0 %v2408
    %2441 = vmatpush1.bf16.msra.mxu0 %v2407
    %2442 = vmatprep.subr.bf16.mxu0 0
    %2443 = vmatpush2.bf16.msra.mxu0 0
    %2444 = vmatprep.subr.bf16.mxu0 0
    %2445 = vmatpush2.bf16.msra.mxu0 0
    %2446 = vmatprep.subr.bf16.mxu0 0
    %2447 = vmatpush2.bf16.msra.mxu0 0
    %2448 = vmatprep.subr.bf16.mxu0 0
    %2449 = vmatpush2.bf16.msra.mxu0 0
    %2450 = vmatprep.subr.bf16.mxu0 0
    %2451 = vmatpush2.bf16.msra.mxu0 0
    %2452 = vmatprep.subr.bf16.mxu0 0
    %2453 = vmatpush2.bf16.msra.mxu0 0
    %2454 = vmatprep.subr.bf16.mxu0 0
    %2455 = vmatpush2.bf16.msra.mxu0 0
    %2456 = vmatprep.subr.bf16.mxu0 0
    %2457 = vmatpush2.bf16.msra.mxu0 0
    %2458 = vmatprep.mubr.bf16.mxu0 0
    %2459 = vmatmul.mubr.bf16.gmra.mxu0 %v2424
    %v2460 = vpop.f32.mrf.mxu0
    %v2461 = vadd.f32 %v2336, %v2460
    %v2462 = vpop.f32.mrf.mxu0
    %v2463 = vadd.f32 %v2338, %v2462
    %v2464 = vpop.f32.mrf.mxu0
    %v2465 = vpop.f32.mrf.mxu0
    %2466 = vdwg.mxu0
    %2467 = vmatprep.subr.bf16.mxu0 0
    %2468 = vmatpush1.bf16.msra.mxu0 0
    %2469 = vmatprep.subr.bf16.mxu0 0
    %2470 = vmatpush1.bf16.msra.mxu0 0
    %2471 = vmatprep.subr.bf16.mxu0 0
    %2472 = vmatpush1.bf16.msra.mxu0 0
    %2473 = vmatprep.subr.bf16.mxu0 0
    %2474 = vmatpush1.bf16.msra.mxu0 0
    %2475 = vmatprep.subr.bf16.mxu0 0
    %2476 = vmatpush1.bf16.msra.mxu0 0
    %2477 = vmatprep.subr.bf16.mxu0 0
    %2478 = vmatpush1.bf16.msra.mxu0 0
    %2479 = vmatprep.subr.bf16.mxu0 %v2414
    %2480 = vmatpush1.bf16.msra.mxu0 %v2413
    %2481 = vmatprep.subr.bf16.mxu0 %v2410
    %2482 = vmatpush1.bf16.msra.mxu0 %v2409
    %2483 = vmatprep.subr.bf16.mxu0 0
    %2484 = vmatpush2.bf16.msra.mxu0 0
    %2485 = vmatprep.subr.bf16.mxu0 0
    %2486 = vmatpush2.bf16.msra.mxu0 0
    %2487 = vmatprep.subr.bf16.mxu0 0
    %2488 = vmatpush2.bf16.msra.mxu0 0
    %2489 = vmatprep.subr.bf16.mxu0 0
    %2490 = vmatpush2.bf16.msra.mxu0 0
    %2491 = vmatprep.subr.bf16.mxu0 0
    %2492 = vmatpush2.bf16.msra.mxu0 0
    %2493 = vmatprep.subr.bf16.mxu0 0
    %2494 = vmatpush2.bf16.msra.mxu0 0
    %2495 = vmatprep.subr.bf16.mxu0 0
    %2496 = vmatpush2.bf16.msra.mxu0 0
    %2497 = vmatprep.subr.bf16.mxu0 0
    %2498 = vmatpush2.bf16.msra.mxu0 0
    %2499 = vmatprep.mubr.bf16.mxu0 0
    %2500 = vmatmul.mubr.bf16.gmra.mxu0 %v2424
    %v2501 = vpop.f32.mrf.mxu0
    %v2502 = vadd.f32 %v2377, %v2501
    %v2503 = vpop.f32.mrf.mxu0
    %v2504 = vadd.f32 %v2379, %v2503
    %v2505 = vpop.f32.mrf.mxu0
    %v2506 = vpop.f32.mrf.mxu0
    %2507 = vdwg.mxu0
    %v2508 = vld [vmem:[#allocation7] sm:$0xf]
    %v2510 = vlaneseq
    %v2511 = vshrl.u32 %v2510, 7
    %v2512 = vsub.s32 0, %v2511
    %v2513 = vrot.slane %v2508, %v2512
    %v2514 = vlaneseq
    %v2515 = vshrl.u32 %v2514, 7
    %v2516 = vsub.s32 1, %v2515
    %v2517 = vrot.slane %v2508, %v2516
    %v2518 = vlaneseq
    %v2519 = vshrl.u32 %v2518, 7
    %v2520 = vsub.s32 2, %v2519
    %v2521 = vrot.slane %v2508, %v2520
    %v2522 = vlaneseq
    %v2523 = vshrl.u32 %v2522, 7
    %v2524 = vsub.s32 3, %v2523
    %v2525 = vrot.slane %v2508, %v2524
    %v2530 = vadd.f32 %v2461, %v2513
    %v2531 = vadd.f32 %v2463, %v2517
    %v2532 = vadd.f32 %v2502, %v2521
    %v2533 = vadd.f32 %v2504, %v2525
    %v2534 = vxor.u32 %v2530, 2147483648
    %v2535 = vmul.f32 %v2534, 1.442695
    %v2536 = vpow.pop %v2535
    %v2537 = vadd.f32 %v2536, 1.0
    %v2538 = vrcp.pop %v2537
    %v2539 = vmul.f32 1.0, %v2538
    %v2540 = vxor.u32 %v2531, 2147483648
    %v2541 = vmul.f32 %v2540, 1.442695
    %v2542 = vpow.pop %v2541
    %v2543 = vadd.f32 %v2542, 1.0
    %v2544 = vrcp.pop %v2543
    %v2545 = vmul.f32 1.0, %v2544
    %v2546 = vtanh.pop %v2532
    %v2547 = vxor.u32 %v2533, 2147483648
    %v2548 = vmul.f32 %v2547, 1.442695
    %v2549 = vpow.pop %v2548
    %v2550 = vadd.f32 %v2549, 1.0
    %v2551 = vrcp.pop %v2550
    %v2552 = vmul.f32 1.0, %v2551
    %v2553 = vmul.f32 %v2545, %v2052
    %v2554 = vmul.f32 %v2539, %v2546
    %v2555 = vadd.f32 %v2553, %v2554
    %v2556 = vtanh.pop %v2555
    %v2557 = vmul.f32 %v2552, %v2556
    %v2558 = vpack.c.bf16 %v2557, %v2557
    %v2561 = vunpack.c.l.s4 1966171168
    %v2562 = vunpack.c.0.s8 %v2561
    %v2563 = vlaneseq
    %v2564 = vshrl.u32 %v2563, 7
    %v2565 = vsub.s32 %v2562, %v2564
    %v2566 = vrot.slane %v2558, %v2565
    %v2568 = vunpack.c.l.s4 1966171168
    %v2569 = vunpack.c.0.s8 %v2568
    %v2570 = vlaneseq
    %v2571 = vshrl.u32 %v2570, 7
    %v2572 = vsub.s32 %v2569, %v2571
    %v2573 = vrot.slane %v2566, %v2572
    %v2574 = vunpack.i.l.s16 %v2573
    %v2575 = vunpack.i.h.s16 %v2573
    %v2576 = vpack.i.b16 %v2574, %v2574
    %v2577 = vpack.i.b16 %v2575, %v2575
    %v2579 = vunpack.c.l.s4 286326784
    %v2580 = vunpack.c.0.s8 %v2579
    %v2581 = vlaneseq
    %v2582 = vshrl.u32 %v2581, 7
    %v2583 = vsub.s32 %v2580, %v2582
    %v2584 = vrot.slane %v2576, %v2583
    %v2586 = vunpack.c.l.s4 286326784
    %v2587 = vunpack.c.0.s8 %v2586
    %v2588 = vlaneseq
    %v2589 = vshrl.u32 %v2588, 7
    %v2590 = vsub.s32 %v2587, %v2589
    %v2591 = vrot.slane %v2577, %v2590
    %vm2594 = vcmask 1042434
    %vm2595 = vsmask.f32 2304
    %vm2596 = vmand %vm2594, %vm2595
    %v2597 = vld [vmem:[#allocation10] sm:$0x4]
    %v2598 = vsel %vm2596, %v2584, %v2597
    %2599 = vst [vmem:[#allocation10] sm:$0x4] %v2598
    %v2600 = vld [vmem:[#allocation10 + $0x4] sm:$0x4]
    %v2601 = vsel %vm2596, %v2591, %v2600
    %2602 = vst [vmem:[#allocation10 + $0x4] sm:$0x4] %v2601
    %s2603 = scalar_lea.vmem [#allocation2], 5
    %v2604 = vld [vmem:[%s2603] sm:$0x1]
    %v2605 = vld [vmem:[#allocation5] sm:$0xff]
    %v2606 = vld [vmem:[#allocation5 + $0x8] sm:$0xff]
    %v2607 = vld [vmem:[#allocation5 + $0x10] sm:$0xff]
    %v2608 = vld [vmem:[#allocation5 + $0x18] sm:$0xff]
    %v2609 = vld [vmem:[#allocation5 + $0x20] sm:$0xff]
    %v2610 = vld [vmem:[#allocation5 + $0x28] sm:$0xff]
    %v2611 = vld [vmem:[#allocation5 + $0x30] sm:$0xff]
    %v2612 = vld [vmem:[#allocation5 + $0x38] sm:$0xff]
    %v2613 = vld [vmem:[#allocation8] sm:$0xff]
    %v2614 = vld [vmem:[#allocation8 + $0x8] sm:$0xff]
    %v2615 = vld [vmem:[#allocation8 + $0x10] sm:$0xff]
    %v2616 = vld [vmem:[#allocation8 + $0x18] sm:$0xff]
    %v2617 = vld [vmem:[#allocation8 + $0x20] sm:$0xff]
    %v2618 = vld [vmem:[#allocation8 + $0x28] sm:$0xff]
    %v2619 = vld [vmem:[#allocation8 + $0x30] sm:$0xff]
    %v2620 = vld [vmem:[#allocation8 + $0x38] sm:$0xff]
    %v2621 = vld [vmem:[#allocation8 + $0x40] sm:$0xff]
    %v2622 = vld [vmem:[#allocation8 + $0x48] sm:$0xff]
    %v2623 = vld [vmem:[#allocation8 + $0x50] sm:$0xff]
    %v2624 = vld [vmem:[#allocation8 + $0x58] sm:$0xff]
    %v2625 = vld [vmem:[#allocation8 + $0x60] sm:$0xff]
    %v2626 = vld [vmem:[#allocation8 + $0x68] sm:$0xff]
    %v2627 = vld [vmem:[#allocation8 + $0x70] sm:$0xff]
    %v2628 = vld [vmem:[#allocation8 + $0x78] sm:$0xff]
    %v2629 = vld [vmem:[#allocation8 + $0x80] sm:$0xff]
    %v2630 = vld [vmem:[#allocation8 + $0x88] sm:$0xff]
    %v2631 = vld [vmem:[#allocation8 + $0x90] sm:$0xff]
    %v2632 = vld [vmem:[#allocation8 + $0x98] sm:$0xff]
    %v2633 = vld [vmem:[#allocation8 + $0xa0] sm:$0xff]
    %v2634 = vld [vmem:[#allocation8 + $0xa8] sm:$0xff]
    %v2635 = vld [vmem:[#allocation8 + $0xb0] sm:$0xff]
    %v2636 = vld [vmem:[#allocation8 + $0xb8] sm:$0xff]
    %v2637 = vld [vmem:[#allocation8 + $0xc0] sm:$0xff]
    %v2638 = vld [vmem:[#allocation8 + $0xc8] sm:$0xff]
    %v2639 = vld [vmem:[#allocation8 + $0xd0] sm:$0xff]
    %v2640 = vld [vmem:[#allocation8 + $0xd8] sm:$0xff]
    %v2641 = vld [vmem:[#allocation8 + $0xe0] sm:$0xff]
    %v2642 = vld [vmem:[#allocation8 + $0xe8] sm:$0xff]
    %v2643 = vld [vmem:[#allocation8 + $0xf0] sm:$0xff]
    %v2644 = vld [vmem:[#allocation8 + $0xf8] sm:$0xff]
    %v2677 = vunpack.c.l.b16 %v2613
    %v2678 = vunpack.c.h.b16 %v2613
    %v2679 = vunpack.c.l.b16 %v2614
    %v2680 = vunpack.c.h.b16 %v2614
    %v2681 = vunpack.c.l.b16 %v2615
    %v2682 = vunpack.c.h.b16 %v2615
    %v2683 = vunpack.c.l.b16 %v2616
    %v2684 = vunpack.c.h.b16 %v2616
    %v2685 = vunpack.c.l.b16 %v2617
    %v2686 = vunpack.c.h.b16 %v2617
    %v2687 = vunpack.c.l.b16 %v2618
    %v2688 = vunpack.c.h.b16 %v2618
    %v2689 = vunpack.c.l.b16 %v2619
    %v2690 = vunpack.c.h.b16 %v2619
    %v2691 = vunpack.c.l.b16 %v2620
    %v2692 = vunpack.c.h.b16 %v2620
    %v2693 = vunpack.c.l.b16 %v2621
    %v2694 = vunpack.c.h.b16 %v2621
    %v2695 = vunpack.c.l.b16 %v2622
    %v2696 = vunpack.c.h.b16 %v2622
    %v2697 = vunpack.c.l.b16 %v2623
    %v2698 = vunpack.c.h.b16 %v2623
    %v2699 = vunpack.c.l.b16 %v2624
    %v2700 = vunpack.c.h.b16 %v2624
    %v2701 = vunpack.c.l.b16 %v2625
    %v2702 = vunpack.c.h.b16 %v2625
    %v2703 = vunpack.c.l.b16 %v2626
    %v2704 = vunpack.c.h.b16 %v2626
    %v2705 = vunpack.c.l.b16 %v2627
    %v2706 = vunpack.c.h.b16 %v2627
    %v2707 = vunpack.c.l.b16 %v2628
    %v2708 = vunpack.c.h.b16 %v2628
    %v2709 = vunpack.c.l.b16 %v2629
    %v2710 = vunpack.c.h.b16 %v2629
    %v2711 = vunpack.c.l.b16 %v2630
    %v2712 = vunpack.c.h.b16 %v2630
    %v2713 = vunpack.c.l.b16 %v2631
    %v2714 = vunpack.c.h.b16 %v2631
    %v2715 = vunpack.c.l.b16 %v2632
    %v2716 = vunpack.c.h.b16 %v2632
    %v2717 = vunpack.c.l.b16 %v2633
    %v2718 = vunpack.c.h.b16 %v2633
    %v2719 = vunpack.c.l.b16 %v2634
    %v2720 = vunpack.c.h.b16 %v2634
    %v2721 = vunpack.c.l.b16 %v2635
    %v2722 = vunpack.c.h.b16 %v2635
    %v2723 = vunpack.c.l.b16 %v2636
    %v2724 = vunpack.c.h.b16 %v2636
    %v2725 = vunpack.c.l.b16 %v2637
    %v2726 = vunpack.c.h.b16 %v2637
    %v2727 = vunpack.c.l.b16 %v2638
    %v2728 = vunpack.c.h.b16 %v2638
    %v2729 = vunpack.c.l.b16 %v2639
    %v2730 = vunpack.c.h.b16 %v2639
    %v2731 = vunpack.c.l.b16 %v2640
    %v2732 = vunpack.c.h.b16 %v2640
    %v2733 = vunpack.c.l.b16 %v2641
    %v2734 = vunpack.c.h.b16 %v2641
    %v2735 = vunpack.c.l.b16 %v2642
    %v2736 = vunpack.c.h.b16 %v2642
    %v2737 = vunpack.c.l.b16 %v2643
    %v2738 = vunpack.c.h.b16 %v2643
    %v2739 = vunpack.c.l.b16 %v2644
    %v2740 = vunpack.c.h.b16 %v2644
    %v2741 = vpack.c.b16 %v2681, %v2677
    %v2742 = vpack.c.b16 %v2682, %v2678
    %v2743 = vpack.c.b16 %v2683, %v2679
    %v2744 = vpack.c.b16 %v2684, %v2680
    %v2745 = vpack.c.b16 %v2689, %v2685
    %v2746 = vpack.c.b16 %v2690, %v2686
    %v2747 = vpack.c.b16 %v2691, %v2687
    %v2748 = vpack.c.b16 %v2692, %v2688
    %v2749 = vpack.c.b16 %v2697, %v2693
    %v2750 = vpack.c.b16 %v2698, %v2694
    %v2751 = vpack.c.b16 %v2699, %v2695
    %v2752 = vpack.c.b16 %v2700, %v2696
    %v2753 = vpack.c.b16 %v2705, %v2701
    %v2754 = vpack.c.b16 %v2706, %v2702
    %v2755 = vpack.c.b16 %v2707, %v2703
    %v2756 = vpack.c.b16 %v2708, %v2704
    %v2757 = vpack.c.b16 %v2713, %v2709
    %v2758 = vpack.c.b16 %v2714, %v2710
    %v2759 = vpack.c.b16 %v2715, %v2711
    %v2760 = vpack.c.b16 %v2716, %v2712
    %v2761 = vpack.c.b16 %v2721, %v2717
    %v2762 = vpack.c.b16 %v2722, %v2718
    %v2763 = vpack.c.b16 %v2723, %v2719
    %v2764 = vpack.c.b16 %v2724, %v2720
    %v2765 = vpack.c.b16 %v2729, %v2725
    %v2766 = vpack.c.b16 %v2730, %v2726
    %v2767 = vpack.c.b16 %v2731, %v2727
    %v2768 = vpack.c.b16 %v2732, %v2728
    %v2769 = vpack.c.b16 %v2737, %v2733
    %v2770 = vpack.c.b16 %v2738, %v2734
    %v2771 = vpack.c.b16 %v2739, %v2735
    %v2772 = vpack.c.b16 %v2740, %v2736
    %2805 = vmatprep.subr.bf16.mxu0 %v2770
    %2806 = vmatpush1.bf16.msra.mxu0 %v2769
    %2807 = vmatprep.subr.bf16.mxu0 %v2766
    %2808 = vmatpush1.bf16.msra.mxu0 %v2765
    %2809 = vmatprep.subr.bf16.mxu0 %v2762
    %2810 = vmatpush1.bf16.msra.mxu0 %v2761
    %2811 = vmatprep.subr.bf16.mxu0 %v2758
    %2812 = vmatpush1.bf16.msra.mxu0 %v2757
    %2813 = vmatprep.subr.bf16.mxu0 %v2754
    %2814 = vmatpush1.bf16.msra.mxu0 %v2753
    %2815 = vmatprep.subr.bf16.mxu0 %v2750
    %2816 = vmatpush1.bf16.msra.mxu0 %v2749
    %2817 = vmatprep.subr.bf16.mxu0 %v2746
    %2818 = vmatpush1.bf16.msra.mxu0 %v2745
    %2819 = vmatprep.subr.bf16.mxu0 %v2742
    %2820 = vmatpush1.bf16.msra.mxu0 %v2741
    %2821 = vmatprep.subr.bf16.mxu0 0
    %2822 = vmatpush2.bf16.msra.mxu0 0
    %2823 = vmatprep.subr.bf16.mxu0 0
    %2824 = vmatpush2.bf16.msra.mxu0 0
    %2825 = vmatprep.subr.bf16.mxu0 0
    %2826 = vmatpush2.bf16.msra.mxu0 0
    %2827 = vmatprep.subr.bf16.mxu0 0
    %2828 = vmatpush2.bf16.msra.mxu0 0
    %2829 = vmatprep.subr.bf16.mxu0 0
    %2830 = vmatpush2.bf16.msra.mxu0 0
    %2831 = vmatprep.subr.bf16.mxu0 0
    %2832 = vmatpush2.bf16.msra.mxu0 0
    %2833 = vmatprep.subr.bf16.mxu0 0
    %2834 = vmatpush2.bf16.msra.mxu0 0
    %2835 = vmatprep.subr.bf16.mxu0 0
    %2836 = vmatpush2.bf16.msra.mxu0 0
    %2837 = vmatprep.mubr.bf16.mxu0 0
    %2838 = vmatmul.mubr.bf16.gmra.mxu0 %v2558
    %v2839 = vpop.f32.mrf.mxu0
    %v2840 = vadd.f32 0.0, %v2839
    %v2841 = vpop.f32.mrf.mxu0
    %v2842 = vadd.f32 0.0, %v2841
    %v2843 = vpop.f32.mrf.mxu0
    %v2844 = vpop.f32.mrf.mxu0
    %2845 = vdwg.mxu0
    %2846 = vmatprep.subr.bf16.mxu0 %v2772
    %2847 = vmatpush1.bf16.msra.mxu0 %v2771
    %2848 = vmatprep.subr.bf16.mxu0 %v2768
    %2849 = vmatpush1.bf16.msra.mxu0 %v2767
    %2850 = vmatprep.subr.bf16.mxu0 %v2764
    %2851 = vmatpush1.bf16.msra.mxu0 %v2763
    %2852 = vmatprep.subr.bf16.mxu0 %v2760
    %2853 = vmatpush1.bf16.msra.mxu0 %v2759
    %2854 = vmatprep.subr.bf16.mxu0 %v2756
    %2855 = vmatpush1.bf16.msra.mxu0 %v2755
    %2856 = vmatprep.subr.bf16.mxu0 %v2752
    %2857 = vmatpush1.bf16.msra.mxu0 %v2751
    %2858 = vmatprep.subr.bf16.mxu0 %v2748
    %2859 = vmatpush1.bf16.msra.mxu0 %v2747
    %2860 = vmatprep.subr.bf16.mxu0 %v2744
    %2861 = vmatpush1.bf16.msra.mxu0 %v2743
    %2862 = vmatprep.subr.bf16.mxu0 0
    %2863 = vmatpush2.bf16.msra.mxu0 0
    %2864 = vmatprep.subr.bf16.mxu0 0
    %2865 = vmatpush2.bf16.msra.mxu0 0
    %2866 = vmatprep.subr.bf16.mxu0 0
    %2867 = vmatpush2.bf16.msra.mxu0 0
    %2868 = vmatprep.subr.bf16.mxu0 0
    %2869 = vmatpush2.bf16.msra.mxu0 0
    %2870 = vmatprep.subr.bf16.mxu0 0
    %2871 = vmatpush2.bf16.msra.mxu0 0
    %2872 = vmatprep.subr.bf16.mxu0 0
    %2873 = vmatpush2.bf16.msra.mxu0 0
    %2874 = vmatprep.subr.bf16.mxu0 0
    %2875 = vmatpush2.bf16.msra.mxu0 0
    %2876 = vmatprep.subr.bf16.mxu0 0
    %2877 = vmatpush2.bf16.msra.mxu0 0
    %2878 = vmatprep.mubr.bf16.mxu0 0
    %2879 = vmatmul.mubr.bf16.gmra.mxu0 %v2558
    %v2880 = vpop.f32.mrf.mxu0
    %v2881 = vadd.f32 0.0, %v2880
    %v2882 = vpop.f32.mrf.mxu0
    %v2883 = vadd.f32 0.0, %v2882
    %v2884 = vpop.f32.mrf.mxu0
    %v2885 = vpop.f32.mrf.mxu0
    %2886 = vdwg.mxu0
    %v2895 = vunpack.c.l.b16 %v2605
    %v2896 = vunpack.c.h.b16 %v2605
    %v2897 = vunpack.c.l.b16 %v2606
    %v2898 = vunpack.c.h.b16 %v2606
    %v2899 = vunpack.c.l.b16 %v2607
    %v2900 = vunpack.c.h.b16 %v2607
    %v2901 = vunpack.c.l.b16 %v2608
    %v2902 = vunpack.c.h.b16 %v2608
    %v2903 = vunpack.c.l.b16 %v2609
    %v2904 = vunpack.c.h.b16 %v2609
    %v2905 = vunpack.c.l.b16 %v2610
    %v2906 = vunpack.c.h.b16 %v2610
    %v2907 = vunpack.c.l.b16 %v2611
    %v2908 = vunpack.c.h.b16 %v2611
    %v2909 = vunpack.c.l.b16 %v2612
    %v2910 = vunpack.c.h.b16 %v2612
    %v2911 = vpack.c.b16 %v2899, %v2895
    %v2912 = vpack.c.b16 %v2900, %v2896
    %v2913 = vpack.c.b16 %v2901, %v2897
    %v2914 = vpack.c.b16 %v2902, %v2898
    %v2915 = vpack.c.b16 %v2907, %v2903
    %v2916 = vpack.c.b16 %v2908, %v2904
    %v2917 = vpack.c.b16 %v2909, %v2905
    %v2918 = vpack.c.b16 %v2910, %v2906
    %v2928 = vsel %vm408, %v2604, 0
    %2930 = vmatprep.subr.bf16.mxu0 0
    %2931 = vmatpush1.bf16.msra.mxu0 0
    %2932 = vmatprep.subr.bf16.mxu0 0
    %2933 = vmatpush1.bf16.msra.mxu0 0
    %2934 = vmatprep.subr.bf16.mxu0 0
    %2935 = vmatpush1.bf16.msra.mxu0 0
    %2936 = vmatprep.subr.bf16.mxu0 0
    %2937 = vmatpush1.bf16.msra.mxu0 0
    %2938 = vmatprep.subr.bf16.mxu0 0
    %2939 = vmatpush1.bf16.msra.mxu0 0
    %2940 = vmatprep.subr.bf16.mxu0 0
    %2941 = vmatpush1.bf16.msra.mxu0 0
    %2942 = vmatprep.subr.bf16.mxu0 %v2916
    %2943 = vmatpush1.bf16.msra.mxu0 %v2915
    %2944 = vmatprep.subr.bf16.mxu0 %v2912
    %2945 = vmatpush1.bf16.msra.mxu0 %v2911
    %2946 = vmatprep.subr.bf16.mxu0 0
    %2947 = vmatpush2.bf16.msra.mxu0 0
    %2948 = vmatprep.subr.bf16.mxu0 0
    %2949 = vmatpush2.bf16.msra.mxu0 0
    %2950 = vmatprep.subr.bf16.mxu0 0
    %2951 = vmatpush2.bf16.msra.mxu0 0
    %2952 = vmatprep.subr.bf16.mxu0 0
    %2953 = vmatpush2.bf16.msra.mxu0 0
    %2954 = vmatprep.subr.bf16.mxu0 0
    %2955 = vmatpush2.bf16.msra.mxu0 0
    %2956 = vmatprep.subr.bf16.mxu0 0
    %2957 = vmatpush2.bf16.msra.mxu0 0
    %2958 = vmatprep.subr.bf16.mxu0 0
    %2959 = vmatpush2.bf16.msra.mxu0 0
    %2960 = vmatprep.subr.bf16.mxu0 0
    %2961 = vmatpush2.bf16.msra.mxu0 0
    %2962 = vmatprep.mubr.bf16.mxu0 0
    %2963 = vmatmul.mubr.bf16.gmra.mxu0 %v2928
    %v2964 = vpop.f32.mrf.mxu0
    %v2965 = vadd.f32 %v2840, %v2964
    %v2966 = vpop.f32.mrf.mxu0
    %v2967 = vadd.f32 %v2842, %v2966
    %v2968 = vpop.f32.mrf.mxu0
    %v2969 = vpop.f32.mrf.mxu0
    %2970 = vdwg.mxu0
    %2971 = vmatprep.subr.bf16.mxu0 0
    %2972 = vmatpush1.bf16.msra.mxu0 0
    %2973 = vmatprep.subr.bf16.mxu0 0
    %2974 = vmatpush1.bf16.msra.mxu0 0
    %2975 = vmatprep.subr.bf16.mxu0 0
    %2976 = vmatpush1.bf16.msra.mxu0 0
    %2977 = vmatprep.subr.bf16.mxu0 0
    %2978 = vmatpush1.bf16.msra.mxu0 0
    %2979 = vmatprep.subr.bf16.mxu0 0
    %2980 = vmatpush1.bf16.msra.mxu0 0
    %2981 = vmatprep.subr.bf16.mxu0 0
    %2982 = vmatpush1.bf16.msra.mxu0 0
    %2983 = vmatprep.subr.bf16.mxu0 %v2918
    %2984 = vmatpush1.bf16.msra.mxu0 %v2917
    %2985 = vmatprep.subr.bf16.mxu0 %v2914
    %2986 = vmatpush1.bf16.msra.mxu0 %v2913
    %2987 = vmatprep.subr.bf16.mxu0 0
    %2988 = vmatpush2.bf16.msra.mxu0 0
    %2989 = vmatprep.subr.bf16.mxu0 0
    %2990 = vmatpush2.bf16.msra.mxu0 0
    %2991 = vmatprep.subr.bf16.mxu0 0
    %2992 = vmatpush2.bf16.msra.mxu0 0
    %2993 = vmatprep.subr.bf16.mxu0 0
    %2994 = vmatpush2.bf16.msra.mxu0 0
    %2995 = vmatprep.subr.bf16.mxu0 0
    %2996 = vmatpush2.bf16.msra.mxu0 0
    %2997 = vmatprep.subr.bf16.mxu0 0
    %2998 = vmatpush2.bf16.msra.mxu0 0
    %2999 = vmatprep.subr.bf16.mxu0 0
    %3000 = vmatpush2.bf16.msra.mxu0 0
    %3001 = vmatprep.subr.bf16.mxu0 0
    %3002 = vmatpush2.bf16.msra.mxu0 0
    %3003 = vmatprep.mubr.bf16.mxu0 0
    %3004 = vmatmul.mubr.bf16.gmra.mxu0 %v2928
    %v3005 = vpop.f32.mrf.mxu0
    %v3006 = vadd.f32 %v2881, %v3005
    %v3007 = vpop.f32.mrf.mxu0
    %v3008 = vadd.f32 %v2883, %v3007
    %v3009 = vpop.f32.mrf.mxu0
    %v3010 = vpop.f32.mrf.mxu0
    %3011 = vdwg.mxu0
    %v3012 = vld [vmem:[#allocation7] sm:$0xf]
    %v3014 = vlaneseq
    %v3015 = vshrl.u32 %v3014, 7
    %v3016 = vsub.s32 0, %v3015
    %v3017 = vrot.slane %v3012, %v3016
    %v3018 = vlaneseq
    %v3019 = vshrl.u32 %v3018, 7
    %v3020 = vsub.s32 1, %v3019
    %v3021 = vrot.slane %v3012, %v3020
    %v3022 = vlaneseq
    %v3023 = vshrl.u32 %v3022, 7
    %v3024 = vsub.s32 2, %v3023
    %v3025 = vrot.slane %v3012, %v3024
    %v3026 = vlaneseq
    %v3027 = vshrl.u32 %v3026, 7
    %v3028 = vsub.s32 3, %v3027
    %v3029 = vrot.slane %v3012, %v3028
    %v3034 = vadd.f32 %v2965, %v3017
    %v3035 = vadd.f32 %v2967, %v3021
    %v3036 = vadd.f32 %v3006, %v3025
    %v3037 = vadd.f32 %v3008, %v3029
    %v3038 = vxor.u32 %v3034, 2147483648
    %v3039 = vmul.f32 %v3038, 1.442695
    %v3040 = vpow.pop %v3039
    %v3041 = vadd.f32 %v3040, 1.0
    %v3042 = vrcp.pop %v3041
    %v3043 = vmul.f32 1.0, %v3042
    %v3044 = vxor.u32 %v3035, 2147483648
    %v3045 = vmul.f32 %v3044, 1.442695
    %v3046 = vpow.pop %v3045
    %v3047 = vadd.f32 %v3046, 1.0
    %v3048 = vrcp.pop %v3047
    %v3049 = vmul.f32 1.0, %v3048
    %v3050 = vtanh.pop %v3036
    %v3051 = vxor.u32 %v3037, 2147483648
    %v3052 = vmul.f32 %v3051, 1.442695
    %v3053 = vpow.pop %v3052
    %v3054 = vadd.f32 %v3053, 1.0
    %v3055 = vrcp.pop %v3054
    %v3056 = vmul.f32 1.0, %v3055
    %v3057 = vmul.f32 %v3049, %v2555
    %v3058 = vmul.f32 %v3043, %v3050
    %v3059 = vadd.f32 %v3057, %v3058
    %v3060 = vtanh.pop %v3059
    %v3061 = vmul.f32 %v3056, %v3060
    %v3062 = vpack.c.bf16 %v3061, %v3061
    %v3065 = vunpack.c.l.s4 1966171168
    %v3066 = vunpack.c.0.s8 %v3065
    %v3067 = vlaneseq
    %v3068 = vshrl.u32 %v3067, 7
    %v3069 = vsub.s32 %v3066, %v3068
    %v3070 = vrot.slane %v3062, %v3069
    %v3072 = vunpack.c.l.s4 1966171168
    %v3073 = vunpack.c.0.s8 %v3072
    %v3074 = vlaneseq
    %v3075 = vshrl.u32 %v3074, 7
    %v3076 = vsub.s32 %v3073, %v3075
    %v3077 = vrot.slane %v3070, %v3076
    %v3078 = vunpack.i.l.s16 %v3077
    %v3079 = vunpack.i.h.s16 %v3077
    %v3080 = vpack.i.b16 %v3078, %v3078
    %v3081 = vpack.i.b16 %v3079, %v3079
    %v3083 = vunpack.c.l.s4 286326784
    %v3084 = vunpack.c.0.s8 %v3083
    %v3085 = vlaneseq
    %v3086 = vshrl.u32 %v3085, 7
    %v3087 = vsub.s32 %v3084, %v3086
    %v3088 = vrot.slane %v3080, %v3087
    %v3090 = vunpack.c.l.s4 286326784
    %v3091 = vunpack.c.0.s8 %v3090
    %v3092 = vlaneseq
    %v3093 = vshrl.u32 %v3092, 7
    %v3094 = vsub.s32 %v3091, %v3093
    %v3095 = vrot.slane %v3081, %v3094
    %vm3098 = vsmask.f32 7946
    %vm3099 = vmand %vm2594, %vm3098
    %v3100 = vld [vmem:[#allocation10] sm:$0x4]
    %v3101 = vsel %vm3099, %v3088, %v3100
    %3102 = vst [vmem:[#allocation10] sm:$0x4] %v3101
    %v3103 = vld [vmem:[#allocation10 + $0x4] sm:$0x4]
    %v3104 = vsel %vm3099, %v3095, %v3103
    %3105 = vst [vmem:[#allocation10 + $0x4] sm:$0x4] %v3104
    %s3106 = scalar_lea.vmem [#allocation2], 6
    %v3107 = vld [vmem:[%s3106] sm:$0x1]
    %v3108 = vld [vmem:[#allocation5] sm:$0xff]
    %v3109 = vld [vmem:[#allocation5 + $0x8] sm:$0xff]
    %v3110 = vld [vmem:[#allocation5 + $0x10] sm:$0xff]
    %v3111 = vld [vmem:[#allocation5 + $0x18] sm:$0xff]
    %v3112 = vld [vmem:[#allocation5 + $0x20] sm:$0xff]
    %v3113 = vld [vmem:[#allocation5 + $0x28] sm:$0xff]
    %v3114 = vld [vmem:[#allocation5 + $0x30] sm:$0xff]
    %v3115 = vld [vmem:[#allocation5 + $0x38] sm:$0xff]
    %v3116 = vld [vmem:[#allocation8] sm:$0xff]
    %v3117 = vld [vmem:[#allocation8 + $0x8] sm:$0xff]
    %v3118 = vld [vmem:[#allocation8 + $0x10] sm:$0xff]
    %v3119 = vld [vmem:[#allocation8 + $0x18] sm:$0xff]
    %v3120 = vld [vmem:[#allocation8 + $0x20] sm:$0xff]
    %v3121 = vld [vmem:[#allocation8 + $0x28] sm:$0xff]
    %v3122 = vld [vmem:[#allocation8 + $0x30] sm:$0xff]
    %v3123 = vld [vmem:[#allocation8 + $0x38] sm:$0xff]
    %v3124 = vld [vmem:[#allocation8 + $0x40] sm:$0xff]
    %v3125 = vld [vmem:[#allocation8 + $0x48] sm:$0xff]
    %v3126 = vld [vmem:[#allocation8 + $0x50] sm:$0xff]
    %v3127 = vld [vmem:[#allocation8 + $0x58] sm:$0xff]
    %v3128 = vld [vmem:[#allocation8 + $0x60] sm:$0xff]
    %v3129 = vld [vmem:[#allocation8 + $0x68] sm:$0xff]
    %v3130 = vld [vmem:[#allocation8 + $0x70] sm:$0xff]
    %v3131 = vld [vmem:[#allocation8 + $0x78] sm:$0xff]
    %v3132 = vld [vmem:[#allocation8 + $0x80] sm:$0xff]
    %v3133 = vld [vmem:[#allocation8 + $0x88] sm:$0xff]
    %v3134 = vld [vmem:[#allocation8 + $0x90] sm:$0xff]
    %v3135 = vld [vmem:[#allocation8 + $0x98] sm:$0xff]
    %v3136 = vld [vmem:[#allocation8 + $0xa0] sm:$0xff]
    %v3137 = vld [vmem:[#allocation8 + $0xa8] sm:$0xff]
    %v3138 = vld [vmem:[#allocation8 + $0xb0] sm:$0xff]
    %v3139 = vld [vmem:[#allocation8 + $0xb8] sm:$0xff]
    %v3140 = vld [vmem:[#allocation8 + $0xc0] sm:$0xff]
    %v3141 = vld [vmem:[#allocation8 + $0xc8] sm:$0xff]
    %v3142 = vld [vmem:[#allocation8 + $0xd0] sm:$0xff]
    %v3143 = vld [vmem:[#allocation8 + $0xd8] sm:$0xff]
    %v3144 = vld [vmem:[#allocation8 + $0xe0] sm:$0xff]
    %v3145 = vld [vmem:[#allocation8 + $0xe8] sm:$0xff]
    %v3146 = vld [vmem:[#allocation8 + $0xf0] sm:$0xff]
    %v3147 = vld [vmem:[#allocation8 + $0xf8] sm:$0xff]
    %v3180 = vunpack.c.l.b16 %v3116
    %v3181 = vunpack.c.h.b16 %v3116
    %v3182 = vunpack.c.l.b16 %v3117
    %v3183 = vunpack.c.h.b16 %v3117
    %v3184 = vunpack.c.l.b16 %v3118
    %v3185 = vunpack.c.h.b16 %v3118
    %v3186 = vunpack.c.l.b16 %v3119
    %v3187 = vunpack.c.h.b16 %v3119
    %v3188 = vunpack.c.l.b16 %v3120
    %v3189 = vunpack.c.h.b16 %v3120
    %v3190 = vunpack.c.l.b16 %v3121
    %v3191 = vunpack.c.h.b16 %v3121
    %v3192 = vunpack.c.l.b16 %v3122
    %v3193 = vunpack.c.h.b16 %v3122
    %v3194 = vunpack.c.l.b16 %v3123
    %v3195 = vunpack.c.h.b16 %v3123
    %v3196 = vunpack.c.l.b16 %v3124
    %v3197 = vunpack.c.h.b16 %v3124
    %v3198 = vunpack.c.l.b16 %v3125
    %v3199 = vunpack.c.h.b16 %v3125
    %v3200 = vunpack.c.l.b16 %v3126
    %v3201 = vunpack.c.h.b16 %v3126
    %v3202 = vunpack.c.l.b16 %v3127
    %v3203 = vunpack.c.h.b16 %v3127
    %v3204 = vunpack.c.l.b16 %v3128
    %v3205 = vunpack.c.h.b16 %v3128
    %v3206 = vunpack.c.l.b16 %v3129
    %v3207 = vunpack.c.h.b16 %v3129
    %v3208 = vunpack.c.l.b16 %v3130
    %v3209 = vunpack.c.h.b16 %v3130
    %v3210 = vunpack.c.l.b16 %v3131
    %v3211 = vunpack.c.h.b16 %v3131
    %v3212 = vunpack.c.l.b16 %v3132
    %v3213 = vunpack.c.h.b16 %v3132
    %v3214 = vunpack.c.l.b16 %v3133
    %v3215 = vunpack.c.h.b16 %v3133
    %v3216 = vunpack.c.l.b16 %v3134
    %v3217 = vunpack.c.h.b16 %v3134
    %v3218 = vunpack.c.l.b16 %v3135
    %v3219 = vunpack.c.h.b16 %v3135
    %v3220 = vunpack.c.l.b16 %v3136
    %v3221 = vunpack.c.h.b16 %v3136
    %v3222 = vunpack.c.l.b16 %v3137
    %v3223 = vunpack.c.h.b16 %v3137
    %v3224 = vunpack.c.l.b16 %v3138
    %v3225 = vunpack.c.h.b16 %v3138
    %v3226 = vunpack.c.l.b16 %v3139
    %v3227 = vunpack.c.h.b16 %v3139
    %v3228 = vunpack.c.l.b16 %v3140
    %v3229 = vunpack.c.h.b16 %v3140
    %v3230 = vunpack.c.l.b16 %v3141
    %v3231 = vunpack.c.h.b16 %v3141
    %v3232 = vunpack.c.l.b16 %v3142
    %v3233 = vunpack.c.h.b16 %v3142
    %v3234 = vunpack.c.l.b16 %v3143
    %v3235 = vunpack.c.h.b16 %v3143
    %v3236 = vunpack.c.l.b16 %v3144
    %v3237 = vunpack.c.h.b16 %v3144
    %v3238 = vunpack.c.l.b16 %v3145
    %v3239 = vunpack.c.h.b16 %v3145
    %v3240 = vunpack.c.l.b16 %v3146
    %v3241 = vunpack.c.h.b16 %v3146
    %v3242 = vunpack.c.l.b16 %v3147
    %v3243 = vunpack.c.h.b16 %v3147
    %v3244 = vpack.c.b16 %v3184, %v3180
    %v3245 = vpack.c.b16 %v3185, %v3181
    %v3246 = vpack.c.b16 %v3186, %v3182
    %v3247 = vpack.c.b16 %v3187, %v3183
    %v3248 = vpack.c.b16 %v3192, %v3188
    %v3249 = vpack.c.b16 %v3193, %v3189
    %v3250 = vpack.c.b16 %v3194, %v3190
    %v3251 = vpack.c.b16 %v3195, %v3191
    %v3252 = vpack.c.b16 %v3200, %v3196
    %v3253 = vpack.c.b16 %v3201, %v3197
    %v3254 = vpack.c.b16 %v3202, %v3198
    %v3255 = vpack.c.b16 %v3203, %v3199
    %v3256 = vpack.c.b16 %v3208, %v3204
    %v3257 = vpack.c.b16 %v3209, %v3205
    %v3258 = vpack.c.b16 %v3210, %v3206
    %v3259 = vpack.c.b16 %v3211, %v3207
    %v3260 = vpack.c.b16 %v3216, %v3212
    %v3261 = vpack.c.b16 %v3217, %v3213
    %v3262 = vpack.c.b16 %v3218, %v3214
    %v3263 = vpack.c.b16 %v3219, %v3215
    %v3264 = vpack.c.b16 %v3224, %v3220
    %v3265 = vpack.c.b16 %v3225, %v3221
    %v3266 = vpack.c.b16 %v3226, %v3222
    %v3267 = vpack.c.b16 %v3227, %v3223
    %v3268 = vpack.c.b16 %v3232, %v3228
    %v3269 = vpack.c.b16 %v3233, %v3229
    %v3270 = vpack.c.b16 %v3234, %v3230
    %v3271 = vpack.c.b16 %v3235, %v3231
    %v3272 = vpack.c.b16 %v3240, %v3236
    %v3273 = vpack.c.b16 %v3241, %v3237
    %v3274 = vpack.c.b16 %v3242, %v3238
    %v3275 = vpack.c.b16 %v3243, %v3239
    %3308 = vmatprep.subr.bf16.mxu0 %v3273
    %3309 = vmatpush1.bf16.msra.mxu0 %v3272
    %3310 = vmatprep.subr.bf16.mxu0 %v3269
    %3311 = vmatpush1.bf16.msra.mxu0 %v3268
    %3312 = vmatprep.subr.bf16.mxu0 %v3265
    %3313 = vmatpush1.bf16.msra.mxu0 %v3264
    %3314 = vmatprep.subr.bf16.mxu0 %v3261
    %3315 = vmatpush1.bf16.msra.mxu0 %v3260
    %3316 = vmatprep.subr.bf16.mxu0 %v3257
    %3317 = vmatpush1.bf16.msra.mxu0 %v3256
    %3318 = vmatprep.subr.bf16.mxu0 %v3253
    %3319 = vmatpush1.bf16.msra.mxu0 %v3252
    %3320 = vmatprep.subr.bf16.mxu0 %v3249
    %3321 = vmatpush1.bf16.msra.mxu0 %v3248
    %3322 = vmatprep.subr.bf16.mxu0 %v3245
    %3323 = vmatpush1.bf16.msra.mxu0 %v3244
    %3324 = vmatprep.subr.bf16.mxu0 0
    %3325 = vmatpush2.bf16.msra.mxu0 0
    %3326 = vmatprep.subr.bf16.mxu0 0
    %3327 = vmatpush2.bf16.msra.mxu0 0
    %3328 = vmatprep.subr.bf16.mxu0 0
    %3329 = vmatpush2.bf16.msra.mxu0 0
    %3330 = vmatprep.subr.bf16.mxu0 0
    %3331 = vmatpush2.bf16.msra.mxu0 0
    %3332 = vmatprep.subr.bf16.mxu0 0
    %3333 = vmatpush2.bf16.msra.mxu0 0
    %3334 = vmatprep.subr.bf16.mxu0 0
    %3335 = vmatpush2.bf16.msra.mxu0 0
    %3336 = vmatprep.subr.bf16.mxu0 0
    %3337 = vmatpush2.bf16.msra.mxu0 0
    %3338 = vmatprep.subr.bf16.mxu0 0
    %3339 = vmatpush2.bf16.msra.mxu0 0
    %3340 = vmatprep.mubr.bf16.mxu0 0
    %3341 = vmatmul.mubr.bf16.gmra.mxu0 %v3062
    %v3342 = vpop.f32.mrf.mxu0
    %v3343 = vadd.f32 0.0, %v3342
    %v3344 = vpop.f32.mrf.mxu0
    %v3345 = vadd.f32 0.0, %v3344
    %v3346 = vpop.f32.mrf.mxu0
    %v3347 = vpop.f32.mrf.mxu0
    %3348 = vdwg.mxu0
    %3349 = vmatprep.subr.bf16.mxu0 %v3275
    %3350 = vmatpush1.bf16.msra.mxu0 %v3274
    %3351 = vmatprep.subr.bf16.mxu0 %v3271
    %3352 = vmatpush1.bf16.msra.mxu0 %v3270
    %3353 = vmatprep.subr.bf16.mxu0 %v3267
    %3354 = vmatpush1.bf16.msra.mxu0 %v3266
    %3355 = vmatprep.subr.bf16.mxu0 %v3263
    %3356 = vmatpush1.bf16.msra.mxu0 %v3262
    %3357 = vmatprep.subr.bf16.mxu0 %v3259
    %3358 = vmatpush1.bf16.msra.mxu0 %v3258
    %3359 = vmatprep.subr.bf16.mxu0 %v3255
    %3360 = vmatpush1.bf16.msra.mxu0 %v3254
    %3361 = vmatprep.subr.bf16.mxu0 %v3251
    %3362 = vmatpush1.bf16.msra.mxu0 %v3250
    %3363 = vmatprep.subr.bf16.mxu0 %v3247
    %3364 = vmatpush1.bf16.msra.mxu0 %v3246
    %3365 = vmatprep.subr.bf16.mxu0 0
    %3366 = vmatpush2.bf16.msra.mxu0 0
    %3367 = vmatprep.subr.bf16.mxu0 0
    %3368 = vmatpush2.bf16.msra.mxu0 0
    %3369 = vmatprep.subr.bf16.mxu0 0
    %3370 = vmatpush2.bf16.msra.mxu0 0
    %3371 = vmatprep.subr.bf16.mxu0 0
    %3372 = vmatpush2.bf16.msra.mxu0 0
    %3373 = vmatprep.subr.bf16.mxu0 0
    %3374 = vmatpush2.bf16.msra.mxu0 0
    %3375 = vmatprep.subr.bf16.mxu0 0
    %3376 = vmatpush2.bf16.msra.mxu0 0
    %3377 = vmatprep.subr.bf16.mxu0 0
    %3378 = vmatpush2.bf16.msra.mxu0 0
    %3379 = vmatprep.subr.bf16.mxu0 0
    %3380 = vmatpush2.bf16.msra.mxu0 0
    %3381 = vmatprep.mubr.bf16.mxu0 0
    %3382 = vmatmul.mubr.bf16.gmra.mxu0 %v3062
    %v3383 = vpop.f32.mrf.mxu0
    %v3384 = vadd.f32 0.0, %v3383
    %v3385 = vpop.f32.mrf.mxu0
    %v3386 = vadd.f32 0.0, %v3385
    %v3387 = vpop.f32.mrf.mxu0
    %v3388 = vpop.f32.mrf.mxu0
    %3389 = vdwg.mxu0
    %v3398 = vunpack.c.l.b16 %v3108
    %v3399 = vunpack.c.h.b16 %v3108
    %v3400 = vunpack.c.l.b16 %v3109
    %v3401 = vunpack.c.h.b16 %v3109
    %v3402 = vunpack.c.l.b16 %v3110
    %v3403 = vunpack.c.h.b16 %v3110
    %v3404 = vunpack.c.l.b16 %v3111
    %v3405 = vunpack.c.h.b16 %v3111
    %v3406 = vunpack.c.l.b16 %v3112
    %v3407 = vunpack.c.h.b16 %v3112
    %v3408 = vunpack.c.l.b16 %v3113
    %v3409 = vunpack.c.h.b16 %v3113
    %v3410 = vunpack.c.l.b16 %v3114
    %v3411 = vunpack.c.h.b16 %v3114
    %v3412 = vunpack.c.l.b16 %v3115
    %v3413 = vunpack.c.h.b16 %v3115
    %v3414 = vpack.c.b16 %v3402, %v3398
    %v3415 = vpack.c.b16 %v3403, %v3399
    %v3416 = vpack.c.b16 %v3404, %v3400
    %v3417 = vpack.c.b16 %v3405, %v3401
    %v3418 = vpack.c.b16 %v3410, %v3406
    %v3419 = vpack.c.b16 %v3411, %v3407
    %v3420 = vpack.c.b16 %v3412, %v3408
    %v3421 = vpack.c.b16 %v3413, %v3409
    %v3431 = vsel %vm408, %v3107, 0
    %3433 = vmatprep.subr.bf16.mxu0 0
    %3434 = vmatpush1.bf16.msra.mxu0 0
    %3435 = vmatprep.subr.bf16.mxu0 0
    %3436 = vmatpush1.bf16.msra.mxu0 0
    %3437 = vmatprep.subr.bf16.mxu0 0
    %3438 = vmatpush1.bf16.msra.mxu0 0
    %3439 = vmatprep.subr.bf16.mxu0 0
    %3440 = vmatpush1.bf16.msra.mxu0 0
    %3441 = vmatprep.subr.bf16.mxu0 0
    %3442 = vmatpush1.bf16.msra.mxu0 0
    %3443 = vmatprep.subr.bf16.mxu0 0
    %3444 = vmatpush1.bf16.msra.mxu0 0
    %3445 = vmatprep.subr.bf16.mxu0 %v3419
    %3446 = vmatpush1.bf16.msra.mxu0 %v3418
    %3447 = vmatprep.subr.bf16.mxu0 %v3415
    %3448 = vmatpush1.bf16.msra.mxu0 %v3414
    %3449 = vmatprep.subr.bf16.mxu0 0
    %3450 = vmatpush2.bf16.msra.mxu0 0
    %3451 = vmatprep.subr.bf16.mxu0 0
    %3452 = vmatpush2.bf16.msra.mxu0 0
    %3453 = vmatprep.subr.bf16.mxu0 0
    %3454 = vmatpush2.bf16.msra.mxu0 0
    %3455 = vmatprep.subr.bf16.mxu0 0
    %3456 = vmatpush2.bf16.msra.mxu0 0
    %3457 = vmatprep.subr.bf16.mxu0 0
    %3458 = vmatpush2.bf16.msra.mxu0 0
    %3459 = vmatprep.subr.bf16.mxu0 0
    %3460 = vmatpush2.bf16.msra.mxu0 0
    %3461 = vmatprep.subr.bf16.mxu0 0
    %3462 = vmatpush2.bf16.msra.mxu0 0
    %3463 = vmatprep.subr.bf16.mxu0 0
    %3464 = vmatpush2.bf16.msra.mxu0 0
    %3465 = vmatprep.mubr.bf16.mxu0 0
    %3466 = vmatmul.mubr.bf16.gmra.mxu0 %v3431
    %v3467 = vpop.f32.mrf.mxu0
    %v3468 = vadd.f32 %v3343, %v3467
    %v3469 = vpop.f32.mrf.mxu0
    %v3470 = vadd.f32 %v3345, %v3469
    %v3471 = vpop.f32.mrf.mxu0
    %v3472 = vpop.f32.mrf.mxu0
    %3473 = vdwg.mxu0
    %3474 = vmatprep.subr.bf16.mxu0 0
    %3475 = vmatpush1.bf16.msra.mxu0 0
    %3476 = vmatprep.subr.bf16.mxu0 0
    %3477 = vmatpush1.bf16.msra.mxu0 0
    %3478 = vmatprep.subr.bf16.mxu0 0
    %3479 = vmatpush1.bf16.msra.mxu0 0
    %3480 = vmatprep.subr.bf16.mxu0 0
    %3481 = vmatpush1.bf16.msra.mxu0 0
    %3482 = vmatprep.subr.bf16.mxu0 0
    %3483 = vmatpush1.bf16.msra.mxu0 0
    %3484 = vmatprep.subr.bf16.mxu0 0
    %3485 = vmatpush1.bf16.msra.mxu0 0
    %3486 = vmatprep.subr.bf16.mxu0 %v3421
    %3487 = vmatpush1.bf16.msra.mxu0 %v3420
    %3488 = vmatprep.subr.bf16.mxu0 %v3417
    %3489 = vmatpush1.bf16.msra.mxu0 %v3416
    %3490 = vmatprep.subr.bf16.mxu0 0
    %3491 = vmatpush2.bf16.msra.mxu0 0
    %3492 = vmatprep.subr.bf16.mxu0 0
    %3493 = vmatpush2.bf16.msra.mxu0 0
    %3494 = vmatprep.subr.bf16.mxu0 0
    %3495 = vmatpush2.bf16.msra.mxu0 0
    %3496 = vmatprep.subr.bf16.mxu0 0
    %3497 = vmatpush2.bf16.msra.mxu0 0
    %3498 = vmatprep.subr.bf16.mxu0 0
    %3499 = vmatpush2.bf16.msra.mxu0 0
    %3500 = vmatprep.subr.bf16.mxu0 0
    %3501 = vmatpush2.bf16.msra.mxu0 0
    %3502 = vmatprep.subr.bf16.mxu0 0
    %3503 = vmatpush2.bf16.msra.mxu0 0
    %3504 = vmatprep.subr.bf16.mxu0 0
    %3505 = vmatpush2.bf16.msra.mxu0 0
    %3506 = vmatprep.mubr.bf16.mxu0 0
    %3507 = vmatmul.mubr.bf16.gmra.mxu0 %v3431
    %v3508 = vpop.f32.mrf.mxu0
    %v3509 = vadd.f32 %v3384, %v3508
    %v3510 = vpop.f32.mrf.mxu0
    %v3511 = vadd.f32 %v3386, %v3510
    %v3512 = vpop.f32.mrf.mxu0
    %v3513 = vpop.f32.mrf.mxu0
    %3514 = vdwg.mxu0
    %v3515 = vld [vmem:[#allocation7] sm:$0xf]
    %v3517 = vlaneseq
    %v3518 = vshrl.u32 %v3517, 7
    %v3519 = vsub.s32 0, %v3518
    %v3520 = vrot.slane %v3515, %v3519
    %v3521 = vlaneseq
    %v3522 = vshrl.u32 %v3521, 7
    %v3523 = vsub.s32 1, %v3522
    %v3524 = vrot.slane %v3515, %v3523
    %v3525 = vlaneseq
    %v3526 = vshrl.u32 %v3525, 7
    %v3527 = vsub.s32 2, %v3526
    %v3528 = vrot.slane %v3515, %v3527
    %v3529 = vlaneseq
    %v3530 = vshrl.u32 %v3529, 7
    %v3531 = vsub.s32 3, %v3530
    %v3532 = vrot.slane %v3515, %v3531
    %v3537 = vadd.f32 %v3468, %v3520
    %v3538 = vadd.f32 %v3470, %v3524
    %v3539 = vadd.f32 %v3509, %v3528
    %v3540 = vadd.f32 %v3511, %v3532
    %v3541 = vxor.u32 %v3537, 2147483648
    %v3542 = vmul.f32 %v3541, 1.442695
    %v3543 = vpow.pop %v3542
    %v3544 = vadd.f32 %v3543, 1.0
    %v3545 = vrcp.pop %v3544
    %v3546 = vmul.f32 1.0, %v3545
    %v3547 = vxor.u32 %v3538, 2147483648
    %v3548 = vmul.f32 %v3547, 1.442695
    %v3549 = vpow.pop %v3548
    %v3550 = vadd.f32 %v3549, 1.0
    %v3551 = vrcp.pop %v3550
    %v3552 = vmul.f32 1.0, %v3551
    %v3553 = vtanh.pop %v3539
    %v3554 = vxor.u32 %v3540, 2147483648
    %v3555 = vmul.f32 %v3554, 1.442695
    %v3556 = vpow.pop %v3555
    %v3557 = vadd.f32 %v3556, 1.0
    %v3558 = vrcp.pop %v3557
    %v3559 = vmul.f32 1.0, %v3558
    %v3560 = vmul.f32 %v3552, %v3059
    %v3561 = vmul.f32 %v3546, %v3553
    %v3562 = vadd.f32 %v3560, %v3561
    %v3563 = vtanh.pop %v3562
    %v3564 = vmul.f32 %v3559, %v3563
    %v3565 = vpack.c.bf16 %v3564, %v3564
    %v3568 = vunpack.c.l.s4 1966171168
    %v3569 = vunpack.c.0.s8 %v3568
    %v3570 = vlaneseq
    %v3571 = vshrl.u32 %v3570, 7
    %v3572 = vsub.s32 %v3569, %v3571
    %v3573 = vrot.slane %v3565, %v3572
    %v3575 = vunpack.c.l.s4 1966171168
    %v3576 = vunpack.c.0.s8 %v3575
    %v3577 = vlaneseq
    %v3578 = vshrl.u32 %v3577, 7
    %v3579 = vsub.s32 %v3576, %v3578
    %v3580 = vrot.slane %v3573, %v3579
    %v3581 = vunpack.i.l.s16 %v3580
    %v3582 = vunpack.i.h.s16 %v3580
    %v3583 = vpack.i.b16 %v3581, %v3581
    %v3584 = vpack.i.b16 %v3582, %v3582
    %v3586 = vunpack.c.l.s4 286326784
    %v3587 = vunpack.c.0.s8 %v3586
    %v3588 = vlaneseq
    %v3589 = vshrl.u32 %v3588, 7
    %v3590 = vsub.s32 %v3587, %v3589
    %v3591 = vrot.slane %v3583, %v3590
    %v3593 = vunpack.c.l.s4 286326784
    %v3594 = vunpack.c.0.s8 %v3593
    %v3595 = vlaneseq
    %v3596 = vshrl.u32 %v3595, 7
    %v3597 = vsub.s32 %v3594, %v3596
    %v3598 = vrot.slane %v3584, %v3597
    %vm3601 = vcmask 1043459
    %vm3602 = vsmask.f32 3328
    %vm3603 = vmand %vm3601, %vm3602
    %v3604 = vld [vmem:[#allocation10] sm:$0x8]
    %v3605 = vsel %vm3603, %v3591, %v3604
    %3606 = vst [vmem:[#allocation10] sm:$0x8] %v3605
    %v3607 = vld [vmem:[#allocation10 + $0x4] sm:$0x8]
    %v3608 = vsel %vm3603, %v3598, %v3607
    %3609 = vst [vmem:[#allocation10 + $0x4] sm:$0x8] %v3608
    %s3610 = scalar_lea.vmem [#allocation2], 7
    %v3611 = vld [vmem:[%s3610] sm:$0x1]
    %v3612 = vld [vmem:[#allocation5] sm:$0xff]
    %v3613 = vld [vmem:[#allocation5 + $0x8] sm:$0xff]
    %v3614 = vld [vmem:[#allocation5 + $0x10] sm:$0xff]
    %v3615 = vld [vmem:[#allocation5 + $0x18] sm:$0xff]
    %v3616 = vld [vmem:[#allocation5 + $0x20] sm:$0xff]
    %v3617 = vld [vmem:[#allocation5 + $0x28] sm:$0xff]
    %v3618 = vld [vmem:[#allocation5 + $0x30] sm:$0xff]
    %v3619 = vld [vmem:[#allocation5 + $0x38] sm:$0xff]
    %v3620 = vld [vmem:[#allocation8] sm:$0xff]
    %v3621 = vld [vmem:[#allocation8 + $0x8] sm:$0xff]
    %v3622 = vld [vmem:[#allocation8 + $0x10] sm:$0xff]
    %v3623 = vld [vmem:[#allocation8 + $0x18] sm:$0xff]
    %v3624 = vld [vmem:[#allocation8 + $0x20] sm:$0xff]
    %v3625 = vld [vmem:[#allocation8 + $0x28] sm:$0xff]
    %v3626 = vld [vmem:[#allocation8 + $0x30] sm:$0xff]
    %v3627 = vld [vmem:[#allocation8 + $0x38] sm:$0xff]
    %v3628 = vld [vmem:[#allocation8 + $0x40] sm:$0xff]
    %v3629 = vld [vmem:[#allocation8 + $0x48] sm:$0xff]
    %v3630 = vld [vmem:[#allocation8 + $0x50] sm:$0xff]
    %v3631 = vld [vmem:[#allocation8 + $0x58] sm:$0xff]
    %v3632 = vld [vmem:[#allocation8 + $0x60] sm:$0xff]
    %v3633 = vld [vmem:[#allocation8 + $0x68] sm:$0xff]
    %v3634 = vld [vmem:[#allocation8 + $0x70] sm:$0xff]
    %v3635 = vld [vmem:[#allocation8 + $0x78] sm:$0xff]
    %v3636 = vld [vmem:[#allocation8 + $0x80] sm:$0xff]
    %v3637 = vld [vmem:[#allocation8 + $0x88] sm:$0xff]
    %v3638 = vld [vmem:[#allocation8 + $0x90] sm:$0xff]
    %v3639 = vld [vmem:[#allocation8 + $0x98] sm:$0xff]
    %v3640 = vld [vmem:[#allocation8 + $0xa0] sm:$0xff]
    %v3641 = vld [vmem:[#allocation8 + $0xa8] sm:$0xff]
    %v3642 = vld [vmem:[#allocation8 + $0xb0] sm:$0xff]
    %v3643 = vld [vmem:[#allocation8 + $0xb8] sm:$0xff]
    %v3644 = vld [vmem:[#allocation8 + $0xc0] sm:$0xff]
    %v3645 = vld [vmem:[#allocation8 + $0xc8] sm:$0xff]
    %v3646 = vld [vmem:[#allocation8 + $0xd0] sm:$0xff]
    %v3647 = vld [vmem:[#allocation8 + $0xd8] sm:$0xff]
    %v3648 = vld [vmem:[#allocation8 + $0xe0] sm:$0xff]
    %v3649 = vld [vmem:[#allocation8 + $0xe8] sm:$0xff]
    %v3650 = vld [vmem:[#allocation8 + $0xf0] sm:$0xff]
    %v3651 = vld [vmem:[#allocation8 + $0xf8] sm:$0xff]
    %v3684 = vunpack.c.l.b16 %v3620
    %v3685 = vunpack.c.h.b16 %v3620
    %v3686 = vunpack.c.l.b16 %v3621
    %v3687 = vunpack.c.h.b16 %v3621
    %v3688 = vunpack.c.l.b16 %v3622
    %v3689 = vunpack.c.h.b16 %v3622
    %v3690 = vunpack.c.l.b16 %v3623
    %v3691 = vunpack.c.h.b16 %v3623
    %v3692 = vunpack.c.l.b16 %v3624
    %v3693 = vunpack.c.h.b16 %v3624
    %v3694 = vunpack.c.l.b16 %v3625
    %v3695 = vunpack.c.h.b16 %v3625
    %v3696 = vunpack.c.l.b16 %v3626
    %v3697 = vunpack.c.h.b16 %v3626
    %v3698 = vunpack.c.l.b16 %v3627
    %v3699 = vunpack.c.h.b16 %v3627
    %v3700 = vunpack.c.l.b16 %v3628
    %v3701 = vunpack.c.h.b16 %v3628
    %v3702 = vunpack.c.l.b16 %v3629
    %v3703 = vunpack.c.h.b16 %v3629
    %v3704 = vunpack.c.l.b16 %v3630
    %v3705 = vunpack.c.h.b16 %v3630
    %v3706 = vunpack.c.l.b16 %v3631
    %v3707 = vunpack.c.h.b16 %v3631
    %v3708 = vunpack.c.l.b16 %v3632
    %v3709 = vunpack.c.h.b16 %v3632
    %v3710 = vunpack.c.l.b16 %v3633
    %v3711 = vunpack.c.h.b16 %v3633
    %v3712 = vunpack.c.l.b16 %v3634
    %v3713 = vunpack.c.h.b16 %v3634
    %v3714 = vunpack.c.l.b16 %v3635
    %v3715 = vunpack.c.h.b16 %v3635
    %v3716 = vunpack.c.l.b16 %v3636
    %v3717 = vunpack.c.h.b16 %v3636
    %v3718 = vunpack.c.l.b16 %v3637
    %v3719 = vunpack.c.h.b16 %v3637
    %v3720 = vunpack.c.l.b16 %v3638
    %v3721 = vunpack.c.h.b16 %v3638
    %v3722 = vunpack.c.l.b16 %v3639
    %v3723 = vunpack.c.h.b16 %v3639
    %v3724 = vunpack.c.l.b16 %v3640
    %v3725 = vunpack.c.h.b16 %v3640
    %v3726 = vunpack.c.l.b16 %v3641
    %v3727 = vunpack.c.h.b16 %v3641
    %v3728 = vunpack.c.l.b16 %v3642
    %v3729 = vunpack.c.h.b16 %v3642
    %v3730 = vunpack.c.l.b16 %v3643
    %v3731 = vunpack.c.h.b16 %v3643
    %v3732 = vunpack.c.l.b16 %v3644
    %v3733 = vunpack.c.h.b16 %v3644
    %v3734 = vunpack.c.l.b16 %v3645
    %v3735 = vunpack.c.h.b16 %v3645
    %v3736 = vunpack.c.l.b16 %v3646
    %v3737 = vunpack.c.h.b16 %v3646
    %v3738 = vunpack.c.l.b16 %v3647
    %v3739 = vunpack.c.h.b16 %v3647
    %v3740 = vunpack.c.l.b16 %v3648
    %v3741 = vunpack.c.h.b16 %v3648
    %v3742 = vunpack.c.l.b16 %v3649
    %v3743 = vunpack.c.h.b16 %v3649
    %v3744 = vunpack.c.l.b16 %v3650
    %v3745 = vunpack.c.h.b16 %v3650
    %v3746 = vunpack.c.l.b16 %v3651
    %v3747 = vunpack.c.h.b16 %v3651
    %v3748 = vpack.c.b16 %v3688, %v3684
    %v3749 = vpack.c.b16 %v3689, %v3685
    %v3750 = vpack.c.b16 %v3690, %v3686
    %v3751 = vpack.c.b16 %v3691, %v3687
    %v3752 = vpack.c.b16 %v3696, %v3692
    %v3753 = vpack.c.b16 %v3697, %v3693
    %v3754 = vpack.c.b16 %v3698, %v3694
    %v3755 = vpack.c.b16 %v3699, %v3695
    %v3756 = vpack.c.b16 %v3704, %v3700
    %v3757 = vpack.c.b16 %v3705, %v3701
    %v3758 = vpack.c.b16 %v3706, %v3702
    %v3759 = vpack.c.b16 %v3707, %v3703
    %v3760 = vpack.c.b16 %v3712, %v3708
    %v3761 = vpack.c.b16 %v3713, %v3709
    %v3762 = vpack.c.b16 %v3714, %v3710
    %v3763 = vpack.c.b16 %v3715, %v3711
    %v3764 = vpack.c.b16 %v3720, %v3716
    %v3765 = vpack.c.b16 %v3721, %v3717
    %v3766 = vpack.c.b16 %v3722, %v3718
    %v3767 = vpack.c.b16 %v3723, %v3719
    %v3768 = vpack.c.b16 %v3728, %v3724
    %v3769 = vpack.c.b16 %v3729, %v3725
    %v3770 = vpack.c.b16 %v3730, %v3726
    %v3771 = vpack.c.b16 %v3731, %v3727
    %v3772 = vpack.c.b16 %v3736, %v3732
    %v3773 = vpack.c.b16 %v3737, %v3733
    %v3774 = vpack.c.b16 %v3738, %v3734
    %v3775 = vpack.c.b16 %v3739, %v3735
    %v3776 = vpack.c.b16 %v3744, %v3740
    %v3777 = vpack.c.b16 %v3745, %v3741
    %v3778 = vpack.c.b16 %v3746, %v3742
    %v3779 = vpack.c.b16 %v3747, %v3743
    %3812 = vmatprep.subr.bf16.mxu0 %v3777
    %3813 = vmatpush1.bf16.msra.mxu0 %v3776
    %3814 = vmatprep.subr.bf16.mxu0 %v3773
    %3815 = vmatpush1.bf16.msra.mxu0 %v3772
    %3816 = vmatprep.subr.bf16.mxu0 %v3769
    %3817 = vmatpush1.bf16.msra.mxu0 %v3768
    %3818 = vmatprep.subr.bf16.mxu0 %v3765
    %3819 = vmatpush1.bf16.msra.mxu0 %v3764
    %3820 = vmatprep.subr.bf16.mxu0 %v3761
    %3821 = vmatpush1.bf16.msra.mxu0 %v3760
    %3822 = vmatprep.subr.bf16.mxu0 %v3757
    %3823 = vmatpush1.bf16.msra.mxu0 %v3756
    %3824 = vmatprep.subr.bf16.mxu0 %v3753
    %3825 = vmatpush1.bf16.msra.mxu0 %v3752
    %3826 = vmatprep.subr.bf16.mxu0 %v3749
    %3827 = vmatpush1.bf16.msra.mxu0 %v3748
    %3828 = vmatprep.subr.bf16.mxu0 0
    %3829 = vmatpush2.bf16.msra.mxu0 0
    %3830 = vmatprep.subr.bf16.mxu0 0
    %3831 = vmatpush2.bf16.msra.mxu0 0
    %3832 = vmatprep.subr.bf16.mxu0 0
    %3833 = vmatpush2.bf16.msra.mxu0 0
    %3834 = vmatprep.subr.bf16.mxu0 0
    %3835 = vmatpush2.bf16.msra.mxu0 0
    %3836 = vmatprep.subr.bf16.mxu0 0
    %3837 = vmatpush2.bf16.msra.mxu0 0
    %3838 = vmatprep.subr.bf16.mxu0 0
    %3839 = vmatpush2.bf16.msra.mxu0 0
    %3840 = vmatprep.subr.bf16.mxu0 0
    %3841 = vmatpush2.bf16.msra.mxu0 0
    %3842 = vmatprep.subr.bf16.mxu0 0
    %3843 = vmatpush2.bf16.msra.mxu0 0
    %3844 = vmatprep.mubr.bf16.mxu0 0
    %3845 = vmatmul.mubr.bf16.gmra.mxu0 %v3565
    %v3846 = vpop.f32.mrf.mxu0
    %v3847 = vadd.f32 0.0, %v3846
    %v3848 = vpop.f32.mrf.mxu0
    %v3849 = vadd.f32 0.0, %v3848
    %v3850 = vpop.f32.mrf.mxu0
    %v3851 = vpop.f32.mrf.mxu0
    %3852 = vdwg.mxu0
    %3853 = vmatprep.subr.bf16.mxu0 %v3779
    %3854 = vmatpush1.bf16.msra.mxu0 %v3778
    %3855 = vmatprep.subr.bf16.mxu0 %v3775
    %3856 = vmatpush1.bf16.msra.mxu0 %v3774
    %3857 = vmatprep.subr.bf16.mxu0 %v3771
    %3858 = vmatpush1.bf16.msra.mxu0 %v3770
    %3859 = vmatprep.subr.bf16.mxu0 %v3767
    %3860 = vmatpush1.bf16.msra.mxu0 %v3766
    %3861 = vmatprep.subr.bf16.mxu0 %v3763
    %3862 = vmatpush1.bf16.msra.mxu0 %v3762
    %3863 = vmatprep.subr.bf16.mxu0 %v3759
    %3864 = vmatpush1.bf16.msra.mxu0 %v3758
    %3865 = vmatprep.subr.bf16.mxu0 %v3755
    %3866 = vmatpush1.bf16.msra.mxu0 %v3754
    %3867 = vmatprep.subr.bf16.mxu0 %v3751
    %3868 = vmatpush1.bf16.msra.mxu0 %v3750
    %3869 = vmatprep.subr.bf16.mxu0 0
    %3870 = vmatpush2.bf16.msra.mxu0 0
    %3871 = vmatprep.subr.bf16.mxu0 0
    %3872 = vmatpush2.bf16.msra.mxu0 0
    %3873 = vmatprep.subr.bf16.mxu0 0
    %3874 = vmatpush2.bf16.msra.mxu0 0
    %3875 = vmatprep.subr.bf16.mxu0 0
    %3876 = vmatpush2.bf16.msra.mxu0 0
    %3877 = vmatprep.subr.bf16.mxu0 0
    %3878 = vmatpush2.bf16.msra.mxu0 0
    %3879 = vmatprep.subr.bf16.mxu0 0
    %3880 = vmatpush2.bf16.msra.mxu0 0
    %3881 = vmatprep.subr.bf16.mxu0 0
    %3882 = vmatpush2.bf16.msra.mxu0 0
    %3883 = vmatprep.subr.bf16.mxu0 0
    %3884 = vmatpush2.bf16.msra.mxu0 0
    %3885 = vmatprep.mubr.bf16.mxu0 0
    %3886 = vmatmul.mubr.bf16.gmra.mxu0 %v3565
    %v3887 = vpop.f32.mrf.mxu0
    %v3888 = vadd.f32 0.0, %v3887
    %v3889 = vpop.f32.mrf.mxu0
    %v3890 = vadd.f32 0.0, %v3889
    %v3891 = vpop.f32.mrf.mxu0
    %v3892 = vpop.f32.mrf.mxu0
    %3893 = vdwg.mxu0
    %v3902 = vunpack.c.l.b16 %v3612
    %v3903 = vunpack.c.h.b16 %v3612
    %v3904 = vunpack.c.l.b16 %v3613
    %v3905 = vunpack.c.h.b16 %v3613
    %v3906 = vunpack.c.l.b16 %v3614
    %v3907 = vunpack.c.h.b16 %v3614
    %v3908 = vunpack.c.l.b16 %v3615
    %v3909 = vunpack.c.h.b16 %v3615
    %v3910 = vunpack.c.l.b16 %v3616
    %v3911 = vunpack.c.h.b16 %v3616
    %v3912 = vunpack.c.l.b16 %v3617
    %v3913 = vunpack.c.h.b16 %v3617
    %v3914 = vunpack.c.l.b16 %v3618
    %v3915 = vunpack.c.h.b16 %v3618
    %v3916 = vunpack.c.l.b16 %v3619
    %v3917 = vunpack.c.h.b16 %v3619
    %v3918 = vpack.c.b16 %v3906, %v3902
    %v3919 = vpack.c.b16 %v3907, %v3903
    %v3920 = vpack.c.b16 %v3908, %v3904
    %v3921 = vpack.c.b16 %v3909, %v3905
    %v3922 = vpack.c.b16 %v3914, %v3910
    %v3923 = vpack.c.b16 %v3915, %v3911
    %v3924 = vpack.c.b16 %v3916, %v3912
    %v3925 = vpack.c.b16 %v3917, %v3913
    %v3935 = vsel %vm408, %v3611, 0
    %3937 = vmatprep.subr.bf16.mxu0 0
    %3938 = vmatpush1.bf16.msra.mxu0 0
    %3939 = vmatprep.subr.bf16.mxu0 0
    %3940 = vmatpush1.bf16.msra.mxu0 0
    %3941 = vmatprep.subr.bf16.mxu0 0
    %3942 = vmatpush1.bf16.msra.mxu0 0
    %3943 = vmatprep.subr.bf16.mxu0 0
    %3944 = vmatpush1.bf16.msra.mxu0 0
    %3945 = vmatprep.subr.bf16.mxu0 0
    %3946 = vmatpush1.bf16.msra.mxu0 0
    %3947 = vmatprep.subr.bf16.mxu0 0
    %3948 = vmatpush1.bf16.msra.mxu0 0
    %3949 = vmatprep.subr.bf16.mxu0 %v3923
    %3950 = vmatpush1.bf16.msra.mxu0 %v3922
    %3951 = vmatprep.subr.bf16.mxu0 %v3919
    %3952 = vmatpush1.bf16.msra.mxu0 %v3918
    %3953 = vmatprep.subr.bf16.mxu0 0
    %3954 = vmatpush2.bf16.msra.mxu0 0
    %3955 = vmatprep.subr.bf16.mxu0 0
    %3956 = vmatpush2.bf16.msra.mxu0 0
    %3957 = vmatprep.subr.bf16.mxu0 0
    %3958 = vmatpush2.bf16.msra.mxu0 0
    %3959 = vmatprep.subr.bf16.mxu0 0
    %3960 = vmatpush2.bf16.msra.mxu0 0
    %3961 = vmatprep.subr.bf16.mxu0 0
    %3962 = vmatpush2.bf16.msra.mxu0 0
    %3963 = vmatprep.subr.bf16.mxu0 0
    %3964 = vmatpush2.bf16.msra.mxu0 0
    %3965 = vmatprep.subr.bf16.mxu0 0
    %3966 = vmatpush2.bf16.msra.mxu0 0
    %3967 = vmatprep.subr.bf16.mxu0 0
    %3968 = vmatpush2.bf16.msra.mxu0 0
    %3969 = vmatprep.mubr.bf16.mxu0 0
    %3970 = vmatmul.mubr.bf16.gmra.mxu0 %v3935
    %v3971 = vpop.f32.mrf.mxu0
    %v3972 = vadd.f32 %v3847, %v3971
    %v3973 = vpop.f32.mrf.mxu0
    %v3974 = vadd.f32 %v3849, %v3973
    %v3975 = vpop.f32.mrf.mxu0
    %v3976 = vpop.f32.mrf.mxu0
    %3977 = vdwg.mxu0
    %3978 = vmatprep.subr.bf16.mxu0 0
    %3979 = vmatpush1.bf16.msra.mxu0 0
    %3980 = vmatprep.subr.bf16.mxu0 0
    %3981 = vmatpush1.bf16.msra.mxu0 0
    %3982 = vmatprep.subr.bf16.mxu0 0
    %3983 = vmatpush1.bf16.msra.mxu0 0
    %3984 = vmatprep.subr.bf16.mxu0 0
    %3985 = vmatpush1.bf16.msra.mxu0 0
    %3986 = vmatprep.subr.bf16.mxu0 0
    %3987 = vmatpush1.bf16.msra.mxu0 0
    %3988 = vmatprep.subr.bf16.mxu0 0
    %3989 = vmatpush1.bf16.msra.mxu0 0
    %3990 = vmatprep.subr.bf16.mxu0 %v3925
    %3991 = vmatpush1.bf16.msra.mxu0 %v3924
    %3992 = vmatprep.subr.bf16.mxu0 %v3921
    %3993 = vmatpush1.bf16.msra.mxu0 %v3920
    %3994 = vmatprep.subr.bf16.mxu0 0
    %3995 = vmatpush2.bf16.msra.mxu0 0
    %3996 = vmatprep.subr.bf16.mxu0 0
    %3997 = vmatpush2.bf16.msra.mxu0 0
    %3998 = vmatprep.subr.bf16.mxu0 0
    %3999 = vmatpush2.bf16.msra.mxu0 0
    %4000 = vmatprep.subr.bf16.mxu0 0
    %4001 = vmatpush2.bf16.msra.mxu0 0
    %4002 = vmatprep.subr.bf16.mxu0 0
    %4003 = vmatpush2.bf16.msra.mxu0 0
    %4004 = vmatprep.subr.bf16.mxu0 0
    %4005 = vmatpush2.bf16.msra.mxu0 0
    %4006 = vmatprep.subr.bf16.mxu0 0
    %4007 = vmatpush2.bf16.msra.mxu0 0
    %4008 = vmatprep.subr.bf16.mxu0 0
    %4009 = vmatpush2.bf16.msra.mxu0 0
    %4010 = vmatprep.mubr.bf16.mxu0 0
    %4011 = vmatmul.mubr.bf16.gmra.mxu0 %v3935
    %v4012 = vpop.f32.mrf.mxu0
    %v4013 = vadd.f32 %v3888, %v4012
    %v4014 = vpop.f32.mrf.mxu0
    %v4015 = vadd.f32 %v3890, %v4014
    %v4016 = vpop.f32.mrf.mxu0
    %v4017 = vpop.f32.mrf.mxu0
    %4018 = vdwg.mxu0
    %v4019 = vld [vmem:[#allocation7] sm:$0xf]
    %v4021 = vlaneseq
    %v4022 = vshrl.u32 %v4021, 7
    %v4023 = vsub.s32 0, %v4022
    %v4024 = vrot.slane %v4019, %v4023
    %v4025 = vlaneseq
    %v4026 = vshrl.u32 %v4025, 7
    %v4027 = vsub.s32 1, %v4026
    %v4028 = vrot.slane %v4019, %v4027
    %v4029 = vlaneseq
    %v4030 = vshrl.u32 %v4029, 7
    %v4031 = vsub.s32 2, %v4030
    %v4032 = vrot.slane %v4019, %v4031
    %v4033 = vlaneseq
    %v4034 = vshrl.u32 %v4033, 7
    %v4035 = vsub.s32 3, %v4034
    %v4036 = vrot.slane %v4019, %v4035
    %v4041 = vadd.f32 %v3972, %v4024
    %v4042 = vadd.f32 %v3974, %v4028
    %v4043 = vadd.f32 %v4013, %v4032
    %v4044 = vadd.f32 %v4015, %v4036
    %v4045 = vxor.u32 %v4041, 2147483648
    %v4046 = vmul.f32 %v4045, 1.442695
    %v4047 = vpow.pop %v4046
    %v4048 = vadd.f32 %v4047, 1.0
    %v4049 = vrcp.pop %v4048
    %v4050 = vmul.f32 1.0, %v4049
    %v4051 = vxor.u32 %v4042, 2147483648
    %v4052 = vmul.f32 %v4051, 1.442695
    %v4053 = vpow.pop %v4052
    %v4054 = vadd.f32 %v4053, 1.0
    %v4055 = vrcp.pop %v4054
    %v4056 = vmul.f32 1.0, %v4055
    %v4057 = vtanh.pop %v4043
    %v4058 = vxor.u32 %v4044, 2147483648
    %v4059 = vmul.f32 %v4058, 1.442695
    %v4060 = vpow.pop %v4059
    %v4061 = vadd.f32 %v4060, 1.0
    %v4062 = vrcp.pop %v4061
    %v4063 = vmul.f32 1.0, %v4062
    %v4064 = vmul.f32 %v4056, %v3562
    %v4065 = vmul.f32 %v4050, %v4057
    %v4066 = vadd.f32 %v4064, %v4065
    %v4067 = vtanh.pop %v4066
    %v4068 = vmul.f32 %v4063, %v4067
    %v4069 = vpack.c.bf16 %v4068, %v4068
    %v4072 = vunpack.c.l.s4 1966171168
    %v4073 = vunpack.c.0.s8 %v4072
    %v4074 = vlaneseq
    %v4075 = vshrl.u32 %v4074, 7
    %v4076 = vsub.s32 %v4073, %v4075
    %v4077 = vrot.slane %v4069, %v4076
    %v4079 = vunpack.c.l.s4 1966171168
    %v4080 = vunpack.c.0.s8 %v4079
    %v4081 = vlaneseq
    %v4082 = vshrl.u32 %v4081, 7
    %v4083 = vsub.s32 %v4080, %v4082
    %v4084 = vrot.slane %v4077, %v4083
    %v4085 = vunpack.i.l.s16 %v4084
    %v4086 = vunpack.i.h.s16 %v4084
    %v4087 = vpack.i.b16 %v4085, %v4085
    %v4088 = vpack.i.b16 %v4086, %v4086
    %v4090 = vunpack.c.l.s4 286326784
    %v4091 = vunpack.c.0.s8 %v4090
    %v4092 = vlaneseq
    %v4093 = vshrl.u32 %v4092, 7
    %v4094 = vsub.s32 %v4091, %v4093
    %v4095 = vrot.slane %v4087, %v4094
    %v4097 = vunpack.c.l.s4 286326784
    %v4098 = vunpack.c.0.s8 %v4097
    %v4099 = vlaneseq
    %v4100 = vshrl.u32 %v4099, 7
    %v4101 = vsub.s32 %v4098, %v4100
    %v4102 = vrot.slane %v4088, %v4101
    %vm4105 = vsmask.f32 7950
    %vm4106 = vmand %vm3601, %vm4105
    %v4107 = vld [vmem:[#allocation10] sm:$0x8]
    %v4108 = vsel %vm4106, %v4095, %v4107
    %4109 = vst [vmem:[#allocation10] sm:$0x8] %v4108
    %v4110 = vld [vmem:[#allocation10 + $0x4] sm:$0x8]
    %v4111 = vsel %vm4106, %v4102, %v4110
    %4112 = vst [vmem:[#allocation10 + $0x4] sm:$0x8] %v4111
    %4113 = vst [vmem:[#allocation11] sm:$0x3] %v4068
    %4114 = vst [vmem:[#allocation13] sm:$0x3] %v4066
    // Predicated region
    $region42: #{tpu_custom_call.1} parent=1 // pred_check
      _
    $region43: #{tpu_custom_call.1} parent=1 // pred_check_branch
      %4116 = sbr.rel (0) target = $region45
    $region44: #{tpu_custom_call.1} parent=1 // pred_region
      %s4118 = ssub.s32 128, 128
      %4119 = vsyncadd [#allocation4], %s4118
      %s4120 = sshll.u32 [#allocation10], 4
      %s4121 = int_to_ptr.vmem [resolvable:$true] %s4120
      %4126 = dma.vmem_to_hbm [thread:$0]  %s4121, 128, %s6, [#allocation4], 64, 64, 4
    $region45: #{tpu_custom_call.1} parent=1 // pred_fallthru
      _
    // Predicated region
    $region46: #{tpu_custom_call.1} parent=1 // pred_check
      _
    $region47: #{tpu_custom_call.1} parent=1 // pred_check_branch
      %4128 = sbr.rel (0) target = $region49
    $region48: #{tpu_custom_call.1} parent=1 // pred_region
      %s4130 = ssub.s32 32, 32
      %4131 = vsyncadd [#allocation12], %s4130
      %s4133 = sshll.u32 [#allocation11], 4
      %s4134 = int_to_ptr.vmem [resolvable:$true] %s4133
      %4136 = dma.vmem_to_hbm [thread:$0]  %s4134, 32, %s7, [#allocation12]
    $region49: #{tpu_custom_call.1} parent=1 // pred_fallthru
      _
    // Predicated region
    $region50: #{tpu_custom_call.1} parent=1 // pred_check
      _
    $region51: #{tpu_custom_call.1} parent=1 // pred_check_branch
      %4138 = sbr.rel (0) target = $region53
    $region52: #{tpu_custom_call.1} parent=1 // pred_region
      %s4140 = ssub.s32 32, 32
      %4141 = vsyncadd [#allocation12], %s4140
      %s4143 = sshll.u32 [#allocation13], 4
      %s4144 = int_to_ptr.vmem [resolvable:$true] %s4143
      %4146 = dma.vmem_to_hbm [thread:$0]  %s4144, 32, %s8, [#allocation12]
    $region53: #{tpu_custom_call.1} parent=1 // pred_fallthru
      _
    // Predicated region
    $region54: #{tpu_custom_call.1} parent=1 // pred_check
      _
    $region55: #{tpu_custom_call.1} parent=1 // pred_check_branch
      %4148 = sbr.rel (0) target = $region57
    $region56: #{tpu_custom_call.1} parent=1 // pred_region
      %4149 = dma.done [#allocation4], 128
    $region57: #{tpu_custom_call.1} parent=1 // pred_fallthru
      _
    // Predicated region
    $region58: #{tpu_custom_call.1} parent=1 // pred_check
      _
    $region59: #{tpu_custom_call.1} parent=1 // pred_check_branch
      %4151 = sbr.rel (0) target = $region61
    $region60: #{tpu_custom_call.1} parent=1 // pred_region
      %4152 = dma.done [#allocation12], 32
    $region61: #{tpu_custom_call.1} parent=1 // pred_fallthru
      _
    // Predicated region
    $region62: #{tpu_custom_call.1} parent=1 // pred_check
      _
    $region63: #{tpu_custom_call.1} parent=1 // pred_check_branch
      %4154 = sbr.rel (0) target = $region65
    $region64: #{tpu_custom_call.1} parent=1 // pred_region
      %4155 = dma.done [#allocation12], 32
    $region65: #{tpu_custom_call.1} parent=1 // pred_fallthru
      _
    %4156 = vsyncpa [#allocation3], 1
    %4157 = vsyncpa [#allocation6], 1
    %4158 = vsyncpa [#allocation9], 1
    %4159 = vsyncpa [#allocation4], 1
    %4160 = vsyncpa [#allocation12], 1

</llo_original>
